<compile_context>
chip_gen: v7x
topology: tpu7x:2x2x1
jax: 0.10.0
libtpu: 0.0.40
codegen_flags: <defaults>
</compile_context>

<pallas_src>
import jax
import jax.numpy as jnp
from jax.experimental import pallas as pl
from jax.experimental.pallas import tpu as pltpu

# ----- model hyper-parameters (stand-ins for argparse `opt`) -----
LATENT_DIM = 32
CHANNELS = 4
IMG_SIZE = 16
IMG_FLAT = CHANNELS * IMG_SIZE * IMG_SIZE          # 1024
LAYER_DIMS = [LATENT_DIM, 128, 256, 512, 1024, IMG_FLAT]
BN_EPS = 0.8                                       # nn.BatchNorm1d(out_feat, 0.8)
LRELU_SLOPE = 0.2
OUT_DTYPE = jnp.bfloat16                           # tanh image in [-1,1]; halves writeback


def _chip_budget():
    """Derive (vmem_limit_bytes, max_batch) from the chip's VMEM capacity.

    Peak per-row footprint with bf16 activations (layer-4/5 region):
      f32 matmul output (4 KiB) + bf16 h (2 KiB) + bf16 prev/out (2 KiB)
    padded to 16 KiB/row for compiler temporaries; plus ~8 MiB fixed for the
    bf16 weights, W4/W5 scratch and parameter vectors.
    """
    try:
        cap = int(getattr(pltpu.get_tpu_info(), "vmem_capacity_bytes", 64 << 20))
    except Exception:
        cap = 64 << 20                              # conservative (v7x per-core)
    vmem_limit = min((cap * 3) // 4, 96 << 20)      # 48 MiB on v7x, 96 MiB on v5e/v6e
    fixed = 8 << 20
    per_row = 16 * 1024
    max_batch = max(256, min(8192, ((vmem_limit - fixed) // per_row) // 256 * 256))
    return vmem_limit, max_batch


_VMEM_LIMIT, MAX_BATCH = _chip_budget()


def _leaky_relu(x):
    # max(x, 0.2*x): 2 VALU ops/element instead of compare+select (3).
    return jnp.maximum(x, LRELU_SLOPE * x)


def _bn_block(h_bf16, w_ref, g_ref, be_ref):
    """Linear (bias dropped: cancelled by BN mean) + BatchNorm1d(eps=0.8) + LeakyReLU.

    bf16 x bf16 MXU matmul with f32 accumulation; single-pass batch statistics
    (E[h^2] - mean^2); BN folded into one per-feature FMA; result cast to bf16
    once (exactly what the next matmul consumes).
    """
    h = jnp.dot(h_bf16, w_ref[...], preferred_element_type=jnp.float32)
    mean = jnp.mean(h, axis=0, keepdims=True)
    mean_sq = jnp.mean(h * h, axis=0, keepdims=True)
    var = jnp.maximum(mean_sq - mean * mean, 0.0)          # biased batch variance
    scale = g_ref[...] * jax.lax.rsqrt(var + BN_EPS)        # rsqrt -> EUP slot
    shift = be_ref[...] - mean * scale
    return _leaky_relu(h * scale + shift).astype(jnp.bfloat16)


def generator_kernel(z_ref,
                     w1_ref, b1_ref,
                     w2_ref, g2_ref, be2_ref,
                     w3_ref, g3_ref, be3_ref,
                     w4_hbm, g4_ref, be4_ref,
                     w5_hbm, b5_ref,
                     out_ref,
                     w4_vmem, w5_vmem, dma_sems):
    # Stream the two big weights (W4 1 MB + W5 2 MB of ~3.3 MB total) from HBM
    # manually so their DMA overlaps layers 1-3; the small operands (~0.35 MB)
    # arrive via the normal Pallas prologue copies.
    w4_cp = pltpu.make_async_copy(w4_hbm, w4_vmem, dma_sems.at[0])
    w5_cp = pltpu.make_async_copy(w5_hbm, w5_vmem, dma_sems.at[1])
    w4_cp.start()
    w5_cp.start()

    # block 1: Linear + LeakyReLU (no batchnorm -> bias kept)
    h = jnp.dot(z_ref[...].astype(jnp.bfloat16), w1_ref[...],
                preferred_element_type=jnp.float32) + b1_ref[...]
    h = _leaky_relu(h).astype(jnp.bfloat16)

    # blocks 2-4: Linear + BatchNorm1d(eps=0.8) + LeakyReLU (full-batch stats)
    h = _bn_block(h, w2_ref, g2_ref, be2_ref)
    h = _bn_block(h, w3_ref, g3_ref, be3_ref)
    w4_cp.wait()
    h = _bn_block(h, w4_vmem, g4_ref, be4_ref)

    # final Linear + Tanh
    w5_cp.wait()
    h = jnp.dot(h, w5_vmem[...], preferred_element_type=jnp.float32) + b5_ref[...]
    out_ref[...] = jnp.tanh(h).astype(out_ref.dtype)


def init_params(key):
    """Deterministic synthetic params. Weights stored (in_feat, out_feat) in bf16."""
    params = []
    keys = jax.random.split(key, len(LAYER_DIMS) - 1)
    for i, (fan_in, fan_out) in enumerate(zip(LAYER_DIMS[:-1], LAYER_DIMS[1:])):
        kw, kb = jax.random.split(keys[i])
        w = (jax.random.normal(kw, (fan_in, fan_out), jnp.float32)
             / jnp.sqrt(fan_in)).astype(jnp.bfloat16)
        b = jax.random.normal(kb, (1, fan_out), jnp.float32) * 0.01
        layer = {"w": w, "b": b}
        if i in (1, 2, 3):                                    # blocks with BatchNorm
            layer["gamma"] = jnp.ones((1, fan_out), jnp.float32)   # PyTorch defaults
            layer["beta"] = jnp.zeros((1, fan_out), jnp.float32)
        params.append(layer)
    return params


def generator_forward(z, params):
    B = z.shape[0]
    assert B <= MAX_BATCH, "batch must fit whole-array in VMEM (BN needs full-batch stats)"
    # TODO(synk): padding B to a 256-row multiple would raise MXU utilization on
    # v6e/v7x, but naive zero-padding changes the BatchNorm batch statistics, so
    # it is intentionally not done here.

    vmem = pl.BlockSpec(memory_space=pltpu.MemorySpace.VMEM)
    hbm = pl.BlockSpec(memory_space=pl.ANY)      # manually streamed weights

    operands = [z, params[0]["w"], params[0]["b"]]
    in_specs = [vmem, vmem, vmem]
    for i in (1, 2, 3):
        # Linear bias dropped for BN blocks (cancelled by the mean subtraction).
        operands += [params[i]["w"], params[i]["gamma"], params[i]["beta"]]
        in_specs += [hbm if i == 3 else vmem, vmem, vmem]     # W4 goes manual
    operands += [params[4]["w"], params[4]["b"]]
    in_specs += [hbm, vmem]                                   # W5 goes manual

    img_flat = pl.pallas_call(
        generator_kernel,
        out_shape=jax.ShapeDtypeStruct((B, IMG_FLAT), OUT_DTYPE),
        in_specs=in_specs,
        out_specs=vmem,
        scratch_shapes=[
            pltpu.VMEM((LAYER_DIMS[3], LAYER_DIMS[4]), jnp.bfloat16),   # W4 buffer
            pltpu.VMEM((LAYER_DIMS[4], LAYER_DIMS[5]), jnp.bfloat16),   # W5 buffer
            pltpu.SemaphoreType.DMA((2,)),
        ],
        compiler_params=pltpu.CompilerParams(vmem_limit_bytes=_VMEM_LIMIT),
    )(*operands)

    # glue: reshape flat image to NCHW, matching img.view(B, C, H, W)
    return img_flat.reshape(B, CHANNELS, IMG_SIZE, IMG_SIZE)


def generator_reference(z, params):
    """Pure-JAX reference: same bf16 matmul inputs / f32 accumulation, PyTorch
    BN training semantics (two-pass variance), Linear biases included (they
    cancel under BN). Output kept f32; the kernel additionally rounds the final
    tanh image to bf16."""
    def mm(h, w):
        return jnp.dot(h.astype(jnp.bfloat16), w, preferred_element_type=jnp.float32)

    h = mm(z, params[0]["w"]) + params[0]["b"]
    h = jnp.where(h > 0, h, LRELU_SLOPE * h).astype(jnp.bfloat16)
    for i in (1, 2, 3):
        hf = mm(h, params[i]["w"]) + params[i]["b"]
        mean = jnp.mean(hf, axis=0, keepdims=True)
        var = jnp.mean((hf - mean) ** 2, axis=0, keepdims=True)
        hf = (hf - mean) / jnp.sqrt(var + BN_EPS)
        hf = hf * params[i]["gamma"] + params[i]["beta"]
        h = jnp.where(hf > 0, hf, LRELU_SLOPE * hf).astype(jnp.bfloat16)
    h = jnp.tanh(mm(h, params[4]["w"]) + params[4]["b"])
    return h.reshape(z.shape[0], CHANNELS, IMG_SIZE, IMG_SIZE)


if __name__ == "__main__":
    key = jax.random.PRNGKey(0)
    k_params, k_z = jax.random.split(key)
    params = init_params(k_params)

    B = 8   # small demo batch; kernel supports up to MAX_BATCH rows per call
    z = jax.random.normal(k_z, (B, LATENT_DIM), jnp.float32)

    img = generator_forward(z, params)
    jax.block_until_ready(img)

    ref = generator_reference(z, params)
    assert img.shape == (B, CHANNELS, IMG_SIZE, IMG_SIZE)
    # Tolerance covers the bf16 rounding of the tanh output (ulp <= ~0.004 near 1)
    # plus tiny matmul-path / one-pass-variance differences.
    assert jnp.max(jnp.abs(img.astype(jnp.float32) - ref)) < 1e-2, "mismatch vs reference"

    print("KERNEL_OK")
</pallas_src>

<mosaic_0001>
module attributes {stable_mosaic.version = 11 : i64} {
  func.func @generator_kernel(%arg0: memref<8x32xf32, #tpu.memory_space<vmem>>, %arg1: memref<32x128xbf16, #tpu.memory_space<vmem>>, %arg2: memref<1x128xf32, #tpu.memory_space<vmem>>, %arg3: memref<128x256xbf16, #tpu.memory_space<vmem>>, %arg4: memref<1x256xf32, #tpu.memory_space<vmem>>, %arg5: memref<1x256xf32, #tpu.memory_space<vmem>>, %arg6: memref<256x512xbf16, #tpu.memory_space<vmem>>, %arg7: memref<1x512xf32, #tpu.memory_space<vmem>>, %arg8: memref<1x512xf32, #tpu.memory_space<vmem>>, %arg9: memref<512x1024xbf16, #tpu.memory_space<any>>, %arg10: memref<1x1024xf32, #tpu.memory_space<vmem>>, %arg11: memref<1x1024xf32, #tpu.memory_space<vmem>>, %arg12: memref<1024x1024xbf16, #tpu.memory_space<any>>, %arg13: memref<1x1024xf32, #tpu.memory_space<vmem>>, %arg14: memref<8x1024xbf16, #tpu.memory_space<vmem>>, %arg15: memref<512x1024xbf16, #tpu.memory_space<vmem>>, %arg16: memref<1024x1024xbf16, #tpu.memory_space<vmem>>, %arg17: memref<2x!tpu.dma_semaphore, #tpu.memory_space<semaphore_mem>>) attributes {dimension_semantics = [], scalar_prefetch = 0 : i64, scratch_operands = 3 : i64, tpu.core_type = #tpu.core_type<tc>} {
    %c0_i32 = arith.constant 0 : i32
    %0 = tpu.memref_slice %arg17[%c0_i32] : memref<2x!tpu.dma_semaphore, #tpu.memory_space<semaphore_mem>> -> memref<1x!tpu.dma_semaphore, #tpu.memory_space<semaphore_mem>>
    %1 = tpu.memref_squeeze %0 : memref<1x!tpu.dma_semaphore, #tpu.memory_space<semaphore_mem>> -> memref<!tpu.dma_semaphore, #tpu.memory_space<semaphore_mem>>
    tpu.enqueue_dma source(%arg9 : memref<512x1024xbf16, #tpu.memory_space<any>>) target(%arg15 : memref<512x1024xbf16, #tpu.memory_space<vmem>>) target_semaphore(%1 : memref<!tpu.dma_semaphore, #tpu.memory_space<semaphore_mem>>)
    %c1_i32 = arith.constant 1 : i32
    %2 = tpu.memref_slice %arg17[%c1_i32] : memref<2x!tpu.dma_semaphore, #tpu.memory_space<semaphore_mem>> -> memref<1x!tpu.dma_semaphore, #tpu.memory_space<semaphore_mem>>
    %3 = tpu.memref_squeeze %2 : memref<1x!tpu.dma_semaphore, #tpu.memory_space<semaphore_mem>> -> memref<!tpu.dma_semaphore, #tpu.memory_space<semaphore_mem>>
    tpu.enqueue_dma source(%arg12 : memref<1024x1024xbf16, #tpu.memory_space<any>>) target(%arg16 : memref<1024x1024xbf16, #tpu.memory_space<vmem>>) target_semaphore(%3 : memref<!tpu.dma_semaphore, #tpu.memory_space<semaphore_mem>>)
    %c0 = arith.constant 0 : index
    %c0_0 = arith.constant 0 : index
    %4 = vector.load %arg0[%c0, %c0_0] : memref<8x32xf32, #tpu.memory_space<vmem>>, vector<8x32xf32>
    %5 = arith.truncf %4 : vector<8x32xf32> to vector<8x32xbf16>
    %c0_1 = arith.constant 0 : index
    %c0_2 = arith.constant 0 : index
    %6 = vector.load %arg1[%c0_1, %c0_2] : memref<32x128xbf16, #tpu.memory_space<vmem>>, vector<32x128xbf16>
    %cst = arith.constant dense<0.000000e+00> : vector<8x128xf32>
    %7 = tpu.matmul %5, %6, %cst {dimension_numbers = #tpu.dot_dimension_numbers<[1], [0], [0], [1], [0, 0, 1, 1], [], []>} : vector<8x32xbf16>, vector<32x128xbf16>, vector<8x128xf32> -> vector<8x128xf32>
    %c0_3 = arith.constant 0 : index
    %c0_4 = arith.constant 0 : index
    %8 = vector.load %arg2[%c0_3, %c0_4] : memref<1x128xf32, #tpu.memory_space<vmem>>, vector<1x128xf32>
    %9 = vector.broadcast %8 : vector<1x128xf32> to vector<8x128xf32>
    %10 = arith.addf %7, %9 : vector<8x128xf32>
    %cst_5 = arith.constant 2.000000e-01 : f32
    %11 = vector.broadcast %cst_5 : f32 to vector<8x128xf32>
    %12 = arith.mulf %11, %10 : vector<8x128xf32>
    %13 = arith.maximumf %10, %12 : vector<8x128xf32>
    %14 = arith.truncf %13 : vector<8x128xf32> to vector<8x128xbf16>
    %c0_6 = arith.constant 0 : index
    %c0_7 = arith.constant 0 : index
    %15 = vector.load %arg3[%c0_6, %c0_7] : memref<128x256xbf16, #tpu.memory_space<vmem>>, vector<128x256xbf16>
    %cst_8 = arith.constant dense<0.000000e+00> : vector<8x256xf32>
    %16 = tpu.matmul %14, %15, %cst_8 {dimension_numbers = #tpu.dot_dimension_numbers<[1], [0], [0], [1], [0, 0, 1, 1], [], []>} : vector<8x128xbf16>, vector<128x256xbf16>, vector<8x256xf32> -> vector<8x256xf32>
    %cst_9 = arith.constant dense<0.000000e+00> : vector<256xf32>
    %17 = vector.multi_reduction <add>, %16, %cst_9 [0] : vector<8x256xf32> to vector<256xf32>
    %18 = vector.shape_cast %17 : vector<256xf32> to vector<1x256xf32>
    %cst_10 = arith.constant 8.000000e+00 : f32
    %19 = vector.broadcast %cst_10 : f32 to vector<1x256xf32>
    %20 = arith.divf %18, %19 : vector<1x256xf32>
    %21 = arith.mulf %16, %16 : vector<8x256xf32>
    %cst_11 = arith.constant dense<0.000000e+00> : vector<256xf32>
    %22 = vector.multi_reduction <add>, %21, %cst_11 [0] : vector<8x256xf32> to vector<256xf32>
    %23 = vector.shape_cast %22 : vector<256xf32> to vector<1x256xf32>
    %cst_12 = arith.constant 8.000000e+00 : f32
    %24 = vector.broadcast %cst_12 : f32 to vector<1x256xf32>
    %25 = arith.divf %23, %24 : vector<1x256xf32>
    %26 = arith.mulf %20, %20 : vector<1x256xf32>
    %27 = arith.subf %25, %26 : vector<1x256xf32>
    %cst_13 = arith.constant 0.000000e+00 : f32
    %28 = vector.broadcast %cst_13 : f32 to vector<1x256xf32>
    %29 = arith.maximumf %27, %28 : vector<1x256xf32>
    %c0_14 = arith.constant 0 : index
    %c0_15 = arith.constant 0 : index
    %30 = vector.load %arg4[%c0_14, %c0_15] : memref<1x256xf32, #tpu.memory_space<vmem>>, vector<1x256xf32>
    %cst_16 = arith.constant 8.000000e-01 : f32
    %31 = vector.broadcast %cst_16 : f32 to vector<1x256xf32>
    %32 = arith.addf %29, %31 : vector<1x256xf32>
    %33 = math.rsqrt %32 : vector<1x256xf32>
    %34 = arith.mulf %30, %33 : vector<1x256xf32>
    %c0_17 = arith.constant 0 : index
    %c0_18 = arith.constant 0 : index
    %35 = vector.load %arg5[%c0_17, %c0_18] : memref<1x256xf32, #tpu.memory_space<vmem>>, vector<1x256xf32>
    %36 = arith.mulf %20, %34 : vector<1x256xf32>
    %37 = arith.subf %35, %36 : vector<1x256xf32>
    %38 = vector.broadcast %34 : vector<1x256xf32> to vector<8x256xf32>
    %39 = arith.mulf %16, %38 : vector<8x256xf32>
    %40 = vector.broadcast %37 : vector<1x256xf32> to vector<8x256xf32>
    %41 = arith.addf %39, %40 : vector<8x256xf32>
    %cst_19 = arith.constant 2.000000e-01 : f32
    %42 = vector.broadcast %cst_19 : f32 to vector<8x256xf32>
    %43 = arith.mulf %42, %41 : vector<8x256xf32>
    %44 = arith.maximumf %41, %43 : vector<8x256xf32>
    %45 = arith.truncf %44 : vector<8x256xf32> to vector<8x256xbf16>
    %c0_20 = arith.constant 0 : index
    %c0_21 = arith.constant 0 : index
    %46 = vector.load %arg6[%c0_20, %c0_21] : memref<256x512xbf16, #tpu.memory_space<vmem>>, vector<256x512xbf16>
    %cst_22 = arith.constant dense<0.000000e+00> : vector<8x512xf32>
    %47 = tpu.matmul %45, %46, %cst_22 {dimension_numbers = #tpu.dot_dimension_numbers<[1], [0], [0], [1], [0, 0, 1, 1], [], []>} : vector<8x256xbf16>, vector<256x512xbf16>, vector<8x512xf32> -> vector<8x512xf32>
    %cst_23 = arith.constant dense<0.000000e+00> : vector<512xf32>
    %48 = vector.multi_reduction <add>, %47, %cst_23 [0] : vector<8x512xf32> to vector<512xf32>
    %49 = vector.shape_cast %48 : vector<512xf32> to vector<1x512xf32>
    %cst_24 = arith.constant 8.000000e+00 : f32
    %50 = vector.broadcast %cst_24 : f32 to vector<1x512xf32>
    %51 = arith.divf %49, %50 : vector<1x512xf32>
    %52 = arith.mulf %47, %47 : vector<8x512xf32>
    %cst_25 = arith.constant dense<0.000000e+00> : vector<512xf32>
    %53 = vector.multi_reduction <add>, %52, %cst_25 [0] : vector<8x512xf32> to vector<512xf32>
    %54 = vector.shape_cast %53 : vector<512xf32> to vector<1x512xf32>
    %cst_26 = arith.constant 8.000000e+00 : f32
    %55 = vector.broadcast %cst_26 : f32 to vector<1x512xf32>
    %56 = arith.divf %54, %55 : vector<1x512xf32>
    %57 = arith.mulf %51, %51 : vector<1x512xf32>
    %58 = arith.subf %56, %57 : vector<1x512xf32>
    %cst_27 = arith.constant 0.000000e+00 : f32
    %59 = vector.broadcast %cst_27 : f32 to vector<1x512xf32>
    %60 = arith.maximumf %58, %59 : vector<1x512xf32>
    %c0_28 = arith.constant 0 : index
    %c0_29 = arith.constant 0 : index
    %61 = vector.load %arg7[%c0_28, %c0_29] : memref<1x512xf32, #tpu.memory_space<vmem>>, vector<1x512xf32>
    %cst_30 = arith.constant 8.000000e-01 : f32
    %62 = vector.broadcast %cst_30 : f32 to vector<1x512xf32>
    %63 = arith.addf %60, %62 : vector<1x512xf32>
    %64 = math.rsqrt %63 : vector<1x512xf32>
    %65 = arith.mulf %61, %64 : vector<1x512xf32>
    %c0_31 = arith.constant 0 : index
    %c0_32 = arith.constant 0 : index
    %66 = vector.load %arg8[%c0_31, %c0_32] : memref<1x512xf32, #tpu.memory_space<vmem>>, vector<1x512xf32>
    %67 = arith.mulf %51, %65 : vector<1x512xf32>
    %68 = arith.subf %66, %67 : vector<1x512xf32>
    %69 = vector.broadcast %65 : vector<1x512xf32> to vector<8x512xf32>
    %70 = arith.mulf %47, %69 : vector<8x512xf32>
    %71 = vector.broadcast %68 : vector<1x512xf32> to vector<8x512xf32>
    %72 = arith.addf %70, %71 : vector<8x512xf32>
    %cst_33 = arith.constant 2.000000e-01 : f32
    %73 = vector.broadcast %cst_33 : f32 to vector<8x512xf32>
    %74 = arith.mulf %73, %72 : vector<8x512xf32>
    %75 = arith.maximumf %72, %74 : vector<8x512xf32>
    %76 = arith.truncf %75 : vector<8x512xf32> to vector<8x512xbf16>
    %c0_i32_34 = arith.constant 0 : i32
    %77 = tpu.memref_slice %arg17[%c0_i32_34] : memref<2x!tpu.dma_semaphore, #tpu.memory_space<semaphore_mem>> -> memref<1x!tpu.dma_semaphore, #tpu.memory_space<semaphore_mem>>
    %78 = tpu.memref_squeeze %77 : memref<1x!tpu.dma_semaphore, #tpu.memory_space<semaphore_mem>> -> memref<!tpu.dma_semaphore, #tpu.memory_space<semaphore_mem>>
    tpu.wait_dma2 semaphore(%78 : memref<!tpu.dma_semaphore, #tpu.memory_space<semaphore_mem>>) src(%arg9 : memref<512x1024xbf16, #tpu.memory_space<any>>) dst(%arg15 : memref<512x1024xbf16, #tpu.memory_space<vmem>>)
    %c0_35 = arith.constant 0 : index
    %c0_36 = arith.constant 0 : index
    %79 = vector.load %arg15[%c0_35, %c0_36] : memref<512x1024xbf16, #tpu.memory_space<vmem>>, vector<512x1024xbf16>
    %cst_37 = arith.constant dense<0.000000e+00> : vector<8x1024xf32>
    %80 = tpu.matmul %76, %79, %cst_37 {dimension_numbers = #tpu.dot_dimension_numbers<[1], [0], [0], [1], [0, 0, 1, 1], [], []>} : vector<8x512xbf16>, vector<512x1024xbf16>, vector<8x1024xf32> -> vector<8x1024xf32>
    %cst_38 = arith.constant dense<0.000000e+00> : vector<1024xf32>
    %81 = vector.multi_reduction <add>, %80, %cst_38 [0] : vector<8x1024xf32> to vector<1024xf32>
    %82 = vector.shape_cast %81 : vector<1024xf32> to vector<1x1024xf32>
    %cst_39 = arith.constant 8.000000e+00 : f32
    %83 = vector.broadcast %cst_39 : f32 to vector<1x1024xf32>
    %84 = arith.divf %82, %83 : vector<1x1024xf32>
    %85 = arith.mulf %80, %80 : vector<8x1024xf32>
    %cst_40 = arith.constant dense<0.000000e+00> : vector<1024xf32>
    %86 = vector.multi_reduction <add>, %85, %cst_40 [0] : vector<8x1024xf32> to vector<1024xf32>
    %87 = vector.shape_cast %86 : vector<1024xf32> to vector<1x1024xf32>
    %cst_41 = arith.constant 8.000000e+00 : f32
    %88 = vector.broadcast %cst_41 : f32 to vector<1x1024xf32>
    %89 = arith.divf %87, %88 : vector<1x1024xf32>
    %90 = arith.mulf %84, %84 : vector<1x1024xf32>
    %91 = arith.subf %89, %90 : vector<1x1024xf32>
    %cst_42 = arith.constant 0.000000e+00 : f32
    %92 = vector.broadcast %cst_42 : f32 to vector<1x1024xf32>
    %93 = arith.maximumf %91, %92 : vector<1x1024xf32>
    %c0_43 = arith.constant 0 : index
    %c0_44 = arith.constant 0 : index
    %94 = vector.load %arg10[%c0_43, %c0_44] : memref<1x1024xf32, #tpu.memory_space<vmem>>, vector<1x1024xf32>
    %cst_45 = arith.constant 8.000000e-01 : f32
    %95 = vector.broadcast %cst_45 : f32 to vector<1x1024xf32>
    %96 = arith.addf %93, %95 : vector<1x1024xf32>
    %97 = math.rsqrt %96 : vector<1x1024xf32>
    %98 = arith.mulf %94, %97 : vector<1x1024xf32>
    %c0_46 = arith.constant 0 : index
    %c0_47 = arith.constant 0 : index
    %99 = vector.load %arg11[%c0_46, %c0_47] : memref<1x1024xf32, #tpu.memory_space<vmem>>, vector<1x1024xf32>
    %100 = arith.mulf %84, %98 : vector<1x1024xf32>
    %101 = arith.subf %99, %100 : vector<1x1024xf32>
    %102 = vector.broadcast %98 : vector<1x1024xf32> to vector<8x1024xf32>
    %103 = arith.mulf %80, %102 : vector<8x1024xf32>
    %104 = vector.broadcast %101 : vector<1x1024xf32> to vector<8x1024xf32>
    %105 = arith.addf %103, %104 : vector<8x1024xf32>
    %cst_48 = arith.constant 2.000000e-01 : f32
    %106 = vector.broadcast %cst_48 : f32 to vector<8x1024xf32>
    %107 = arith.mulf %106, %105 : vector<8x1024xf32>
    %108 = arith.maximumf %105, %107 : vector<8x1024xf32>
    %109 = arith.truncf %108 : vector<8x1024xf32> to vector<8x1024xbf16>
    %c1_i32_49 = arith.constant 1 : i32
    %110 = tpu.memref_slice %arg17[%c1_i32_49] : memref<2x!tpu.dma_semaphore, #tpu.memory_space<semaphore_mem>> -> memref<1x!tpu.dma_semaphore, #tpu.memory_space<semaphore_mem>>
    %111 = tpu.memref_squeeze %110 : memref<1x!tpu.dma_semaphore, #tpu.memory_space<semaphore_mem>> -> memref<!tpu.dma_semaphore, #tpu.memory_space<semaphore_mem>>
    tpu.wait_dma2 semaphore(%111 : memref<!tpu.dma_semaphore, #tpu.memory_space<semaphore_mem>>) src(%arg12 : memref<1024x1024xbf16, #tpu.memory_space<any>>) dst(%arg16 : memref<1024x1024xbf16, #tpu.memory_space<vmem>>)
    %c0_50 = arith.constant 0 : index
    %c0_51 = arith.constant 0 : index
    %112 = vector.load %arg16[%c0_50, %c0_51] : memref<1024x1024xbf16, #tpu.memory_space<vmem>>, vector<1024x1024xbf16>
    %cst_52 = arith.constant dense<0.000000e+00> : vector<8x1024xf32>
    %113 = tpu.matmul %109, %112, %cst_52 {dimension_numbers = #tpu.dot_dimension_numbers<[1], [0], [0], [1], [0, 0, 1, 1], [], []>} : vector<8x1024xbf16>, vector<1024x1024xbf16>, vector<8x1024xf32> -> vector<8x1024xf32>
    %c0_53 = arith.constant 0 : index
    %c0_54 = arith.constant 0 : index
    %114 = vector.load %arg13[%c0_53, %c0_54] : memref<1x1024xf32, #tpu.memory_space<vmem>>, vector<1x1024xf32>
    %115 = vector.broadcast %114 : vector<1x1024xf32> to vector<8x1024xf32>
    %116 = arith.addf %113, %115 : vector<8x1024xf32>
    %117 = math.tanh %116 : vector<8x1024xf32>
    %118 = arith.truncf %117 : vector<8x1024xf32> to vector<8x1024xbf16>
    %c0_55 = arith.constant 0 : index
    %c0_56 = arith.constant 0 : index
    %119 = vector.load %arg14[%c0_55, %c0_56] : memref<8x1024xbf16, #tpu.memory_space<vmem>>, vector<8x1024xbf16>
    tpu.vector_store %arg14[%c0_55, %c0_56], %118 {strides = array<i32>} : memref<8x1024xbf16, #tpu.memory_space<vmem>>, vector<8x1024xbf16>,
    return
  }
}

</mosaic_0001>

<llo_original>
// kernel: tpu_custom_call.1
$region0: #{tpu_custom_call.1}
  #allocation0 [shape = 'u32[]', space=smem, size = 0x4, offset = 0x4, fixed_abs, tag = 'smem constant byte address 0x4 - core index']
  #allocation1 [shape = 'u32[144,128]{1,0:T(1,128)}', space=vmem, size = 0x12000, scoped, tag = 'internal scratch']
  #allocation2 [shape = 'bf16[512,1024]{1,0:T(16,128)(2,1)}', space=vmem, size = 0x100000, scoped, tag = 'scratch operand']
  #allocation3 [shape = 'bf16[1024,1024]{1,0:T(16,128)(2,1)}', space=vmem, size = 0x200000, scoped, tag = 'scratch operand']
  #allocation4 [shape = 's32[2]{0}', space=sflag, size = 0x8, scoped, tag = 'scratch operand']
  #allocation26 [shape = 's32[]', space=sflag, size = 0x4, offset = 0, fixed_abs, tag = 'sflag constant byte address 0x0 - dummy sync flag']
  #allocation28 [shape = 's32[]', space=sflag, size = 0x4, offset = 0, fixed_abs, tag = 'sflag constant byte address 0x0 - dummy sync flag']
  %s0 = inlined_call_operand.hbm [shape: f32[8,32], index: 0, kind: input, shape index: {}]
  %s1 = inlined_call_operand.hbm [shape: bf16[32,128], index: 1, kind: input, shape index: {}]
  %s2 = inlined_call_operand.hbm [shape: f32[1,128], index: 2, kind: input, shape index: {}]
  %s3 = inlined_call_operand.hbm [shape: bf16[128,256], index: 3, kind: input, shape index: {}]
  %s4 = inlined_call_operand.hbm [shape: f32[1,256], index: 4, kind: input, shape index: {}]
  %s5 = inlined_call_operand.hbm [shape: f32[1,256], index: 5, kind: input, shape index: {}]
  %s6 = inlined_call_operand.hbm [shape: bf16[256,512], index: 6, kind: input, shape index: {}]
  %s7 = inlined_call_operand.hbm [shape: f32[1,512], index: 7, kind: input, shape index: {}]
  %s8 = inlined_call_operand.hbm [shape: f32[1,512], index: 8, kind: input, shape index: {}]
  %s9 = inlined_call_operand.hbm [shape: bf16[512,1024], index: 9, kind: input, shape index: {}]
  %s10 = inlined_call_operand.hbm [shape: f32[1,1024], index: 10, kind: input, shape index: {}]
  %s11 = inlined_call_operand.hbm [shape: f32[1,1024], index: 11, kind: input, shape index: {}]
  %s12 = inlined_call_operand.hbm [shape: bf16[1024,1024], index: 12, kind: input, shape index: {}]
  %s13 = inlined_call_operand.hbm [shape: f32[1,1024], index: 13, kind: input, shape index: {}]
  %s14 = inlined_call_operand.hbm [shape: bf16[8,1024], index: 14, kind: output, shape index: {}]
  %s15 = sld [smem:[#allocation0]]
  $region106: #{tpu_custom_call.1} parent=0
    _
  %s17 = ssub.s32 1, %s15
  %s18 = scalar_select 0, %s17, %s15
  $region1: #{tpu_custom_call.1} parent=0
    #allocation5 [shape = 'u8[4096]{0}', space=vmem, size = 0x1000, scoped, tag = 'input window, operand 0, single buffered']
    #allocation6 [shape = 's32[1]{0}', space=sflag, size = 0x4, scoped, tag = 'scoped memory for tpu_custom_call.1']
    #allocation7 [shape = 's32[1]{0}', space=sflag, size = 0x4, scoped, tag = 'scoped memory for tpu_custom_call.1']
    #allocation8 [shape = 'u8[8192]{0}', space=vmem, size = 0x2000, scoped, tag = 'input window, operand 1, single buffered']
    #allocation9 [shape = 's32[1]{0}', space=sflag, size = 0x4, scoped, tag = 'scoped memory for tpu_custom_call.1']
    #allocation10 [shape = 'u8[512]{0}', space=vmem, size = 0x400, scoped, tag = 'input window, operand 2, single buffered']
    #allocation11 [shape = 'u8[65536]{0}', space=vmem, size = 0x10000, scoped, tag = 'input window, operand 3, single buffered']
    #allocation12 [shape = 's32[1]{0}', space=sflag, size = 0x4, scoped, tag = 'scoped memory for tpu_custom_call.1']
    #allocation13 [shape = 'u8[1024]{0}', space=vmem, size = 0x400, scoped, tag = 'input window, operand 4, single buffered']
    #allocation14 [shape = 'u8[1024]{0}', space=vmem, size = 0x400, scoped, tag = 'input window, operand 5, single buffered']
    #allocation15 [shape = 's32[1]{0}', space=sflag, size = 0x4, scoped, tag = 'scoped memory for tpu_custom_call.1']
    #allocation16 [shape = 'u8[262144]{0}', space=vmem, size = 0x40000, scoped, tag = 'input window, operand 6, single buffered']
    #allocation17 [shape = 'u8[2048]{0}', space=vmem, size = 0x800, scoped, tag = 'input window, operand 7, single buffered']
    #allocation18 [shape = 's32[1]{0}', space=sflag, size = 0x4, scoped, tag = 'scoped memory for tpu_custom_call.1']
    #allocation19 [shape = 'u8[2048]{0}', space=vmem, size = 0x800, scoped, tag = 'input window, operand 8, single buffered']
    #allocation20 [shape = 'u8[4096]{0}', space=vmem, size = 0x1000, scoped, tag = 'input window, operand 10, single buffered']
    #allocation21 [shape = 's32[1]{0}', space=sflag, size = 0x4, scoped, tag = 'scoped memory for tpu_custom_call.1']
    #allocation22 [shape = 'u8[4096]{0}', space=vmem, size = 0x1000, scoped, tag = 'input window, operand 11, single buffered']
    #allocation23 [shape = 'u8[4096]{0}', space=vmem, size = 0x1000, scoped, tag = 'input window, operand 13, single buffered']
    #allocation24 [shape = 's32[1]{0}', space=sflag, size = 0x4, scoped, tag = 'scoped memory for tpu_custom_call.1']
    #allocation25 [shape = 'u8[16384]{0}', space=vmem, size = 0x4000, scoped, tag = 'output window, operand 0, single buffered']
    #allocation27 [shape = 'u32[9]{0}', space=smem, size = 0x24, scoped, tag = 'DMA stride descriptor']
    #allocation29 [shape = 'u32[9]{0}', space=smem, size = 0x24, scoped, tag = 'DMA stride descriptor']
    %19 = vsyncpa [#allocation6], 0
    %20 = vsyncpa [#allocation9], 0
    %21 = vsyncpa [#allocation12], 0
    %22 = vsyncpa [#allocation15], 0
    %23 = vsyncpa [#allocation18], 0
    %24 = vsyncpa [#allocation21], 0
    %25 = vsyncpa [#allocation24], 0
    %26 = vsyncpa [#allocation7], 0
    // Predicated region
    $region2: #{tpu_custom_call.1} parent=1 // pred_check
      _
    $region3: #{tpu_custom_call.1} parent=1 // pred_check_branch
      %28 = sbr.rel (0) target = $region5
    $region4: #{tpu_custom_call.1} parent=1 // pred_region
      %s30 = ssub.s32 128, 128
      %31 = vsyncadd [#allocation6], %s30
      %s33 = sshll.u32 [#allocation5], 4
      %s34 = int_to_ptr.vmem [resolvable:$true] %s33
      %36 = dma.hbm_to_vmem [thread:$0]  %s0, 128, %s34, [#allocation6]
    $region5: #{tpu_custom_call.1} parent=1 // pred_fallthru
      _
    // Predicated region
    $region6: #{tpu_custom_call.1} parent=1 // pred_check
      _
    $region7: #{tpu_custom_call.1} parent=1 // pred_check_branch
      %38 = sbr.rel (0) target = $region9
    $region8: #{tpu_custom_call.1} parent=1 // pred_region
      %s40 = ssub.s32 256, 256
      %41 = vsyncadd [#allocation9], %s40
      %s42 = sshll.u32 [#allocation8], 4
      %s43 = int_to_ptr.vmem [resolvable:$true] %s42
      %48 = dma.hbm_to_vmem [thread:$0]  %s1, 256, %s43, [#allocation9], 64, 64, 4
    $region9: #{tpu_custom_call.1} parent=1 // pred_fallthru
      _
    // Predicated region
    $region10: #{tpu_custom_call.1} parent=1 // pred_check
      _
    $region11: #{tpu_custom_call.1} parent=1 // pred_check_branch
      %50 = sbr.rel (0) target = $region13
    $region12: #{tpu_custom_call.1} parent=1 // pred_region
      %s52 = ssub.s32 16, 16
      %53 = vsyncadd [#allocation9], %s52
      %s55 = sshll.u32 [#allocation10], 4
      %s56 = int_to_ptr.vmem [resolvable:$true] %s55
      %58 = dma.hbm_to_vmem [thread:$0]  %s2, 16, %s56, [#allocation9]
    $region13: #{tpu_custom_call.1} parent=1 // pred_fallthru
      _
    // Predicated region
    $region14: #{tpu_custom_call.1} parent=1 // pred_check
      _
    $region15: #{tpu_custom_call.1} parent=1 // pred_check_branch
      %60 = sbr.rel (0) target = $region17
    $region16: #{tpu_custom_call.1} parent=1 // pred_region
      %s62 = ssub.s32 2048, 2048
      %63 = vsyncadd [#allocation12], %s62
      %s64 = sshll.u32 [#allocation11], 4
      %s65 = int_to_ptr.vmem [resolvable:$true] %s64
      %70 = dma.hbm_to_vmem [thread:$0]  %s3, 2048, %s65, [#allocation12], 128, 128, 8
    $region17: #{tpu_custom_call.1} parent=1 // pred_fallthru
      _
    // Predicated region
    $region18: #{tpu_custom_call.1} parent=1 // pred_check
      _
    $region19: #{tpu_custom_call.1} parent=1 // pred_check_branch
      %72 = sbr.rel (0) target = $region21
    $region20: #{tpu_custom_call.1} parent=1 // pred_region
      %s74 = ssub.s32 32, 32
      %75 = vsyncadd [#allocation12], %s74
      %s77 = sshll.u32 [#allocation13], 4
      %s78 = int_to_ptr.vmem [resolvable:$true] %s77
      %80 = dma.hbm_to_vmem [thread:$0]  %s4, 32, %s78, [#allocation12]
    $region21: #{tpu_custom_call.1} parent=1 // pred_fallthru
      _
    // Predicated region
    $region22: #{tpu_custom_call.1} parent=1 // pred_check
      _
    $region23: #{tpu_custom_call.1} parent=1 // pred_check_branch
      %82 = sbr.rel (0) target = $region25
    $region24: #{tpu_custom_call.1} parent=1 // pred_region
      %s84 = ssub.s32 32, 32
      %85 = vsyncadd [#allocation15], %s84
      %s87 = sshll.u32 [#allocation14], 4
      %s88 = int_to_ptr.vmem [resolvable:$true] %s87
      %90 = dma.hbm_to_vmem [thread:$0]  %s5, 32, %s88, [#allocation15]
    $region25: #{tpu_custom_call.1} parent=1 // pred_fallthru
      _
    // Predicated region
    $region26: #{tpu_custom_call.1} parent=1 // pred_check
      _
    $region27: #{tpu_custom_call.1} parent=1 // pred_check_branch
      %92 = sbr.rel (0) target = $region29
    $region28: #{tpu_custom_call.1} parent=1 // pred_region
      %s94 = ssub.s32 8192, 8192
      %95 = vsyncadd [#allocation15], %s94
      %s96 = sshll.u32 [#allocation16], 4
      %s97 = int_to_ptr.vmem [resolvable:$true] %s96
      %102 = dma.hbm_to_vmem [thread:$0]  %s6, 8192, %s97, [#allocation15], 256, 256, 16
    $region29: #{tpu_custom_call.1} parent=1 // pred_fallthru
      _
    // Predicated region
    $region30: #{tpu_custom_call.1} parent=1 // pred_check
      _
    $region31: #{tpu_custom_call.1} parent=1 // pred_check_branch
      %104 = sbr.rel (0) target = $region33
    $region32: #{tpu_custom_call.1} parent=1 // pred_region
      %s106 = ssub.s32 64, 64
      %107 = vsyncadd [#allocation18], %s106
      %s109 = sshll.u32 [#allocation17], 4
      %s110 = int_to_ptr.vmem [resolvable:$true] %s109
      %112 = dma.hbm_to_vmem [thread:$0]  %s7, 64, %s110, [#allocation18]
    $region33: #{tpu_custom_call.1} parent=1 // pred_fallthru
      _
    // Predicated region
    $region34: #{tpu_custom_call.1} parent=1 // pred_check
      _
    $region35: #{tpu_custom_call.1} parent=1 // pred_check_branch
      %114 = sbr.rel (0) target = $region37
    $region36: #{tpu_custom_call.1} parent=1 // pred_region
      %s116 = ssub.s32 64, 64
      %117 = vsyncadd [#allocation18], %s116
      %s119 = sshll.u32 [#allocation19], 4
      %s120 = int_to_ptr.vmem [resolvable:$true] %s119
      %122 = dma.hbm_to_vmem [thread:$0]  %s8, 64, %s120, [#allocation18]
    $region37: #{tpu_custom_call.1} parent=1 // pred_fallthru
      _
    // Predicated region
    $region38: #{tpu_custom_call.1} parent=1 // pred_check
      _
    $region39: #{tpu_custom_call.1} parent=1 // pred_check_branch
      %124 = sbr.rel (0) target = $region41
    $region40: #{tpu_custom_call.1} parent=1 // pred_region
      %s126 = ssub.s32 128, 128
      %127 = vsyncadd [#allocation21], %s126
      %s129 = sshll.u32 [#allocation20], 4
      %s130 = int_to_ptr.vmem [resolvable:$true] %s129
      %132 = dma.hbm_to_vmem [thread:$0]  %s10, 128, %s130, [#allocation21]
    $region41: #{tpu_custom_call.1} parent=1 // pred_fallthru
      _
    // Predicated region
    $region42: #{tpu_custom_call.1} parent=1 // pred_check
      _
    $region43: #{tpu_custom_call.1} parent=1 // pred_check_branch
      %134 = sbr.rel (0) target = $region45
    $region44: #{tpu_custom_call.1} parent=1 // pred_region
      %s136 = ssub.s32 128, 128
      %137 = vsyncadd [#allocation21], %s136
      %s139 = sshll.u32 [#allocation22], 4
      %s140 = int_to_ptr.vmem [resolvable:$true] %s139
      %142 = dma.hbm_to_vmem [thread:$0]  %s11, 128, %s140, [#allocation21]
    $region45: #{tpu_custom_call.1} parent=1 // pred_fallthru
      _
    // Predicated region
    $region46: #{tpu_custom_call.1} parent=1 // pred_check
      _
    $region47: #{tpu_custom_call.1} parent=1 // pred_check_branch
      %144 = sbr.rel (0) target = $region49
    $region48: #{tpu_custom_call.1} parent=1 // pred_region
      %s146 = ssub.s32 128, 128
      %147 = vsyncadd [#allocation24], %s146
      %s149 = sshll.u32 [#allocation23], 4
      %s150 = int_to_ptr.vmem [resolvable:$true] %s149
      %152 = dma.hbm_to_vmem [thread:$0]  %s13, 128, %s150, [#allocation24]
    $region49: #{tpu_custom_call.1} parent=1 // pred_fallthru
      _
    // Predicated region
    $region50: #{tpu_custom_call.1} parent=1 // pred_check
      _
    $region51: #{tpu_custom_call.1} parent=1 // pred_check_branch
      %154 = sbr.rel (0) target = $region53
    $region52: #{tpu_custom_call.1} parent=1 // pred_region
      %155 = dma.done [#allocation6], 128
    $region53: #{tpu_custom_call.1} parent=1 // pred_fallthru
      _
    // Predicated region
    $region54: #{tpu_custom_call.1} parent=1 // pred_check
      _
    $region55: #{tpu_custom_call.1} parent=1 // pred_check_branch
      %157 = sbr.rel (0) target = $region57
    $region56: #{tpu_custom_call.1} parent=1 // pred_region
      %158 = dma.done [#allocation9], 256
    $region57: #{tpu_custom_call.1} parent=1 // pred_fallthru
      _
    // Predicated region
    $region58: #{tpu_custom_call.1} parent=1 // pred_check
      _
    $region59: #{tpu_custom_call.1} parent=1 // pred_check_branch
      %160 = sbr.rel (0) target = $region61
    $region60: #{tpu_custom_call.1} parent=1 // pred_region
      %161 = dma.done [#allocation9], 16
    $region61: #{tpu_custom_call.1} parent=1 // pred_fallthru
      _
    // Predicated region
    $region62: #{tpu_custom_call.1} parent=1 // pred_check
      _
    $region63: #{tpu_custom_call.1} parent=1 // pred_check_branch
      %163 = sbr.rel (0) target = $region65
    $region64: #{tpu_custom_call.1} parent=1 // pred_region
      %164 = dma.done [#allocation12], 2048
    $region65: #{tpu_custom_call.1} parent=1 // pred_fallthru
      _
    // Predicated region
    $region66: #{tpu_custom_call.1} parent=1 // pred_check
      _
    $region67: #{tpu_custom_call.1} parent=1 // pred_check_branch
      %166 = sbr.rel (0) target = $region69
    $region68: #{tpu_custom_call.1} parent=1 // pred_region
      %167 = dma.done [#allocation12], 32
    $region69: #{tpu_custom_call.1} parent=1 // pred_fallthru
      _
    // Predicated region
    $region70: #{tpu_custom_call.1} parent=1 // pred_check
      _
    $region71: #{tpu_custom_call.1} parent=1 // pred_check_branch
      %169 = sbr.rel (0) target = $region73
    $region72: #{tpu_custom_call.1} parent=1 // pred_region
      %170 = dma.done [#allocation15], 32
    $region73: #{tpu_custom_call.1} parent=1 // pred_fallthru
      _
    // Predicated region
    $region74: #{tpu_custom_call.1} parent=1 // pred_check
      _
    $region75: #{tpu_custom_call.1} parent=1 // pred_check_branch
      %172 = sbr.rel (0) target = $region77
    $region76: #{tpu_custom_call.1} parent=1 // pred_region
      %173 = dma.done [#allocation15], 8192
    $region77: #{tpu_custom_call.1} parent=1 // pred_fallthru
      _
    // Predicated region
    $region78: #{tpu_custom_call.1} parent=1 // pred_check
      _
    $region79: #{tpu_custom_call.1} parent=1 // pred_check_branch
      %175 = sbr.rel (0) target = $region81
    $region80: #{tpu_custom_call.1} parent=1 // pred_region
      %176 = dma.done [#allocation18], 64
    $region81: #{tpu_custom_call.1} parent=1 // pred_fallthru
      _
    // Predicated region
    $region82: #{tpu_custom_call.1} parent=1 // pred_check
      _
    $region83: #{tpu_custom_call.1} parent=1 // pred_check_branch
      %178 = sbr.rel (0) target = $region85
    $region84: #{tpu_custom_call.1} parent=1 // pred_region
      %179 = dma.done [#allocation18], 64
    $region85: #{tpu_custom_call.1} parent=1 // pred_fallthru
      _
    // Predicated region
    $region86: #{tpu_custom_call.1} parent=1 // pred_check
      _
    $region87: #{tpu_custom_call.1} parent=1 // pred_check_branch
      %181 = sbr.rel (0) target = $region89
    $region88: #{tpu_custom_call.1} parent=1 // pred_region
      %182 = dma.done [#allocation21], 128
    $region89: #{tpu_custom_call.1} parent=1 // pred_fallthru
      _
    // Predicated region
    $region90: #{tpu_custom_call.1} parent=1 // pred_check
      _
    $region91: #{tpu_custom_call.1} parent=1 // pred_check_branch
      %184 = sbr.rel (0) target = $region93
    $region92: #{tpu_custom_call.1} parent=1 // pred_region
      %185 = dma.done [#allocation21], 128
    $region93: #{tpu_custom_call.1} parent=1 // pred_fallthru
      _
    // Predicated region
    $region94: #{tpu_custom_call.1} parent=1 // pred_check
      _
    $region95: #{tpu_custom_call.1} parent=1 // pred_check_branch
      %187 = sbr.rel (0) target = $region97
    $region96: #{tpu_custom_call.1} parent=1 // pred_region
      %188 = dma.done [#allocation24], 128
    $region97: #{tpu_custom_call.1} parent=1 // pred_fallthru
      _
    %s191 = sshll.u32 1, 14
    %s192 = sxor.u32 4294967295, %s191
    %s194 = sld [smem:[#allocation0]]
    %s195 = sadd.s32 2, %s194
    %s197 = sshll.u32 7, 26
    %s198 = sxor.u32 4294967295, %s197
    %s199 = sand.u32 0, %s198
    %s200 = sshll.u32 %s195, 26
    %s201 = sor.u32 %s199, %s200
    %s202 = sshll.u32 [#allocation2], 4
    %s203 = int_to_ptr.vmem [resolvable:$true] %s202
    %206 = sst [smem:[#allocation27]] 1024
    %s207 = scalar_lea.smem [#allocation27], 1
    %208 = sst [smem:[%s207]] 1024
    %s209 = scalar_lea.smem [#allocation27], 2
    %210 = sst [smem:[%s209]] 8
    %s211 = scalar_lea.smem [#allocation27], 3
    %212 = sst [smem:[%s211]] 64
    %s213 = scalar_lea.smem [#allocation27], 4
    %214 = sst [smem:[%s213]] 128
    %s215 = scalar_lea.smem [#allocation27], 5
    %216 = sst [smem:[%s215]] 2
    %s217 = scalar_lea.smem [#allocation27], 6
    %218 = sst [smem:[%s217]] 512
    %s219 = scalar_lea.smem [#allocation27], 7
    %220 = sst [smem:[%s219]] 64
    %s221 = scalar_lea.smem [#allocation27], 8
    %222 = sst [smem:[%s221]] 4
    %224 = dma.general %s9, 32768, %s203, [#allocation4], [#allocation26], [#allocation27], %s201, 0
    %s225 = scalar_lea.sflag [#allocation4], 1
    %s227 = sshll.u32 1, 14
    %s228 = sxor.u32 4294967295, %s227
    %s230 = sadd.s32 2, %s194
    %s232 = sshll.u32 7, 26
    %s233 = sxor.u32 4294967295, %s232
    %s234 = sand.u32 0, %s233
    %s235 = sshll.u32 %s230, 26
    %s236 = sor.u32 %s234, %s235
    %s237 = sshll.u32 [#allocation3], 4
    %s238 = int_to_ptr.vmem [resolvable:$true] %s237
    %241 = sst [smem:[#allocation29]] 1024
    %s242 = scalar_lea.smem [#allocation29], 1
    %243 = sst [smem:[%s242]] 1024
    %s244 = scalar_lea.smem [#allocation29], 2
    %245 = sst [smem:[%s244]] 8
    %s246 = scalar_lea.smem [#allocation29], 3
    %247 = sst [smem:[%s246]] 64
    %s248 = scalar_lea.smem [#allocation29], 4
    %249 = sst [smem:[%s248]] 128
    %s250 = scalar_lea.smem [#allocation29], 5
    %251 = sst [smem:[%s250]] 2
    %s252 = scalar_lea.smem [#allocation29], 6
    %253 = sst [smem:[%s252]] 512
    %s254 = scalar_lea.smem [#allocation29], 7
    %255 = sst [smem:[%s254]] 64
    %s256 = scalar_lea.smem [#allocation29], 8
    %257 = sst [smem:[%s256]] 4
    %259 = dma.general %s12, 65536, %s238, %s225, [#allocation28], [#allocation29], %s236, 0
    %v260 = vld [vmem:[#allocation5] sm:$0xff]
    %v261 = vpack.c.bf16 %v260, %v260
    %v262 = vld [vmem:[#allocation8] sm:$0xf]
    %v263 = vld [vmem:[#allocation8 + $0x4] sm:$0xf]
    %v264 = vld [vmem:[#allocation8 + $0x8] sm:$0xf]
    %v265 = vld [vmem:[#allocation8 + $0xc] sm:$0xf]
    %v266 = vld [vmem:[#allocation10] sm:$0x1]
    %v268 = vlaneseq
    %v269 = vshrl.u32 %v268, 7
    %v270 = vsub.s32 0, %v269
    %v271 = vrot.slane %v266, %v270
    %v277 = vunpack.c.l.b16 %v262
    %v278 = vunpack.c.l.b16 %v263
    %v279 = vunpack.c.l.b16 %v264
    %v280 = vunpack.c.l.b16 %v265
    %v281 = vpack.c.b16 %v278, %v277
    %v282 = vpack.c.b16 %v280, %v279
    %vm285 = vcmask 261120
    %v287 = vsel %vm285, %v261, 0
    %289 = vmatprep.subr.bf16.mxu0 0
    %290 = vmatpush1.bf16.msra.mxu0 %v281
    %291 = vmatprep.subr.bf16.mxu0 0
    %292 = vmatpush1.bf16.msra.mxu0 %v282
    %293 = vmatprep.subr.bf16.mxu0 0
    %294 = vmatpush1.bf16.msra.mxu0 0
    %295 = vmatprep.subr.bf16.mxu0 0
    %296 = vmatpush1.bf16.msra.mxu0 0
    %297 = vmatprep.subr.bf16.mxu0 0
    %298 = vmatpush1.bf16.msra.mxu0 0
    %299 = vmatprep.subr.bf16.mxu0 0
    %300 = vmatpush1.bf16.msra.mxu0 0
    %301 = vmatprep.subr.bf16.mxu0 0
    %302 = vmatpush1.bf16.msra.mxu0 0
    %303 = vmatprep.subr.bf16.mxu0 0
    %304 = vmatpush1.bf16.msra.mxu0 0
    %305 = vmatprep.subr.bf16.mxu0 0
    %306 = vmatpush1.bf16.msra.mxu0 0
    %307 = vmatprep.subr.bf16.mxu0 0
    %308 = vmatpush1.bf16.msra.mxu0 0
    %309 = vmatprep.subr.bf16.mxu0 0
    %310 = vmatpush1.bf16.msra.mxu0 0
    %311 = vmatprep.subr.bf16.mxu0 0
    %312 = vmatpush1.bf16.msra.mxu0 0
    %313 = vmatprep.subr.bf16.mxu0 0
    %314 = vmatpush1.bf16.msra.mxu0 0
    %315 = vmatprep.subr.bf16.mxu0 0
    %316 = vmatpush1.bf16.msra.mxu0 0
    %317 = vmatprep.subr.bf16.mxu0 0
    %318 = vmatpush1.bf16.msra.mxu0 0
    %319 = vmatprep.subr.bf16.mxu0 0
    %320 = vmatpush1.bf16.msra.mxu0 0
    %321 = vmatprep.mubr.bf16.mxu0 0
    %322 = vmatmul.mubr.bf16.gmra.mrb[0].mxu0 %v287
    %v323 = vpop.f32.mrb[0].mxu0
    %v324 = vadd.f32 %v271, %v323
    %v325 = vpop.f32.mrb[0].mxu0
    %v326 = vpop.f32.mrb[0].mxu0
    %v327 = vpop.f32.mrb[0].mxu0
    %328 = vdwg.mxu0
    %v329 = vmul.f32 %v324, 0.2
    %v330 = vmax.f32 %v324, %v329
    %v331 = vpack.c.bf16 %v330, %v330
    %v332 = vld [vmem:[#allocation11] sm:$0xff]
    %v333 = vld [vmem:[#allocation11 + $0x8] sm:$0xff]
    %v334 = vld [vmem:[#allocation11 + $0x10] sm:$0xff]
    %v335 = vld [vmem:[#allocation11 + $0x18] sm:$0xff]
    %v336 = vld [vmem:[#allocation11 + $0x20] sm:$0xff]
    %v337 = vld [vmem:[#allocation11 + $0x28] sm:$0xff]
    %v338 = vld [vmem:[#allocation11 + $0x30] sm:$0xff]
    %v339 = vld [vmem:[#allocation11 + $0x38] sm:$0xff]
    %v340 = vld [vmem:[#allocation11 + $0x40] sm:$0xff]
    %v341 = vld [vmem:[#allocation11 + $0x48] sm:$0xff]
    %v342 = vld [vmem:[#allocation11 + $0x50] sm:$0xff]
    %v343 = vld [vmem:[#allocation11 + $0x58] sm:$0xff]
    %v344 = vld [vmem:[#allocation11 + $0x60] sm:$0xff]
    %v345 = vld [vmem:[#allocation11 + $0x68] sm:$0xff]
    %v346 = vld [vmem:[#allocation11 + $0x70] sm:$0xff]
    %v347 = vld [vmem:[#allocation11 + $0x78] sm:$0xff]
    %v364 = vunpack.c.l.b16 %v332
    %v365 = vunpack.c.h.b16 %v332
    %v366 = vunpack.c.l.b16 %v333
    %v367 = vunpack.c.h.b16 %v333
    %v368 = vunpack.c.l.b16 %v334
    %v369 = vunpack.c.h.b16 %v334
    %v370 = vunpack.c.l.b16 %v335
    %v371 = vunpack.c.h.b16 %v335
    %v372 = vunpack.c.l.b16 %v336
    %v373 = vunpack.c.h.b16 %v336
    %v374 = vunpack.c.l.b16 %v337
    %v375 = vunpack.c.h.b16 %v337
    %v376 = vunpack.c.l.b16 %v338
    %v377 = vunpack.c.h.b16 %v338
    %v378 = vunpack.c.l.b16 %v339
    %v379 = vunpack.c.h.b16 %v339
    %v380 = vunpack.c.l.b16 %v340
    %v381 = vunpack.c.h.b16 %v340
    %v382 = vunpack.c.l.b16 %v341
    %v383 = vunpack.c.h.b16 %v341
    %v384 = vunpack.c.l.b16 %v342
    %v385 = vunpack.c.h.b16 %v342
    %v386 = vunpack.c.l.b16 %v343
    %v387 = vunpack.c.h.b16 %v343
    %v388 = vunpack.c.l.b16 %v344
    %v389 = vunpack.c.h.b16 %v344
    %v390 = vunpack.c.l.b16 %v345
    %v391 = vunpack.c.h.b16 %v345
    %v392 = vunpack.c.l.b16 %v346
    %v393 = vunpack.c.h.b16 %v346
    %v394 = vunpack.c.l.b16 %v347
    %v395 = vunpack.c.h.b16 %v347
    %v396 = vpack.c.b16 %v366, %v364
    %v397 = vpack.c.b16 %v367, %v365
    %v398 = vpack.c.b16 %v370, %v368
    %v399 = vpack.c.b16 %v371, %v369
    %v400 = vpack.c.b16 %v374, %v372
    %v401 = vpack.c.b16 %v375, %v373
    %v402 = vpack.c.b16 %v378, %v376
    %v403 = vpack.c.b16 %v379, %v377
    %v404 = vpack.c.b16 %v382, %v380
    %v405 = vpack.c.b16 %v383, %v381
    %v406 = vpack.c.b16 %v386, %v384
    %v407 = vpack.c.b16 %v387, %v385
    %v408 = vpack.c.b16 %v390, %v388
    %v409 = vpack.c.b16 %v391, %v389
    %v410 = vpack.c.b16 %v394, %v392
    %v411 = vpack.c.b16 %v395, %v393
    %428 = vmatprep.subr.bf16.mxu0 %v397
    %429 = vmatpush1.bf16.msra.mxu0 %v396
    %430 = vmatprep.subr.bf16.mxu0 %v399
    %431 = vmatpush1.bf16.msra.mxu0 %v398
    %432 = vmatprep.subr.bf16.mxu0 %v401
    %433 = vmatpush1.bf16.msra.mxu0 %v400
    %434 = vmatprep.subr.bf16.mxu0 %v403
    %435 = vmatpush1.bf16.msra.mxu0 %v402
    %436 = vmatprep.subr.bf16.mxu0 %v405
    %437 = vmatpush1.bf16.msra.mxu0 %v404
    %438 = vmatprep.subr.bf16.mxu0 %v407
    %439 = vmatpush1.bf16.msra.mxu0 %v406
    %440 = vmatprep.subr.bf16.mxu0 %v409
    %441 = vmatpush1.bf16.msra.mxu0 %v408
    %442 = vmatprep.subr.bf16.mxu0 %v411
    %443 = vmatpush1.bf16.msra.mxu0 %v410
    %444 = vmatprep.subr.bf16.mxu0 0
    %445 = vmatpush1.bf16.msra.mxu0 0
    %446 = vmatprep.subr.bf16.mxu0 0
    %447 = vmatpush1.bf16.msra.mxu0 0
    %448 = vmatprep.subr.bf16.mxu0 0
    %449 = vmatpush1.bf16.msra.mxu0 0
    %450 = vmatprep.subr.bf16.mxu0 0
    %451 = vmatpush1.bf16.msra.mxu0 0
    %452 = vmatprep.subr.bf16.mxu0 0
    %453 = vmatpush1.bf16.msra.mxu0 0
    %454 = vmatprep.subr.bf16.mxu0 0
    %455 = vmatpush1.bf16.msra.mxu0 0
    %456 = vmatprep.subr.bf16.mxu0 0
    %457 = vmatpush1.bf16.msra.mxu0 0
    %458 = vmatprep.subr.bf16.mxu0 0
    %459 = vmatpush1.bf16.msra.mxu0 0
    %460 = vmatprep.mubr.bf16.mxu0 0
    %461 = vmatmul.mubr.bf16.gmra.mrb[0].mxu0 %v331
    %v462 = vpop.f32.mrb[0].mxu0
    %v463 = vadd.f32 0.0, %v462
    %v464 = vpop.f32.mrb[0].mxu0
    %v465 = vadd.f32 0.0, %v464
    %v466 = vpop.f32.mrb[0].mxu0
    %v467 = vpop.f32.mrb[0].mxu0
    %468 = vdwg.mxu0
    %v469 = vrot.slane %v463, 4
    %v470 = vadd.f32 %v463, %v469
    %v471 = vrot.slane %v470, 2
    %v472 = vadd.f32 %v470, %v471
    %v473 = vrot.slane %v472, 1
    %v474 = vadd.f32 %v472, %v473
    %v475 = vrot.slane %v465, 4
    %v476 = vadd.f32 %v465, %v475
    %v477 = vrot.slane %v476, 2
    %v478 = vadd.f32 %v476, %v477
    %v479 = vrot.slane %v478, 1
    %v480 = vadd.f32 %v478, %v479
    %v481 = vrcp.pop 8.0
    %v482 = vmul.f32 %v474, %v481
    %v483 = vmul.f32 %v480, %v481
    %v484 = vmul.f32 %v463, %v463
    %v485 = vmul.f32 %v465, %v465
    %v486 = vrot.slane %v484, 4
    %v487 = vadd.f32 %v484, %v486
    %v488 = vrot.slane %v487, 2
    %v489 = vadd.f32 %v487, %v488
    %v490 = vrot.slane %v489, 1
    %v491 = vadd.f32 %v489, %v490
    %v492 = vrot.slane %v485, 4
    %v493 = vadd.f32 %v485, %v492
    %v494 = vrot.slane %v493, 2
    %v495 = vadd.f32 %v493, %v494
    %v496 = vrot.slane %v495, 1
    %v497 = vadd.f32 %v495, %v496
    %v498 = vmul.f32 %v491, %v481
    %v499 = vmul.f32 %v497, %v481
    %v500 = vmul.f32 %v482, %v482
    %v501 = vmul.f32 %v483, %v483
    %v502 = vsub.f32 %v498, %v500
    %v503 = vsub.f32 %v499, %v501
    %v504 = vmax.f32 %v502, 0.0
    %v505 = vmax.f32 %v503, 0.0
    %v506 = vld [vmem:[#allocation13] sm:$0x3]
    %v507 = vadd.f32 %v504, 0.8
    %v508 = vadd.f32 %v505, 0.8
    %v509 = vrsqrt.pop %v507
    %v510 = vrsqrt.pop %v508
    %v513 = vcombine.low %v509, %v510
    %v515 = vunpack.c.l.s4 1966171168
    %v516 = vunpack.c.0.s8 %v515
    %v517 = vlaneseq
    %v518 = vshrl.u32 %v517, 7
    %v519 = vsub.s32 %v516, %v518
    %v520 = vrot.slane %v513, %v519
    %v522 = vunpack.c.l.s4 1966171168
    %v523 = vunpack.c.0.s8 %v522
    %v524 = vlaneseq
    %v525 = vshrl.u32 %v524, 7
    %v526 = vsub.s32 %v523, %v525
    %v527 = vrot.slane %v520, %v526
    %v529 = vmul.f32 %v506, %v527
    %v530 = vld [vmem:[#allocation14] sm:$0x3]
    %v532 = vlaneseq
    %v533 = vshrl.u32 %v532, 7
    %v534 = vsub.s32 0, %v533
    %v535 = vrot.slane %v529, %v534
    %v536 = vlaneseq
    %v537 = vshrl.u32 %v536, 7
    %v538 = vsub.s32 1, %v537
    %v539 = vrot.slane %v529, %v538
    %v542 = vmul.f32 %v482, %v535
    %v543 = vmul.f32 %v483, %v539
    %v546 = vcombine.low %v542, %v543
    %v548 = vunpack.c.l.s4 1966171168
    %v549 = vunpack.c.0.s8 %v548
    %v550 = vlaneseq
    %v551 = vshrl.u32 %v550, 7
    %v552 = vsub.s32 %v549, %v551
    %v553 = vrot.slane %v546, %v552
    %v555 = vunpack.c.l.s4 1966171168
    %v556 = vunpack.c.0.s8 %v555
    %v557 = vlaneseq
    %v558 = vshrl.u32 %v557, 7
    %v559 = vsub.s32 %v556, %v558
    %v560 = vrot.slane %v553, %v559
    %v562 = vsub.f32 %v530, %v560
    %v563 = vmul.f32 %v463, %v535
    %v564 = vmul.f32 %v465, %v539
    %v566 = vlaneseq
    %v567 = vshrl.u32 %v566, 7
    %v568 = vsub.s32 0, %v567
    %v569 = vrot.slane %v562, %v568
    %v570 = vlaneseq
    %v571 = vshrl.u32 %v570, 7
    %v572 = vsub.s32 1, %v571
    %v573 = vrot.slane %v562, %v572
    %v576 = vadd.f32 %v563, %v569
    %v577 = vadd.f32 %v564, %v573
    %v578 = vmul.f32 %v576, 0.2
    %v579 = vmul.f32 %v577, 0.2
    %v580 = vmax.f32 %v576, %v578
    %v581 = vmax.f32 %v577, %v579
    %v582 = vpack.c.bf16 %v580, %v580
    %v583 = vpack.c.bf16 %v581, %v581
    %v584 = vld [vmem:[#allocation16] sm:$0xff]
    %v585 = vld [vmem:[#allocation16 + $0x8] sm:$0xff]
    %v586 = vld [vmem:[#allocation16 + $0x10] sm:$0xff]
    %v587 = vld [vmem:[#allocation16 + $0x18] sm:$0xff]
    %v588 = vld [vmem:[#allocation16 + $0x20] sm:$0xff]
    %v589 = vld [vmem:[#allocation16 + $0x28] sm:$0xff]
    %v590 = vld [vmem:[#allocation16 + $0x30] sm:$0xff]
    %v591 = vld [vmem:[#allocation16 + $0x38] sm:$0xff]
    %v592 = vld [vmem:[#allocation16 + $0x40] sm:$0xff]
    %v593 = vld [vmem:[#allocation16 + $0x48] sm:$0xff]
    %v594 = vld [vmem:[#allocation16 + $0x50] sm:$0xff]
    %v595 = vld [vmem:[#allocation16 + $0x58] sm:$0xff]
    %v596 = vld [vmem:[#allocation16 + $0x60] sm:$0xff]
    %v597 = vld [vmem:[#allocation16 + $0x68] sm:$0xff]
    %v598 = vld [vmem:[#allocation16 + $0x70] sm:$0xff]
    %v599 = vld [vmem:[#allocation16 + $0x78] sm:$0xff]
    %v600 = vld [vmem:[#allocation16 + $0x80] sm:$0xff]
    %v601 = vld [vmem:[#allocation16 + $0x88] sm:$0xff]
    %v602 = vld [vmem:[#allocation16 + $0x90] sm:$0xff]
    %v603 = vld [vmem:[#allocation16 + $0x98] sm:$0xff]
    %v604 = vld [vmem:[#allocation16 + $0xa0] sm:$0xff]
    %v605 = vld [vmem:[#allocation16 + $0xa8] sm:$0xff]
    %v606 = vld [vmem:[#allocation16 + $0xb0] sm:$0xff]
    %v607 = vld [vmem:[#allocation16 + $0xb8] sm:$0xff]
    %v608 = vld [vmem:[#allocation16 + $0xc0] sm:$0xff]
    %v609 = vld [vmem:[#allocation16 + $0xc8] sm:$0xff]
    %v610 = vld [vmem:[#allocation16 + $0xd0] sm:$0xff]
    %v611 = vld [vmem:[#allocation16 + $0xd8] sm:$0xff]
    %v612 = vld [vmem:[#allocation16 + $0xe0] sm:$0xff]
    %v613 = vld [vmem:[#allocation16 + $0xe8] sm:$0xff]
    %v614 = vld [vmem:[#allocation16 + $0xf0] sm:$0xff]
    %v615 = vld [vmem:[#allocation16 + $0xf8] sm:$0xff]
    %v616 = vld [vmem:[#allocation16 + $0x100] sm:$0xff]
    %v617 = vld [vmem:[#allocation16 + $0x108] sm:$0xff]
    %v618 = vld [vmem:[#allocation16 + $0x110] sm:$0xff]
    %v619 = vld [vmem:[#allocation16 + $0x118] sm:$0xff]
    %v620 = vld [vmem:[#allocation16 + $0x120] sm:$0xff]
    %v621 = vld [vmem:[#allocation16 + $0x128] sm:$0xff]
    %v622 = vld [vmem:[#allocation16 + $0x130] sm:$0xff]
    %v623 = vld [vmem:[#allocation16 + $0x138] sm:$0xff]
    %v624 = vld [vmem:[#allocation16 + $0x140] sm:$0xff]
    %v625 = vld [vmem:[#allocation16 + $0x148] sm:$0xff]
    %v626 = vld [vmem:[#allocation16 + $0x150] sm:$0xff]
    %v627 = vld [vmem:[#allocation16 + $0x158] sm:$0xff]
    %v628 = vld [vmem:[#allocation16 + $0x160] sm:$0xff]
    %v629 = vld [vmem:[#allocation16 + $0x168] sm:$0xff]
    %v630 = vld [vmem:[#allocation16 + $0x170] sm:$0xff]
    %v631 = vld [vmem:[#allocation16 + $0x178] sm:$0xff]
    %v632 = vld [vmem:[#allocation16 + $0x180] sm:$0xff]
    %v633 = vld [vmem:[#allocation16 + $0x188] sm:$0xff]
    %v634 = vld [vmem:[#allocation16 + $0x190] sm:$0xff]
    %v635 = vld [vmem:[#allocation16 + $0x198] sm:$0xff]
    %v636 = vld [vmem:[#allocation16 + $0x1a0] sm:$0xff]
    %v637 = vld [vmem:[#allocation16 + $0x1a8] sm:$0xff]
    %v638 = vld [vmem:[#allocation16 + $0x1b0] sm:$0xff]
    %v639 = vld [vmem:[#allocation16 + $0x1b8] sm:$0xff]
    %v640 = vld [vmem:[#allocation16 + $0x1c0] sm:$0xff]
    %v641 = vld [vmem:[#allocation16 + $0x1c8] sm:$0xff]
    %v642 = vld [vmem:[#allocation16 + $0x1d0] sm:$0xff]
    %v643 = vld [vmem:[#allocation16 + $0x1d8] sm:$0xff]
    %v644 = vld [vmem:[#allocation16 + $0x1e0] sm:$0xff]
    %v645 = vld [vmem:[#allocation16 + $0x1e8] sm:$0xff]
    %v646 = vld [vmem:[#allocation16 + $0x1f0] sm:$0xff]
    %v647 = vld [vmem:[#allocation16 + $0x1f8] sm:$0xff]
    %v712 = vunpack.c.l.b16 %v584
    %v713 = vunpack.c.h.b16 %v584
    %v714 = vunpack.c.l.b16 %v585
    %v715 = vunpack.c.h.b16 %v585
    %v716 = vunpack.c.l.b16 %v586
    %v717 = vunpack.c.h.b16 %v586
    %v718 = vunpack.c.l.b16 %v587
    %v719 = vunpack.c.h.b16 %v587
    %v720 = vunpack.c.l.b16 %v588
    %v721 = vunpack.c.h.b16 %v588
    %v722 = vunpack.c.l.b16 %v589
    %v723 = vunpack.c.h.b16 %v589
    %v724 = vunpack.c.l.b16 %v590
    %v725 = vunpack.c.h.b16 %v590
    %v726 = vunpack.c.l.b16 %v591
    %v727 = vunpack.c.h.b16 %v591
    %v728 = vunpack.c.l.b16 %v592
    %v729 = vunpack.c.h.b16 %v592
    %v730 = vunpack.c.l.b16 %v593
    %v731 = vunpack.c.h.b16 %v593
    %v732 = vunpack.c.l.b16 %v594
    %v733 = vunpack.c.h.b16 %v594
    %v734 = vunpack.c.l.b16 %v595
    %v735 = vunpack.c.h.b16 %v595
    %v736 = vunpack.c.l.b16 %v596
    %v737 = vunpack.c.h.b16 %v596
    %v738 = vunpack.c.l.b16 %v597
    %v739 = vunpack.c.h.b16 %v597
    %v740 = vunpack.c.l.b16 %v598
    %v741 = vunpack.c.h.b16 %v598
    %v742 = vunpack.c.l.b16 %v599
    %v743 = vunpack.c.h.b16 %v599
    %v744 = vunpack.c.l.b16 %v600
    %v745 = vunpack.c.h.b16 %v600
    %v746 = vunpack.c.l.b16 %v601
    %v747 = vunpack.c.h.b16 %v601
    %v748 = vunpack.c.l.b16 %v602
    %v749 = vunpack.c.h.b16 %v602
    %v750 = vunpack.c.l.b16 %v603
    %v751 = vunpack.c.h.b16 %v603
    %v752 = vunpack.c.l.b16 %v604
    %v753 = vunpack.c.h.b16 %v604
    %v754 = vunpack.c.l.b16 %v605
    %v755 = vunpack.c.h.b16 %v605
    %v756 = vunpack.c.l.b16 %v606
    %v757 = vunpack.c.h.b16 %v606
    %v758 = vunpack.c.l.b16 %v607
    %v759 = vunpack.c.h.b16 %v607
    %v760 = vunpack.c.l.b16 %v608
    %v761 = vunpack.c.h.b16 %v608
    %v762 = vunpack.c.l.b16 %v609
    %v763 = vunpack.c.h.b16 %v609
    %v764 = vunpack.c.l.b16 %v610
    %v765 = vunpack.c.h.b16 %v610
    %v766 = vunpack.c.l.b16 %v611
    %v767 = vunpack.c.h.b16 %v611
    %v768 = vunpack.c.l.b16 %v612
    %v769 = vunpack.c.h.b16 %v612
    %v770 = vunpack.c.l.b16 %v613
    %v771 = vunpack.c.h.b16 %v613
    %v772 = vunpack.c.l.b16 %v614
    %v773 = vunpack.c.h.b16 %v614
    %v774 = vunpack.c.l.b16 %v615
    %v775 = vunpack.c.h.b16 %v615
    %v776 = vunpack.c.l.b16 %v616
    %v777 = vunpack.c.h.b16 %v616
    %v778 = vunpack.c.l.b16 %v617
    %v779 = vunpack.c.h.b16 %v617
    %v780 = vunpack.c.l.b16 %v618
    %v781 = vunpack.c.h.b16 %v618
    %v782 = vunpack.c.l.b16 %v619
    %v783 = vunpack.c.h.b16 %v619
    %v784 = vunpack.c.l.b16 %v620
    %v785 = vunpack.c.h.b16 %v620
    %v786 = vunpack.c.l.b16 %v621
    %v787 = vunpack.c.h.b16 %v621
    %v788 = vunpack.c.l.b16 %v622
    %v789 = vunpack.c.h.b16 %v622
    %v790 = vunpack.c.l.b16 %v623
    %v791 = vunpack.c.h.b16 %v623
    %v792 = vunpack.c.l.b16 %v624
    %v793 = vunpack.c.h.b16 %v624
    %v794 = vunpack.c.l.b16 %v625
    %v795 = vunpack.c.h.b16 %v625
    %v796 = vunpack.c.l.b16 %v626
    %v797 = vunpack.c.h.b16 %v626
    %v798 = vunpack.c.l.b16 %v627
    %v799 = vunpack.c.h.b16 %v627
    %v800 = vunpack.c.l.b16 %v628
    %v801 = vunpack.c.h.b16 %v628
    %v802 = vunpack.c.l.b16 %v629
    %v803 = vunpack.c.h.b16 %v629
    %v804 = vunpack.c.l.b16 %v630
    %v805 = vunpack.c.h.b16 %v630
    %v806 = vunpack.c.l.b16 %v631
    %v807 = vunpack.c.h.b16 %v631
    %v808 = vunpack.c.l.b16 %v632
    %v809 = vunpack.c.h.b16 %v632
    %v810 = vunpack.c.l.b16 %v633
    %v811 = vunpack.c.h.b16 %v633
    %v812 = vunpack.c.l.b16 %v634
    %v813 = vunpack.c.h.b16 %v634
    %v814 = vunpack.c.l.b16 %v635
    %v815 = vunpack.c.h.b16 %v635
    %v816 = vunpack.c.l.b16 %v636
    %v817 = vunpack.c.h.b16 %v636
    %v818 = vunpack.c.l.b16 %v637
    %v819 = vunpack.c.h.b16 %v637
    %v820 = vunpack.c.l.b16 %v638
    %v821 = vunpack.c.h.b16 %v638
    %v822 = vunpack.c.l.b16 %v639
    %v823 = vunpack.c.h.b16 %v639
    %v824 = vunpack.c.l.b16 %v640
    %v825 = vunpack.c.h.b16 %v640
    %v826 = vunpack.c.l.b16 %v641
    %v827 = vunpack.c.h.b16 %v641
    %v828 = vunpack.c.l.b16 %v642
    %v829 = vunpack.c.h.b16 %v642
    %v830 = vunpack.c.l.b16 %v643
    %v831 = vunpack.c.h.b16 %v643
    %v832 = vunpack.c.l.b16 %v644
    %v833 = vunpack.c.h.b16 %v644
    %v834 = vunpack.c.l.b16 %v645
    %v835 = vunpack.c.h.b16 %v645
    %v836 = vunpack.c.l.b16 %v646
    %v837 = vunpack.c.h.b16 %v646
    %v838 = vunpack.c.l.b16 %v647
    %v839 = vunpack.c.h.b16 %v647
    %v840 = vpack.c.b16 %v716, %v712
    %v841 = vpack.c.b16 %v717, %v713
    %v842 = vpack.c.b16 %v718, %v714
    %v843 = vpack.c.b16 %v719, %v715
    %v844 = vpack.c.b16 %v724, %v720
    %v845 = vpack.c.b16 %v725, %v721
    %v846 = vpack.c.b16 %v726, %v722
    %v847 = vpack.c.b16 %v727, %v723
    %v848 = vpack.c.b16 %v732, %v728
    %v849 = vpack.c.b16 %v733, %v729
    %v850 = vpack.c.b16 %v734, %v730
    %v851 = vpack.c.b16 %v735, %v731
    %v852 = vpack.c.b16 %v740, %v736
    %v853 = vpack.c.b16 %v741, %v737
    %v854 = vpack.c.b16 %v742, %v738
    %v855 = vpack.c.b16 %v743, %v739
    %v856 = vpack.c.b16 %v748, %v744
    %v857 = vpack.c.b16 %v749, %v745
    %v858 = vpack.c.b16 %v750, %v746
    %v859 = vpack.c.b16 %v751, %v747
    %v860 = vpack.c.b16 %v756, %v752
    %v861 = vpack.c.b16 %v757, %v753
    %v862 = vpack.c.b16 %v758, %v754
    %v863 = vpack.c.b16 %v759, %v755
    %v864 = vpack.c.b16 %v764, %v760
    %v865 = vpack.c.b16 %v765, %v761
    %v866 = vpack.c.b16 %v766, %v762
    %v867 = vpack.c.b16 %v767, %v763
    %v868 = vpack.c.b16 %v772, %v768
    %v869 = vpack.c.b16 %v773, %v769
    %v870 = vpack.c.b16 %v774, %v770
    %v871 = vpack.c.b16 %v775, %v771
    %v872 = vpack.c.b16 %v780, %v776
    %v873 = vpack.c.b16 %v781, %v777
    %v874 = vpack.c.b16 %v782, %v778
    %v875 = vpack.c.b16 %v783, %v779
    %v876 = vpack.c.b16 %v788, %v784
    %v877 = vpack.c.b16 %v789, %v785
    %v878 = vpack.c.b16 %v790, %v786
    %v879 = vpack.c.b16 %v791, %v787
    %v880 = vpack.c.b16 %v796, %v792
    %v881 = vpack.c.b16 %v797, %v793
    %v882 = vpack.c.b16 %v798, %v794
    %v883 = vpack.c.b16 %v799, %v795
    %v884 = vpack.c.b16 %v804, %v800
    %v885 = vpack.c.b16 %v805, %v801
    %v886 = vpack.c.b16 %v806, %v802
    %v887 = vpack.c.b16 %v807, %v803
    %v888 = vpack.c.b16 %v812, %v808
    %v889 = vpack.c.b16 %v813, %v809
    %v890 = vpack.c.b16 %v814, %v810
    %v891 = vpack.c.b16 %v815, %v811
    %v892 = vpack.c.b16 %v820, %v816
    %v893 = vpack.c.b16 %v821, %v817
    %v894 = vpack.c.b16 %v822, %v818
    %v895 = vpack.c.b16 %v823, %v819
    %v896 = vpack.c.b16 %v828, %v824
    %v897 = vpack.c.b16 %v829, %v825
    %v898 = vpack.c.b16 %v830, %v826
    %v899 = vpack.c.b16 %v831, %v827
    %v900 = vpack.c.b16 %v836, %v832
    %v901 = vpack.c.b16 %v837, %v833
    %v902 = vpack.c.b16 %v838, %v834
    %v903 = vpack.c.b16 %v839, %v835
    %968 = vmatprep.subr.bf16.mxu0 %v841
    %969 = vmatpush1.bf16.msra.mxu0 %v840
    %970 = vmatprep.subr.bf16.mxu0 %v845
    %971 = vmatpush1.bf16.msra.mxu0 %v844
    %972 = vmatprep.subr.bf16.mxu0 %v849
    %973 = vmatpush1.bf16.msra.mxu0 %v848
    %974 = vmatprep.subr.bf16.mxu0 %v853
    %975 = vmatpush1.bf16.msra.mxu0 %v852
    %976 = vmatprep.subr.bf16.mxu0 %v857
    %977 = vmatpush1.bf16.msra.mxu0 %v856
    %978 = vmatprep.subr.bf16.mxu0 %v861
    %979 = vmatpush1.bf16.msra.mxu0 %v860
    %980 = vmatprep.subr.bf16.mxu0 %v865
    %981 = vmatpush1.bf16.msra.mxu0 %v864
    %982 = vmatprep.subr.bf16.mxu0 %v869
    %983 = vmatpush1.bf16.msra.mxu0 %v868
    %984 = vmatprep.subr.bf16.mxu0 %v873
    %985 = vmatpush1.bf16.msra.mxu0 %v872
    %986 = vmatprep.subr.bf16.mxu0 %v877
    %987 = vmatpush1.bf16.msra.mxu0 %v876
    %988 = vmatprep.subr.bf16.mxu0 %v881
    %989 = vmatpush1.bf16.msra.mxu0 %v880
    %990 = vmatprep.subr.bf16.mxu0 %v885
    %991 = vmatpush1.bf16.msra.mxu0 %v884
    %992 = vmatprep.subr.bf16.mxu0 %v889
    %993 = vmatpush1.bf16.msra.mxu0 %v888
    %994 = vmatprep.subr.bf16.mxu0 %v893
    %995 = vmatpush1.bf16.msra.mxu0 %v892
    %996 = vmatprep.subr.bf16.mxu0 %v897
    %997 = vmatpush1.bf16.msra.mxu0 %v896
    %998 = vmatprep.subr.bf16.mxu0 %v901
    %999 = vmatpush1.bf16.msra.mxu0 %v900
    %1000 = vmatprep.mubr.bf16.mxu0 %v583
    %1001 = vmatmul.mubr.bf16.gmra.mrb[0].mxu0 %v582
    %v1002 = vpop.f32.mrb[0].mxu0
    %v1003 = vadd.f32 0.0, %v1002
    %v1004 = vpop.f32.mrb[0].mxu0
    %v1005 = vadd.f32 0.0, %v1004
    %v1006 = vpop.f32.mrb[0].mxu0
    %v1007 = vpop.f32.mrb[0].mxu0
    %1008 = vdwg.mxu0
    %1009 = vmatprep.subr.bf16.mxu0 %v843
    %1010 = vmatpush1.bf16.msra.mxu0 %v842
    %1011 = vmatprep.subr.bf16.mxu0 %v847
    %1012 = vmatpush1.bf16.msra.mxu0 %v846
    %1013 = vmatprep.subr.bf16.mxu0 %v851
    %1014 = vmatpush1.bf16.msra.mxu0 %v850
    %1015 = vmatprep.subr.bf16.mxu0 %v855
    %1016 = vmatpush1.bf16.msra.mxu0 %v854
    %1017 = vmatprep.subr.bf16.mxu0 %v859
    %1018 = vmatpush1.bf16.msra.mxu0 %v858
    %1019 = vmatprep.subr.bf16.mxu0 %v863
    %1020 = vmatpush1.bf16.msra.mxu0 %v862
    %1021 = vmatprep.subr.bf16.mxu0 %v867
    %1022 = vmatpush1.bf16.msra.mxu0 %v866
    %1023 = vmatprep.subr.bf16.mxu0 %v871
    %1024 = vmatpush1.bf16.msra.mxu0 %v870
    %1025 = vmatprep.subr.bf16.mxu0 %v875
    %1026 = vmatpush1.bf16.msra.mxu0 %v874
    %1027 = vmatprep.subr.bf16.mxu0 %v879
    %1028 = vmatpush1.bf16.msra.mxu0 %v878
    %1029 = vmatprep.subr.bf16.mxu0 %v883
    %1030 = vmatpush1.bf16.msra.mxu0 %v882
    %1031 = vmatprep.subr.bf16.mxu0 %v887
    %1032 = vmatpush1.bf16.msra.mxu0 %v886
    %1033 = vmatprep.subr.bf16.mxu0 %v891
    %1034 = vmatpush1.bf16.msra.mxu0 %v890
    %1035 = vmatprep.subr.bf16.mxu0 %v895
    %1036 = vmatpush1.bf16.msra.mxu0 %v894
    %1037 = vmatprep.subr.bf16.mxu0 %v899
    %1038 = vmatpush1.bf16.msra.mxu0 %v898
    %1039 = vmatprep.subr.bf16.mxu0 %v903
    %1040 = vmatpush1.bf16.msra.mxu0 %v902
    %1041 = vmatprep.mubr.bf16.mxu0 %v583
    %1042 = vmatmul.mubr.bf16.gmra.mrb[0].mxu0 %v582
    %v1043 = vpop.f32.mrb[0].mxu0
    %v1044 = vadd.f32 0.0, %v1043
    %v1045 = vpop.f32.mrb[0].mxu0
    %v1046 = vadd.f32 0.0, %v1045
    %v1047 = vpop.f32.mrb[0].mxu0
    %v1048 = vpop.f32.mrb[0].mxu0
    %1049 = vdwg.mxu0
    %v1050 = vrot.slane %v1003, 4
    %v1051 = vadd.f32 %v1003, %v1050
    %v1052 = vrot.slane %v1051, 2
    %v1053 = vadd.f32 %v1051, %v1052
    %v1054 = vrot.slane %v1053, 1
    %v1055 = vadd.f32 %v1053, %v1054
    %v1056 = vrot.slane %v1005, 4
    %v1057 = vadd.f32 %v1005, %v1056
    %v1058 = vrot.slane %v1057, 2
    %v1059 = vadd.f32 %v1057, %v1058
    %v1060 = vrot.slane %v1059, 1
    %v1061 = vadd.f32 %v1059, %v1060
    %v1062 = vrot.slane %v1044, 4
    %v1063 = vadd.f32 %v1044, %v1062
    %v1064 = vrot.slane %v1063, 2
    %v1065 = vadd.f32 %v1063, %v1064
    %v1066 = vrot.slane %v1065, 1
    %v1067 = vadd.f32 %v1065, %v1066
    %v1068 = vrot.slane %v1046, 4
    %v1069 = vadd.f32 %v1046, %v1068
    %v1070 = vrot.slane %v1069, 2
    %v1071 = vadd.f32 %v1069, %v1070
    %v1072 = vrot.slane %v1071, 1
    %v1073 = vadd.f32 %v1071, %v1072
    %v1074 = vmul.f32 %v1055, %v481
    %v1075 = vmul.f32 %v1061, %v481
    %v1076 = vmul.f32 %v1067, %v481
    %v1077 = vmul.f32 %v1073, %v481
    %v1078 = vmul.f32 %v1003, %v1003
    %v1079 = vmul.f32 %v1005, %v1005
    %v1080 = vmul.f32 %v1044, %v1044
    %v1081 = vmul.f32 %v1046, %v1046
    %v1082 = vrot.slane %v1078, 4
    %v1083 = vadd.f32 %v1078, %v1082
    %v1084 = vrot.slane %v1083, 2
    %v1085 = vadd.f32 %v1083, %v1084
    %v1086 = vrot.slane %v1085, 1
    %v1087 = vadd.f32 %v1085, %v1086
    %v1088 = vrot.slane %v1079, 4
    %v1089 = vadd.f32 %v1079, %v1088
    %v1090 = vrot.slane %v1089, 2
    %v1091 = vadd.f32 %v1089, %v1090
    %v1092 = vrot.slane %v1091, 1
    %v1093 = vadd.f32 %v1091, %v1092
    %v1094 = vrot.slane %v1080, 4
    %v1095 = vadd.f32 %v1080, %v1094
    %v1096 = vrot.slane %v1095, 2
    %v1097 = vadd.f32 %v1095, %v1096
    %v1098 = vrot.slane %v1097, 1
    %v1099 = vadd.f32 %v1097, %v1098
    %v1100 = vrot.slane %v1081, 4
    %v1101 = vadd.f32 %v1081, %v1100
    %v1102 = vrot.slane %v1101, 2
    %v1103 = vadd.f32 %v1101, %v1102
    %v1104 = vrot.slane %v1103, 1
    %v1105 = vadd.f32 %v1103, %v1104
    %v1106 = vmul.f32 %v1087, %v481
    %v1107 = vmul.f32 %v1093, %v481
    %v1108 = vmul.f32 %v1099, %v481
    %v1109 = vmul.f32 %v1105, %v481
    %v1110 = vmul.f32 %v1074, %v1074
    %v1111 = vmul.f32 %v1075, %v1075
    %v1112 = vmul.f32 %v1076, %v1076
    %v1113 = vmul.f32 %v1077, %v1077
    %v1114 = vsub.f32 %v1106, %v1110
    %v1115 = vsub.f32 %v1107, %v1111
    %v1116 = vsub.f32 %v1108, %v1112
    %v1117 = vsub.f32 %v1109, %v1113
    %v1118 = vmax.f32 %v1114, 0.0
    %v1119 = vmax.f32 %v1115, 0.0
    %v1120 = vmax.f32 %v1116, 0.0
    %v1121 = vmax.f32 %v1117, 0.0
    %v1122 = vld [vmem:[#allocation17] sm:$0xf]
    %v1123 = vadd.f32 %v1118, 0.8
    %v1124 = vadd.f32 %v1119, 0.8
    %v1125 = vadd.f32 %v1120, 0.8
    %v1126 = vadd.f32 %v1121, 0.8
    %v1127 = vrsqrt.pop %v1123
    %v1128 = vrsqrt.pop %v1124
    %v1129 = vrsqrt.pop %v1125
    %v1130 = vrsqrt.pop %v1126
    %v1135 = vcombine.low %v1127, %v1128
    %v1136 = vcombine.low %v1129, %v1130
    %v1138 = vunpack.c.l.s4 1966171168
    %v1139 = vunpack.c.0.s8 %v1138
    %v1140 = vlaneseq
    %v1141 = vshrl.u32 %v1140, 7
    %v1142 = vsub.s32 %v1139, %v1141
    %v1143 = vrot.slane %v1135, %v1142
    %v1145 = vunpack.c.l.s4 1966171168
    %v1146 = vunpack.c.0.s8 %v1145
    %v1147 = vlaneseq
    %v1148 = vshrl.u32 %v1147, 7
    %v1149 = vsub.s32 %v1146, %v1148
    %v1150 = vrot.slane %v1136, %v1149
    %v1151 = vcombine.low %v1143, %v1150
    %v1153 = vunpack.c.l.s4 1966171168
    %v1154 = vunpack.c.0.s8 %v1153
    %v1155 = vlaneseq
    %v1156 = vshrl.u32 %v1155, 7
    %v1157 = vsub.s32 %v1154, %v1156
    %v1158 = vrot.slane %v1151, %v1157
    %v1160 = vmul.f32 %v1122, %v1158
    %v1161 = vld [vmem:[#allocation19] sm:$0xf]
    %v1163 = vlaneseq
    %v1164 = vshrl.u32 %v1163, 7
    %v1165 = vsub.s32 0, %v1164
    %v1166 = vrot.slane %v1160, %v1165
    %v1167 = vlaneseq
    %v1168 = vshrl.u32 %v1167, 7
    %v1169 = vsub.s32 1, %v1168
    %v1170 = vrot.slane %v1160, %v1169
    %v1171 = vlaneseq
    %v1172 = vshrl.u32 %v1171, 7
    %v1173 = vsub.s32 2, %v1172
    %v1174 = vrot.slane %v1160, %v1173
    %v1175 = vlaneseq
    %v1176 = vshrl.u32 %v1175, 7
    %v1177 = vsub.s32 3, %v1176
    %v1178 = vrot.slane %v1160, %v1177
    %v1183 = vmul.f32 %v1074, %v1166
    %v1184 = vmul.f32 %v1075, %v1170
    %v1185 = vmul.f32 %v1076, %v1174
    %v1186 = vmul.f32 %v1077, %v1178
    %v1191 = vcombine.low %v1183, %v1184
    %v1192 = vcombine.low %v1185, %v1186
    %v1194 = vunpack.c.l.s4 1966171168
    %v1195 = vunpack.c.0.s8 %v1194
    %v1196 = vlaneseq
    %v1197 = vshrl.u32 %v1196, 7
    %v1198 = vsub.s32 %v1195, %v1197
    %v1199 = vrot.slane %v1191, %v1198
    %v1201 = vunpack.c.l.s4 1966171168
    %v1202 = vunpack.c.0.s8 %v1201
    %v1203 = vlaneseq
    %v1204 = vshrl.u32 %v1203, 7
    %v1205 = vsub.s32 %v1202, %v1204
    %v1206 = vrot.slane %v1192, %v1205
    %v1207 = vcombine.low %v1199, %v1206
    %v1209 = vunpack.c.l.s4 1966171168
    %v1210 = vunpack.c.0.s8 %v1209
    %v1211 = vlaneseq
    %v1212 = vshrl.u32 %v1211, 7
    %v1213 = vsub.s32 %v1210, %v1212
    %v1214 = vrot.slane %v1207, %v1213
    %v1216 = vsub.f32 %v1161, %v1214
    %v1217 = vmul.f32 %v1003, %v1166
    %v1218 = vmul.f32 %v1005, %v1170
    %v1219 = vmul.f32 %v1044, %v1174
    %v1220 = vmul.f32 %v1046, %v1178
    %v1222 = vlaneseq
    %v1223 = vshrl.u32 %v1222, 7
    %v1224 = vsub.s32 0, %v1223
    %v1225 = vrot.slane %v1216, %v1224
    %v1226 = vlaneseq
    %v1227 = vshrl.u32 %v1226, 7
    %v1228 = vsub.s32 1, %v1227
    %v1229 = vrot.slane %v1216, %v1228
    %v1230 = vlaneseq
    %v1231 = vshrl.u32 %v1230, 7
    %v1232 = vsub.s32 2, %v1231
    %v1233 = vrot.slane %v1216, %v1232
    %v1234 = vlaneseq
    %v1235 = vshrl.u32 %v1234, 7
    %v1236 = vsub.s32 3, %v1235
    %v1237 = vrot.slane %v1216, %v1236
    %v1242 = vadd.f32 %v1217, %v1225
    %v1243 = vadd.f32 %v1218, %v1229
    %v1244 = vadd.f32 %v1219, %v1233
    %v1245 = vadd.f32 %v1220, %v1237
    %v1246 = vmul.f32 %v1242, 0.2
    %v1247 = vmul.f32 %v1243, 0.2
    %v1248 = vmul.f32 %v1244, 0.2
    %v1249 = vmul.f32 %v1245, 0.2
    %v1250 = vmax.f32 %v1242, %v1246
    %v1251 = vmax.f32 %v1243, %v1247
    %v1252 = vmax.f32 %v1244, %v1248
    %v1253 = vmax.f32 %v1245, %v1249
    %v1254 = vpack.c.bf16 %v1250, %v1250
    %v1255 = vpack.c.bf16 %v1251, %v1251
    %v1256 = vpack.c.bf16 %v1252, %v1252
    %v1257 = vpack.c.bf16 %v1253, %v1253
    %s1258 = smul.u32 4, 64
    %s1259 = smul.u32 %s1258, 8
    %s1260 = sshll.u32 %s1259, 4
    %1261 = dma.done [#allocation4], %s1260
    %v1262 = vld [vmem:[#allocation2] sm:$0xff]
    %v1263 = vld [vmem:[#allocation2 + $0x8] sm:$0xff]
    %v1264 = vld [vmem:[#allocation2 + $0x10] sm:$0xff]
    %v1265 = vld [vmem:[#allocation2 + $0x18] sm:$0xff]
    %v1266 = vld [vmem:[#allocation2 + $0x20] sm:$0xff]
    %v1267 = vld [vmem:[#allocation2 + $0x28] sm:$0xff]
    %v1268 = vld [vmem:[#allocation2 + $0x30] sm:$0xff]
    %v1269 = vld [vmem:[#allocation2 + $0x38] sm:$0xff]
    %v1270 = vld [vmem:[#allocation2 + $0x40] sm:$0xff]
    %v1271 = vld [vmem:[#allocation2 + $0x48] sm:$0xff]
    %v1272 = vld [vmem:[#allocation2 + $0x50] sm:$0xff]
    %v1273 = vld [vmem:[#allocation2 + $0x58] sm:$0xff]
    %v1274 = vld [vmem:[#allocation2 + $0x60] sm:$0xff]
    %v1275 = vld [vmem:[#allocation2 + $0x68] sm:$0xff]
    %v1276 = vld [vmem:[#allocation2 + $0x70] sm:$0xff]
    %v1277 = vld [vmem:[#allocation2 + $0x78] sm:$0xff]
    %v1278 = vld [vmem:[#allocation2 + $0x80] sm:$0xff]
    %v1279 = vld [vmem:[#allocation2 + $0x88] sm:$0xff]
    %v1280 = vld [vmem:[#allocation2 + $0x90] sm:$0xff]
    %v1281 = vld [vmem:[#allocation2 + $0x98] sm:$0xff]
    %v1282 = vld [vmem:[#allocation2 + $0xa0] sm:$0xff]
    %v1283 = vld [vmem:[#allocation2 + $0xa8] sm:$0xff]
    %v1284 = vld [vmem:[#allocation2 + $0xb0] sm:$0xff]
    %v1285 = vld [vmem:[#allocation2 + $0xb8] sm:$0xff]
    %v1286 = vld [vmem:[#allocation2 + $0xc0] sm:$0xff]
    %v1287 = vld [vmem:[#allocation2 + $0xc8] sm:$0xff]
    %v1288 = vld [vmem:[#allocation2 + $0xd0] sm:$0xff]
    %v1289 = vld [vmem:[#allocation2 + $0xd8] sm:$0xff]
    %v1290 = vld [vmem:[#allocation2 + $0xe0] sm:$0xff]
    %v1291 = vld [vmem:[#allocation2 + $0xe8] sm:$0xff]
    %v1292 = vld [vmem:[#allocation2 + $0xf0] sm:$0xff]
    %v1293 = vld [vmem:[#allocation2 + $0xf8] sm:$0xff]
    %v1294 = vld [vmem:[#allocation2 + $0x100] sm:$0xff]
    %v1295 = vld [vmem:[#allocation2 + $0x108] sm:$0xff]
    %v1296 = vld [vmem:[#allocation2 + $0x110] sm:$0xff]
    %v1297 = vld [vmem:[#allocation2 + $0x118] sm:$0xff]
    %v1298 = vld [vmem:[#allocation2 + $0x120] sm:$0xff]
    %v1299 = vld [vmem:[#allocation2 + $0x128] sm:$0xff]
    %v1300 = vld [vmem:[#allocation2 + $0x130] sm:$0xff]
    %v1301 = vld [vmem:[#allocation2 + $0x138] sm:$0xff]
    %v1302 = vld [vmem:[#allocation2 + $0x140] sm:$0xff]
    %v1303 = vld [vmem:[#allocation2 + $0x148] sm:$0xff]
    %v1304 = vld [vmem:[#allocation2 + $0x150] sm:$0xff]
    %v1305 = vld [vmem:[#allocation2 + $0x158] sm:$0xff]
    %v1306 = vld [vmem:[#allocation2 + $0x160] sm:$0xff]
    %v1307 = vld [vmem:[#allocation2 + $0x168] sm:$0xff]
    %v1308 = vld [vmem:[#allocation2 + $0x170] sm:$0xff]
    %v1309 = vld [vmem:[#allocation2 + $0x178] sm:$0xff]
    %v1310 = vld [vmem:[#allocation2 + $0x180] sm:$0xff]
    %v1311 = vld [vmem:[#allocation2 + $0x188] sm:$0xff]
    %v1312 = vld [vmem:[#allocation2 + $0x190] sm:$0xff]
    %v1313 = vld [vmem:[#allocation2 + $0x198] sm:$0xff]
    %v1314 = vld [vmem:[#allocation2 + $0x1a0] sm:$0xff]
    %v1315 = vld [vmem:[#allocation2 + $0x1a8] sm:$0xff]
    %v1316 = vld [vmem:[#allocation2 + $0x1b0] sm:$0xff]
    %v1317 = vld [vmem:[#allocation2 + $0x1b8] sm:$0xff]
    %v1318 = vld [vmem:[#allocation2 + $0x1c0] sm:$0xff]
    %v1319 = vld [vmem:[#allocation2 + $0x1c8] sm:$0xff]
    %v1320 = vld [vmem:[#allocation2 + $0x1d0] sm:$0xff]
    %v1321 = vld [vmem:[#allocation2 + $0x1d8] sm:$0xff]
    %v1322 = vld [vmem:[#allocation2 + $0x1e0] sm:$0xff]
    %v1323 = vld [vmem:[#allocation2 + $0x1e8] sm:$0xff]
    %v1324 = vld [vmem:[#allocation2 + $0x1f0] sm:$0xff]
    %v1325 = vld [vmem:[#allocation2 + $0x1f8] sm:$0xff]
    %v1326 = vld [vmem:[#allocation2 + $0x200] sm:$0xff]
    %v1327 = vld [vmem:[#allocation2 + $0x208] sm:$0xff]
    %v1328 = vld [vmem:[#allocation2 + $0x210] sm:$0xff]
    %v1329 = vld [vmem:[#allocation2 + $0x218] sm:$0xff]
    %v1330 = vld [vmem:[#allocation2 + $0x220] sm:$0xff]
    %v1331 = vld [vmem:[#allocation2 + $0x228] sm:$0xff]
    %v1332 = vld [vmem:[#allocation2 + $0x230] sm:$0xff]
    %v1333 = vld [vmem:[#allocation2 + $0x238] sm:$0xff]
    %v1334 = vld [vmem:[#allocation2 + $0x240] sm:$0xff]
    %v1335 = vld [vmem:[#allocation2 + $0x248] sm:$0xff]
    %v1336 = vld [vmem:[#allocation2 + $0x250] sm:$0xff]
    %v1337 = vld [vmem:[#allocation2 + $0x258] sm:$0xff]
    %v1338 = vld [vmem:[#allocation2 + $0x260] sm:$0xff]
    %v1339 = vld [vmem:[#allocation2 + $0x268] sm:$0xff]
    %v1340 = vld [vmem:[#allocation2 + $0x270] sm:$0xff]
    %v1341 = vld [vmem:[#allocation2 + $0x278] sm:$0xff]
    %v1342 = vld [vmem:[#allocation2 + $0x280] sm:$0xff]
    %v1343 = vld [vmem:[#allocation2 + $0x288] sm:$0xff]
    %v1344 = vld [vmem:[#allocation2 + $0x290] sm:$0xff]
    %v1345 = vld [vmem:[#allocation2 + $0x298] sm:$0xff]
    %v1346 = vld [vmem:[#allocation2 + $0x2a0] sm:$0xff]
    %v1347 = vld [vmem:[#allocation2 + $0x2a8] sm:$0xff]
    %v1348 = vld [vmem:[#allocation2 + $0x2b0] sm:$0xff]
    %v1349 = vld [vmem:[#allocation2 + $0x2b8] sm:$0xff]
    %v1350 = vld [vmem:[#allocation2 + $0x2c0] sm:$0xff]
    %v1351 = vld [vmem:[#allocation2 + $0x2c8] sm:$0xff]
    %v1352 = vld [vmem:[#allocation2 + $0x2d0] sm:$0xff]
    %v1353 = vld [vmem:[#allocation2 + $0x2d8] sm:$0xff]
    %v1354 = vld [vmem:[#allocation2 + $0x2e0] sm:$0xff]
    %v1355 = vld [vmem:[#allocation2 + $0x2e8] sm:$0xff]
    %v1356 = vld [vmem:[#allocation2 + $0x2f0] sm:$0xff]
    %v1357 = vld [vmem:[#allocation2 + $0x2f8] sm:$0xff]
    %v1358 = vld [vmem:[#allocation2 + $0x300] sm:$0xff]
    %v1359 = vld [vmem:[#allocation2 + $0x308] sm:$0xff]
    %v1360 = vld [vmem:[#allocation2 + $0x310] sm:$0xff]
    %v1361 = vld [vmem:[#allocation2 + $0x318] sm:$0xff]
    %v1362 = vld [vmem:[#allocation2 + $0x320] sm:$0xff]
    %v1363 = vld [vmem:[#allocation2 + $0x328] sm:$0xff]
    %v1364 = vld [vmem:[#allocation2 + $0x330] sm:$0xff]
    %v1365 = vld [vmem:[#allocation2 + $0x338] sm:$0xff]
    %v1366 = vld [vmem:[#allocation2 + $0x340] sm:$0xff]
    %v1367 = vld [vmem:[#allocation2 + $0x348] sm:$0xff]
    %v1368 = vld [vmem:[#allocation2 + $0x350] sm:$0xff]
    %v1369 = vld [vmem:[#allocation2 + $0x358] sm:$0xff]
    %v1370 = vld [vmem:[#allocation2 + $0x360] sm:$0xff]
    %v1371 = vld [vmem:[#allocation2 + $0x368] sm:$0xff]
    %v1372 = vld [vmem:[#allocation2 + $0x370] sm:$0xff]
    %v1373 = vld [vmem:[#allocation2 + $0x378] sm:$0xff]
    %v1374 = vld [vmem:[#allocation2 + $0x380] sm:$0xff]
    %v1375 = vld [vmem:[#allocation2 + $0x388] sm:$0xff]
    %v1376 = vld [vmem:[#allocation2 + $0x390] sm:$0xff]
    %v1377 = vld [vmem:[#allocation2 + $0x398] sm:$0xff]
    %v1378 = vld [vmem:[#allocation2 + $0x3a0] sm:$0xff]
    %v1379 = vld [vmem:[#allocation2 + $0x3a8] sm:$0xff]
    %v1380 = vld [vmem:[#allocation2 + $0x3b0] sm:$0xff]
    %v1381 = vld [vmem:[#allocation2 + $0x3b8] sm:$0xff]
    %v1382 = vld [vmem:[#allocation2 + $0x3c0] sm:$0xff]
    %v1383 = vld [vmem:[#allocation2 + $0x3c8] sm:$0xff]
    %v1384 = vld [vmem:[#allocation2 + $0x3d0] sm:$0xff]
    %v1385 = vld [vmem:[#allocation2 + $0x3d8] sm:$0xff]
    %v1386 = vld [vmem:[#allocation2 + $0x3e0] sm:$0xff]
    %v1387 = vld [vmem:[#allocation2 + $0x3e8] sm:$0xff]
    %v1388 = vld [vmem:[#allocation2 + $0x3f0] sm:$0xff]
    %v1389 = vld [vmem:[#allocation2 + $0x3f8] sm:$0xff]
    %v1390 = vld [vmem:[#allocation2 + $0x400] sm:$0xff]
    %v1391 = vld [vmem:[#allocation2 + $0x408] sm:$0xff]
    %v1392 = vld [vmem:[#allocation2 + $0x410] sm:$0xff]
    %v1393 = vld [vmem:[#allocation2 + $0x418] sm:$0xff]
    %v1394 = vld [vmem:[#allocation2 + $0x420] sm:$0xff]
    %v1395 = vld [vmem:[#allocation2 + $0x428] sm:$0xff]
    %v1396 = vld [vmem:[#allocation2 + $0x430] sm:$0xff]
    %v1397 = vld [vmem:[#allocation2 + $0x438] sm:$0xff]
    %v1398 = vld [vmem:[#allocation2 + $0x440] sm:$0xff]
    %v1399 = vld [vmem:[#allocation2 + $0x448] sm:$0xff]
    %v1400 = vld [vmem:[#allocation2 + $0x450] sm:$0xff]
    %v1401 = vld [vmem:[#allocation2 + $0x458] sm:$0xff]
    %v1402 = vld [vmem:[#allocation2 + $0x460] sm:$0xff]
    %v1403 = vld [vmem:[#allocation2 + $0x468] sm:$0xff]
    %v1404 = vld [vmem:[#allocation2 + $0x470] sm:$0xff]
    %v1405 = vld [vmem:[#allocation2 + $0x478] sm:$0xff]
    %v1406 = vld [vmem:[#allocation2 + $0x480] sm:$0xff]
    %v1407 = vld [vmem:[#allocation2 + $0x488] sm:$0xff]
    %v1408 = vld [vmem:[#allocation2 + $0x490] sm:$0xff]
    %v1409 = vld [vmem:[#allocation2 + $0x498] sm:$0xff]
    %v1410 = vld [vmem:[#allocation2 + $0x4a0] sm:$0xff]
    %v1411 = vld [vmem:[#allocation2 + $0x4a8] sm:$0xff]
    %v1412 = vld [vmem:[#allocation2 + $0x4b0] sm:$0xff]
    %v1413 = vld [vmem:[#allocation2 + $0x4b8] sm:$0xff]
    %v1414 = vld [vmem:[#allocation2 + $0x4c0] sm:$0xff]
    %v1415 = vld [vmem:[#allocation2 + $0x4c8] sm:$0xff]
    %v1416 = vld [vmem:[#allocation2 + $0x4d0] sm:$0xff]
    %v1417 = vld [vmem:[#allocation2 + $0x4d8] sm:$0xff]
    %v1418 = vld [vmem:[#allocation2 + $0x4e0] sm:$0xff]
    %v1419 = vld [vmem:[#allocation2 + $0x4e8] sm:$0xff]
    %v1420 = vld [vmem:[#allocation2 + $0x4f0] sm:$0xff]
    %v1421 = vld [vmem:[#allocation2 + $0x4f8] sm:$0xff]
    %v1422 = vld [vmem:[#allocation2 + $0x500] sm:$0xff]
    %v1423 = vld [vmem:[#allocation2 + $0x508] sm:$0xff]
    %v1424 = vld [vmem:[#allocation2 + $0x510] sm:$0xff]
    %v1425 = vld [vmem:[#allocation2 + $0x518] sm:$0xff]
    %v1426 = vld [vmem:[#allocation2 + $0x520] sm:$0xff]
    %v1427 = vld [vmem:[#allocation2 + $0x528] sm:$0xff]
    %v1428 = vld [vmem:[#allocation2 + $0x530] sm:$0xff]
    %v1429 = vld [vmem:[#allocation2 + $0x538] sm:$0xff]
    %v1430 = vld [vmem:[#allocation2 + $0x540] sm:$0xff]
    %v1431 = vld [vmem:[#allocation2 + $0x548] sm:$0xff]
    %v1432 = vld [vmem:[#allocation2 + $0x550] sm:$0xff]
    %v1433 = vld [vmem:[#allocation2 + $0x558] sm:$0xff]
    %v1434 = vld [vmem:[#allocation2 + $0x560] sm:$0xff]
    %v1435 = vld [vmem:[#allocation2 + $0x568] sm:$0xff]
    %v1436 = vld [vmem:[#allocation2 + $0x570] sm:$0xff]
    %v1437 = vld [vmem:[#allocation2 + $0x578] sm:$0xff]
    %v1438 = vld [vmem:[#allocation2 + $0x580] sm:$0xff]
    %v1439 = vld [vmem:[#allocation2 + $0x588] sm:$0xff]
    %v1440 = vld [vmem:[#allocation2 + $0x590] sm:$0xff]
    %v1441 = vld [vmem:[#allocation2 + $0x598] sm:$0xff]
    %v1442 = vld [vmem:[#allocation2 + $0x5a0] sm:$0xff]
    %v1443 = vld [vmem:[#allocation2 + $0x5a8] sm:$0xff]
    %v1444 = vld [vmem:[#allocation2 + $0x5b0] sm:$0xff]
    %v1445 = vld [vmem:[#allocation2 + $0x5b8] sm:$0xff]
    %v1446 = vld [vmem:[#allocation2 + $0x5c0] sm:$0xff]
    %v1447 = vld [vmem:[#allocation2 + $0x5c8] sm:$0xff]
    %v1448 = vld [vmem:[#allocation2 + $0x5d0] sm:$0xff]
    %v1449 = vld [vmem:[#allocation2 + $0x5d8] sm:$0xff]
    %v1450 = vld [vmem:[#allocation2 + $0x5e0] sm:$0xff]
    %v1451 = vld [vmem:[#allocation2 + $0x5e8] sm:$0xff]
    %v1452 = vld [vmem:[#allocation2 + $0x5f0] sm:$0xff]
    %v1453 = vld [vmem:[#allocation2 + $0x5f8] sm:$0xff]
    %v1454 = vld [vmem:[#allocation2 + $0x600] sm:$0xff]
    %v1455 = vld [vmem:[#allocation2 + $0x608] sm:$0xff]
    %v1456 = vld [vmem:[#allocation2 + $0x610] sm:$0xff]
    %v1457 = vld [vmem:[#allocation2 + $0x618] sm:$0xff]
    %v1458 = vld [vmem:[#allocation2 + $0x620] sm:$0xff]
    %v1459 = vld [vmem:[#allocation2 + $0x628] sm:$0xff]
    %v1460 = vld [vmem:[#allocation2 + $0x630] sm:$0xff]
    %v1461 = vld [vmem:[#allocation2 + $0x638] sm:$0xff]
    %v1462 = vld [vmem:[#allocation2 + $0x640] sm:$0xff]
    %v1463 = vld [vmem:[#allocation2 + $0x648] sm:$0xff]
    %v1464 = vld [vmem:[#allocation2 + $0x650] sm:$0xff]
    %v1465 = vld [vmem:[#allocation2 + $0x658] sm:$0xff]
    %v1466 = vld [vmem:[#allocation2 + $0x660] sm:$0xff]
    %v1467 = vld [vmem:[#allocation2 + $0x668] sm:$0xff]
    %v1468 = vld [vmem:[#allocation2 + $0x670] sm:$0xff]
    %v1469 = vld [vmem:[#allocation2 + $0x678] sm:$0xff]
    %v1470 = vld [vmem:[#allocation2 + $0x680] sm:$0xff]
    %v1471 = vld [vmem:[#allocation2 + $0x688] sm:$0xff]
    %v1472 = vld [vmem:[#allocation2 + $0x690] sm:$0xff]
    %v1473 = vld [vmem:[#allocation2 + $0x698] sm:$0xff]
    %v1474 = vld [vmem:[#allocation2 + $0x6a0] sm:$0xff]
    %v1475 = vld [vmem:[#allocation2 + $0x6a8] sm:$0xff]
    %v1476 = vld [vmem:[#allocation2 + $0x6b0] sm:$0xff]
    %v1477 = vld [vmem:[#allocation2 + $0x6b8] sm:$0xff]
    %v1478 = vld [vmem:[#allocation2 + $0x6c0] sm:$0xff]
    %v1479 = vld [vmem:[#allocation2 + $0x6c8] sm:$0xff]
    %v1480 = vld [vmem:[#allocation2 + $0x6d0] sm:$0xff]
    %v1481 = vld [vmem:[#allocation2 + $0x6d8] sm:$0xff]
    %v1482 = vld [vmem:[#allocation2 + $0x6e0] sm:$0xff]
    %v1483 = vld [vmem:[#allocation2 + $0x6e8] sm:$0xff]
    %v1484 = vld [vmem:[#allocation2 + $0x6f0] sm:$0xff]
    %v1485 = vld [vmem:[#allocation2 + $0x6f8] sm:$0xff]
    %v1486 = vld [vmem:[#allocation2 + $0x700] sm:$0xff]
    %v1487 = vld [vmem:[#allocation2 + $0x708] sm:$0xff]
    %v1488 = vld [vmem:[#allocation2 + $0x710] sm:$0xff]
    %v1489 = vld [vmem:[#allocation2 + $0x718] sm:$0xff]
    %v1490 = vld [vmem:[#allocation2 + $0x720] sm:$0xff]
    %v1491 = vld [vmem:[#allocation2 + $0x728] sm:$0xff]
    %v1492 = vld [vmem:[#allocation2 + $0x730] sm:$0xff]
    %v1493 = vld [vmem:[#allocation2 + $0x738] sm:$0xff]
    %v1494 = vld [vmem:[#allocation2 + $0x740] sm:$0xff]
    %v1495 = vld [vmem:[#allocation2 + $0x748] sm:$0xff]
    %v1496 = vld [vmem:[#allocation2 + $0x750] sm:$0xff]
    %v1497 = vld [vmem:[#allocation2 + $0x758] sm:$0xff]
    %v1498 = vld [vmem:[#allocation2 + $0x760] sm:$0xff]
    %v1499 = vld [vmem:[#allocation2 + $0x768] sm:$0xff]
    %v1500 = vld [vmem:[#allocation2 + $0x770] sm:$0xff]
    %v1501 = vld [vmem:[#allocation2 + $0x778] sm:$0xff]
    %v1502 = vld [vmem:[#allocation2 + $0x780] sm:$0xff]
    %v1503 = vld [vmem:[#allocation2 + $0x788] sm:$0xff]
    %v1504 = vld [vmem:[#allocation2 + $0x790] sm:$0xff]
    %v1505 = vld [vmem:[#allocation2 + $0x798] sm:$0xff]
    %v1506 = vld [vmem:[#allocation2 + $0x7a0] sm:$0xff]
    %v1507 = vld [vmem:[#allocation2 + $0x7a8] sm:$0xff]
    %v1508 = vld [vmem:[#allocation2 + $0x7b0] sm:$0xff]
    %v1509 = vld [vmem:[#allocation2 + $0x7b8] sm:$0xff]
    %v1510 = vld [vmem:[#allocation2 + $0x7c0] sm:$0xff]
    %v1511 = vld [vmem:[#allocation2 + $0x7c8] sm:$0xff]
    %v1512 = vld [vmem:[#allocation2 + $0x7d0] sm:$0xff]
    %v1513 = vld [vmem:[#allocation2 + $0x7d8] sm:$0xff]
    %v1514 = vld [vmem:[#allocation2 + $0x7e0] sm:$0xff]
    %v1515 = vld [vmem:[#allocation2 + $0x7e8] sm:$0xff]
    %v1516 = vld [vmem:[#allocation2 + $0x7f0] sm:$0xff]
    %v1517 = vld [vmem:[#allocation2 + $0x7f8] sm:$0xff]
    %1518 = vmatprep.subr.bf16.mxu0 %v1263
    %1519 = vmatpush1.bf16.msra.mxu0 %v1262
    %1520 = vmatprep.subr.bf16.mxu0 %v1271
    %1521 = vmatpush1.bf16.msra.mxu0 %v1270
    %1522 = vmatprep.subr.bf16.mxu0 %v1279
    %1523 = vmatpush1.bf16.msra.mxu0 %v1278
    %1524 = vmatprep.subr.bf16.mxu0 %v1287
    %1525 = vmatpush1.bf16.msra.mxu0 %v1286
    %1526 = vmatprep.subr.bf16.mxu0 %v1295
    %1527 = vmatpush1.bf16.msra.mxu0 %v1294
    %1528 = vmatprep.subr.bf16.mxu0 %v1303
    %1529 = vmatpush1.bf16.msra.mxu0 %v1302
    %1530 = vmatprep.subr.bf16.mxu0 %v1311
    %1531 = vmatpush1.bf16.msra.mxu0 %v1310
    %1532 = vmatprep.subr.bf16.mxu0 %v1319
    %1533 = vmatpush1.bf16.msra.mxu0 %v1318
    %1534 = vmatprep.subr.bf16.mxu0 %v1327
    %1535 = vmatpush1.bf16.msra.mxu0 %v1326
    %1536 = vmatprep.subr.bf16.mxu0 %v1335
    %1537 = vmatpush1.bf16.msra.mxu0 %v1334
    %1538 = vmatprep.subr.bf16.mxu0 %v1343
    %1539 = vmatpush1.bf16.msra.mxu0 %v1342
    %1540 = vmatprep.subr.bf16.mxu0 %v1351
    %1541 = vmatpush1.bf16.msra.mxu0 %v1350
    %1542 = vmatprep.subr.bf16.mxu0 %v1359
    %1543 = vmatpush1.bf16.msra.mxu0 %v1358
    %1544 = vmatprep.subr.bf16.mxu0 %v1367
    %1545 = vmatpush1.bf16.msra.mxu0 %v1366
    %1546 = vmatprep.subr.bf16.mxu0 %v1375
    %1547 = vmatpush1.bf16.msra.mxu0 %v1374
    %1548 = vmatprep.subr.bf16.mxu0 %v1383
    %1549 = vmatpush1.bf16.msra.mxu0 %v1382
    %1550 = vmatprep.mubr.bf16.mxu0 %v1255
    %1551 = vmatmul.mubr.bf16.gmra.mrb[0].mxu0 %v1254
    %v1552 = vpop.f32.mrb[0].mxu0
    %v1553 = vadd.f32 0.0, %v1552
    %v1554 = vpop.f32.mrb[0].mxu0
    %v1555 = vadd.f32 0.0, %v1554
    %v1556 = vpop.f32.mrb[0].mxu0
    %v1557 = vpop.f32.mrb[0].mxu0
    %1558 = vdwg.mxu0
    %1559 = vmatprep.subr.bf16.mxu0 %v1391
    %1560 = vmatpush1.bf16.msra.mxu0 %v1390
    %1561 = vmatprep.subr.bf16.mxu0 %v1399
    %1562 = vmatpush1.bf16.msra.mxu0 %v1398
    %1563 = vmatprep.subr.bf16.mxu0 %v1407
    %1564 = vmatpush1.bf16.msra.mxu0 %v1406
    %1565 = vmatprep.subr.bf16.mxu0 %v1415
    %1566 = vmatpush1.bf16.msra.mxu0 %v1414
    %1567 = vmatprep.subr.bf16.mxu0 %v1423
    %1568 = vmatpush1.bf16.msra.mxu0 %v1422
    %1569 = vmatprep.subr.bf16.mxu0 %v1431
    %1570 = vmatpush1.bf16.msra.mxu0 %v1430
    %1571 = vmatprep.subr.bf16.mxu0 %v1439
    %1572 = vmatpush1.bf16.msra.mxu0 %v1438
    %1573 = vmatprep.subr.bf16.mxu0 %v1447
    %1574 = vmatpush1.bf16.msra.mxu0 %v1446
    %1575 = vmatprep.subr.bf16.mxu0 %v1455
    %1576 = vmatpush1.bf16.msra.mxu0 %v1454
    %1577 = vmatprep.subr.bf16.mxu0 %v1463
    %1578 = vmatpush1.bf16.msra.mxu0 %v1462
    %1579 = vmatprep.subr.bf16.mxu0 %v1471
    %1580 = vmatpush1.bf16.msra.mxu0 %v1470
    %1581 = vmatprep.subr.bf16.mxu0 %v1479
    %1582 = vmatpush1.bf16.msra.mxu0 %v1478
    %1583 = vmatprep.subr.bf16.mxu0 %v1487
    %1584 = vmatpush1.bf16.msra.mxu0 %v1486
    %1585 = vmatprep.subr.bf16.mxu0 %v1495
    %1586 = vmatpush1.bf16.msra.mxu0 %v1494
    %1587 = vmatprep.subr.bf16.mxu0 %v1503
    %1588 = vmatpush1.bf16.msra.mxu0 %v1502
    %1589 = vmatprep.subr.bf16.mxu0 %v1511
    %1590 = vmatpush1.bf16.msra.mxu0 %v1510
    %1591 = vmatprep.mubr.bf16.mxu0 %v1257
    %1592 = vmatmul.mubr.bf16.gmra.mrb[0].mxu0 %v1256
    %v1593 = vpop.f32.mrb[0].mxu0
    %v1594 = vadd.f32 %v1553, %v1593
    %v1595 = vpop.f32.mrb[0].mxu0
    %v1596 = vadd.f32 %v1555, %v1595
    %v1597 = vpop.f32.mrb[0].mxu0
    %v1598 = vpop.f32.mrb[0].mxu0
    %1599 = vdwg.mxu0
    %1600 = vmatprep.subr.bf16.mxu0 %v1265
    %1601 = vmatpush1.bf16.msra.mxu0 %v1264
    %1602 = vmatprep.subr.bf16.mxu0 %v1273
    %1603 = vmatpush1.bf16.msra.mxu0 %v1272
    %1604 = vmatprep.subr.bf16.mxu0 %v1281
    %1605 = vmatpush1.bf16.msra.mxu0 %v1280
    %1606 = vmatprep.subr.bf16.mxu0 %v1289
    %1607 = vmatpush1.bf16.msra.mxu0 %v1288
    %1608 = vmatprep.subr.bf16.mxu0 %v1297
    %1609 = vmatpush1.bf16.msra.mxu0 %v1296
    %1610 = vmatprep.subr.bf16.mxu0 %v1305
    %1611 = vmatpush1.bf16.msra.mxu0 %v1304
    %1612 = vmatprep.subr.bf16.mxu0 %v1313
    %1613 = vmatpush1.bf16.msra.mxu0 %v1312
    %1614 = vmatprep.subr.bf16.mxu0 %v1321
    %1615 = vmatpush1.bf16.msra.mxu0 %v1320
    %1616 = vmatprep.subr.bf16.mxu0 %v1329
    %1617 = vmatpush1.bf16.msra.mxu0 %v1328
    %1618 = vmatprep.subr.bf16.mxu0 %v1337
    %1619 = vmatpush1.bf16.msra.mxu0 %v1336
    %1620 = vmatprep.subr.bf16.mxu0 %v1345
    %1621 = vmatpush1.bf16.msra.mxu0 %v1344
    %1622 = vmatprep.subr.bf16.mxu0 %v1353
    %1623 = vmatpush1.bf16.msra.mxu0 %v1352
    %1624 = vmatprep.subr.bf16.mxu0 %v1361
    %1625 = vmatpush1.bf16.msra.mxu0 %v1360
    %1626 = vmatprep.subr.bf16.mxu0 %v1369
    %1627 = vmatpush1.bf16.msra.mxu0 %v1368
    %1628 = vmatprep.subr.bf16.mxu0 %v1377
    %1629 = vmatpush1.bf16.msra.mxu0 %v1376
    %1630 = vmatprep.subr.bf16.mxu0 %v1385
    %1631 = vmatpush1.bf16.msra.mxu0 %v1384
    %1632 = vmatprep.mubr.bf16.mxu0 %v1255
    %1633 = vmatmul.mubr.bf16.gmra.mrb[0].mxu0 %v1254
    %v1634 = vpop.f32.mrb[0].mxu0
    %v1635 = vadd.f32 0.0, %v1634
    %v1636 = vpop.f32.mrb[0].mxu0
    %v1637 = vadd.f32 0.0, %v1636
    %v1638 = vpop.f32.mrb[0].mxu0
    %v1639 = vpop.f32.mrb[0].mxu0
    %1640 = vdwg.mxu0
    %1641 = vmatprep.subr.bf16.mxu0 %v1393
    %1642 = vmatpush1.bf16.msra.mxu0 %v1392
    %1643 = vmatprep.subr.bf16.mxu0 %v1401
    %1644 = vmatpush1.bf16.msra.mxu0 %v1400
    %1645 = vmatprep.subr.bf16.mxu0 %v1409
    %1646 = vmatpush1.bf16.msra.mxu0 %v1408
    %1647 = vmatprep.subr.bf16.mxu0 %v1417
    %1648 = vmatpush1.bf16.msra.mxu0 %v1416
    %1649 = vmatprep.subr.bf16.mxu0 %v1425
    %1650 = vmatpush1.bf16.msra.mxu0 %v1424
    %1651 = vmatprep.subr.bf16.mxu0 %v1433
    %1652 = vmatpush1.bf16.msra.mxu0 %v1432
    %1653 = vmatprep.subr.bf16.mxu0 %v1441
    %1654 = vmatpush1.bf16.msra.mxu0 %v1440
    %1655 = vmatprep.subr.bf16.mxu0 %v1449
    %1656 = vmatpush1.bf16.msra.mxu0 %v1448
    %1657 = vmatprep.subr.bf16.mxu0 %v1457
    %1658 = vmatpush1.bf16.msra.mxu0 %v1456
    %1659 = vmatprep.subr.bf16.mxu0 %v1465
    %1660 = vmatpush1.bf16.msra.mxu0 %v1464
    %1661 = vmatprep.subr.bf16.mxu0 %v1473
    %1662 = vmatpush1.bf16.msra.mxu0 %v1472
    %1663 = vmatprep.subr.bf16.mxu0 %v1481
    %1664 = vmatpush1.bf16.msra.mxu0 %v1480
    %1665 = vmatprep.subr.bf16.mxu0 %v1489
    %1666 = vmatpush1.bf16.msra.mxu0 %v1488
    %1667 = vmatprep.subr.bf16.mxu0 %v1497
    %1668 = vmatpush1.bf16.msra.mxu0 %v1496
    %1669 = vmatprep.subr.bf16.mxu0 %v1505
    %1670 = vmatpush1.bf16.msra.mxu0 %v1504
    %1671 = vmatprep.subr.bf16.mxu0 %v1513
    %1672 = vmatpush1.bf16.msra.mxu0 %v1512
    %1673 = vmatprep.mubr.bf16.mxu0 %v1257
    %1674 = vmatmul.mubr.bf16.gmra.mrb[0].mxu0 %v1256
    %v1675 = vpop.f32.mrb[0].mxu0
    %v1676 = vadd.f32 %v1635, %v1675
    %v1677 = vpop.f32.mrb[0].mxu0
    %v1678 = vadd.f32 %v1637, %v1677
    %v1679 = vpop.f32.mrb[0].mxu0
    %v1680 = vpop.f32.mrb[0].mxu0
    %1681 = vdwg.mxu0
    %1682 = vmatprep.subr.bf16.mxu0 %v1267
    %1683 = vmatpush1.bf16.msra.mxu0 %v1266
    %1684 = vmatprep.subr.bf16.mxu0 %v1275
    %1685 = vmatpush1.bf16.msra.mxu0 %v1274
    %1686 = vmatprep.subr.bf16.mxu0 %v1283
    %1687 = vmatpush1.bf16.msra.mxu0 %v1282
    %1688 = vmatprep.subr.bf16.mxu0 %v1291
    %1689 = vmatpush1.bf16.msra.mxu0 %v1290
    %1690 = vmatprep.subr.bf16.mxu0 %v1299
    %1691 = vmatpush1.bf16.msra.mxu0 %v1298
    %1692 = vmatprep.subr.bf16.mxu0 %v1307
    %1693 = vmatpush1.bf16.msra.mxu0 %v1306
    %1694 = vmatprep.subr.bf16.mxu0 %v1315
    %1695 = vmatpush1.bf16.msra.mxu0 %v1314
    %1696 = vmatprep.subr.bf16.mxu0 %v1323
    %1697 = vmatpush1.bf16.msra.mxu0 %v1322
    %1698 = vmatprep.subr.bf16.mxu0 %v1331
    %1699 = vmatpush1.bf16.msra.mxu0 %v1330
    %1700 = vmatprep.subr.bf16.mxu0 %v1339
    %1701 = vmatpush1.bf16.msra.mxu0 %v1338
    %1702 = vmatprep.subr.bf16.mxu0 %v1347
    %1703 = vmatpush1.bf16.msra.mxu0 %v1346
    %1704 = vmatprep.subr.bf16.mxu0 %v1355
    %1705 = vmatpush1.bf16.msra.mxu0 %v1354
    %1706 = vmatprep.subr.bf16.mxu0 %v1363
    %1707 = vmatpush1.bf16.msra.mxu0 %v1362
    %1708 = vmatprep.subr.bf16.mxu0 %v1371
    %1709 = vmatpush1.bf16.msra.mxu0 %v1370
    %1710 = vmatprep.subr.bf16.mxu0 %v1379
    %1711 = vmatpush1.bf16.msra.mxu0 %v1378
    %1712 = vmatprep.subr.bf16.mxu0 %v1387
    %1713 = vmatpush1.bf16.msra.mxu0 %v1386
    %1714 = vmatprep.mubr.bf16.mxu0 %v1255
    %1715 = vmatmul.mubr.bf16.gmra.mrb[0].mxu0 %v1254
    %v1716 = vpop.f32.mrb[0].mxu0
    %v1717 = vadd.f32 0.0, %v1716
    %v1718 = vpop.f32.mrb[0].mxu0
    %v1719 = vadd.f32 0.0, %v1718
    %v1720 = vpop.f32.mrb[0].mxu0
    %v1721 = vpop.f32.mrb[0].mxu0
    %1722 = vdwg.mxu0
    %1723 = vmatprep.subr.bf16.mxu0 %v1395
    %1724 = vmatpush1.bf16.msra.mxu0 %v1394
    %1725 = vmatprep.subr.bf16.mxu0 %v1403
    %1726 = vmatpush1.bf16.msra.mxu0 %v1402
    %1727 = vmatprep.subr.bf16.mxu0 %v1411
    %1728 = vmatpush1.bf16.msra.mxu0 %v1410
    %1729 = vmatprep.subr.bf16.mxu0 %v1419
    %1730 = vmatpush1.bf16.msra.mxu0 %v1418
    %1731 = vmatprep.subr.bf16.mxu0 %v1427
    %1732 = vmatpush1.bf16.msra.mxu0 %v1426
    %1733 = vmatprep.subr.bf16.mxu0 %v1435
    %1734 = vmatpush1.bf16.msra.mxu0 %v1434
    %1735 = vmatprep.subr.bf16.mxu0 %v1443
    %1736 = vmatpush1.bf16.msra.mxu0 %v1442
    %1737 = vmatprep.subr.bf16.mxu0 %v1451
    %1738 = vmatpush1.bf16.msra.mxu0 %v1450
    %1739 = vmatprep.subr.bf16.mxu0 %v1459
    %1740 = vmatpush1.bf16.msra.mxu0 %v1458
    %1741 = vmatprep.subr.bf16.mxu0 %v1467
    %1742 = vmatpush1.bf16.msra.mxu0 %v1466
    %1743 = vmatprep.subr.bf16.mxu0 %v1475
    %1744 = vmatpush1.bf16.msra.mxu0 %v1474
    %1745 = vmatprep.subr.bf16.mxu0 %v1483
    %1746 = vmatpush1.bf16.msra.mxu0 %v1482
    %1747 = vmatprep.subr.bf16.mxu0 %v1491
    %1748 = vmatpush1.bf16.msra.mxu0 %v1490
    %1749 = vmatprep.subr.bf16.mxu0 %v1499
    %1750 = vmatpush1.bf16.msra.mxu0 %v1498
    %1751 = vmatprep.subr.bf16.mxu0 %v1507
    %1752 = vmatpush1.bf16.msra.mxu0 %v1506
    %1753 = vmatprep.subr.bf16.mxu0 %v1515
    %1754 = vmatpush1.bf16.msra.mxu0 %v1514
    %1755 = vmatprep.mubr.bf16.mxu0 %v1257
    %1756 = vmatmul.mubr.bf16.gmra.mrb[0].mxu0 %v1256
    %v1757 = vpop.f32.mrb[0].mxu0
    %v1758 = vadd.f32 %v1717, %v1757
    %v1759 = vpop.f32.mrb[0].mxu0
    %v1760 = vadd.f32 %v1719, %v1759
    %v1761 = vpop.f32.mrb[0].mxu0
    %v1762 = vpop.f32.mrb[0].mxu0
    %1763 = vdwg.mxu0
    %1764 = vmatprep.subr.bf16.mxu0 %v1269
    %1765 = vmatpush1.bf16.msra.mxu0 %v1268
    %1766 = vmatprep.subr.bf16.mxu0 %v1277
    %1767 = vmatpush1.bf16.msra.mxu0 %v1276
    %1768 = vmatprep.subr.bf16.mxu0 %v1285
    %1769 = vmatpush1.bf16.msra.mxu0 %v1284
    %1770 = vmatprep.subr.bf16.mxu0 %v1293
    %1771 = vmatpush1.bf16.msra.mxu0 %v1292
    %1772 = vmatprep.subr.bf16.mxu0 %v1301
    %1773 = vmatpush1.bf16.msra.mxu0 %v1300
    %1774 = vmatprep.subr.bf16.mxu0 %v1309
    %1775 = vmatpush1.bf16.msra.mxu0 %v1308
    %1776 = vmatprep.subr.bf16.mxu0 %v1317
    %1777 = vmatpush1.bf16.msra.mxu0 %v1316
    %1778 = vmatprep.subr.bf16.mxu0 %v1325
    %1779 = vmatpush1.bf16.msra.mxu0 %v1324
    %1780 = vmatprep.subr.bf16.mxu0 %v1333
    %1781 = vmatpush1.bf16.msra.mxu0 %v1332
    %1782 = vmatprep.subr.bf16.mxu0 %v1341
    %1783 = vmatpush1.bf16.msra.mxu0 %v1340
    %1784 = vmatprep.subr.bf16.mxu0 %v1349
    %1785 = vmatpush1.bf16.msra.mxu0 %v1348
    %1786 = vmatprep.subr.bf16.mxu0 %v1357
    %1787 = vmatpush1.bf16.msra.mxu0 %v1356
    %1788 = vmatprep.subr.bf16.mxu0 %v1365
    %1789 = vmatpush1.bf16.msra.mxu0 %v1364
    %1790 = vmatprep.subr.bf16.mxu0 %v1373
    %1791 = vmatpush1.bf16.msra.mxu0 %v1372
    %1792 = vmatprep.subr.bf16.mxu0 %v1381
    %1793 = vmatpush1.bf16.msra.mxu0 %v1380
    %1794 = vmatprep.subr.bf16.mxu0 %v1389
    %1795 = vmatpush1.bf16.msra.mxu0 %v1388
    %1796 = vmatprep.mubr.bf16.mxu0 %v1255
    %1797 = vmatmul.mubr.bf16.gmra.mrb[0].mxu0 %v1254
    %v1798 = vpop.f32.mrb[0].mxu0
    %v1799 = vadd.f32 0.0, %v1798
    %v1800 = vpop.f32.mrb[0].mxu0
    %v1801 = vadd.f32 0.0, %v1800
    %v1802 = vpop.f32.mrb[0].mxu0
    %v1803 = vpop.f32.mrb[0].mxu0
    %1804 = vdwg.mxu0
    %1805 = vmatprep.subr.bf16.mxu0 %v1397
    %1806 = vmatpush1.bf16.msra.mxu0 %v1396
    %1807 = vmatprep.subr.bf16.mxu0 %v1405
    %1808 = vmatpush1.bf16.msra.mxu0 %v1404
    %1809 = vmatprep.subr.bf16.mxu0 %v1413
    %1810 = vmatpush1.bf16.msra.mxu0 %v1412
    %1811 = vmatprep.subr.bf16.mxu0 %v1421
    %1812 = vmatpush1.bf16.msra.mxu0 %v1420
    %1813 = vmatprep.subr.bf16.mxu0 %v1429
    %1814 = vmatpush1.bf16.msra.mxu0 %v1428
    %1815 = vmatprep.subr.bf16.mxu0 %v1437
    %1816 = vmatpush1.bf16.msra.mxu0 %v1436
    %1817 = vmatprep.subr.bf16.mxu0 %v1445
    %1818 = vmatpush1.bf16.msra.mxu0 %v1444
    %1819 = vmatprep.subr.bf16.mxu0 %v1453
    %1820 = vmatpush1.bf16.msra.mxu0 %v1452
    %1821 = vmatprep.subr.bf16.mxu0 %v1461
    %1822 = vmatpush1.bf16.msra.mxu0 %v1460
    %1823 = vmatprep.subr.bf16.mxu0 %v1469
    %1824 = vmatpush1.bf16.msra.mxu0 %v1468
    %1825 = vmatprep.subr.bf16.mxu0 %v1477
    %1826 = vmatpush1.bf16.msra.mxu0 %v1476
    %1827 = vmatprep.subr.bf16.mxu0 %v1485
    %1828 = vmatpush1.bf16.msra.mxu0 %v1484
    %1829 = vmatprep.subr.bf16.mxu0 %v1493
    %1830 = vmatpush1.bf16.msra.mxu0 %v1492
    %1831 = vmatprep.subr.bf16.mxu0 %v1501
    %1832 = vmatpush1.bf16.msra.mxu0 %v1500
    %1833 = vmatprep.subr.bf16.mxu0 %v1509
    %1834 = vmatpush1.bf16.msra.mxu0 %v1508
    %1835 = vmatprep.subr.bf16.mxu0 %v1517
    %1836 = vmatpush1.bf16.msra.mxu0 %v1516
    %1837 = vmatprep.mubr.bf16.mxu0 %v1257
    %1838 = vmatmul.mubr.bf16.gmra.mrb[0].mxu0 %v1256
    %v1839 = vpop.f32.mrb[0].mxu0
    %v1840 = vadd.f32 %v1799, %v1839
    %v1841 = vpop.f32.mrb[0].mxu0
    %v1842 = vadd.f32 %v1801, %v1841
    %v1843 = vpop.f32.mrb[0].mxu0
    %v1844 = vpop.f32.mrb[0].mxu0
    %1845 = vdwg.mxu0
    %v1846 = vrot.slane %v1594, 4
    %v1847 = vadd.f32 %v1594, %v1846
    %v1848 = vrot.slane %v1847, 2
    %v1849 = vadd.f32 %v1847, %v1848
    %v1850 = vrot.slane %v1849, 1
    %v1851 = vadd.f32 %v1849, %v1850
    %v1852 = vrot.slane %v1596, 4
    %v1853 = vadd.f32 %v1596, %v1852
    %v1854 = vrot.slane %v1853, 2
    %v1855 = vadd.f32 %v1853, %v1854
    %v1856 = vrot.slane %v1855, 1
    %v1857 = vadd.f32 %v1855, %v1856
    %v1858 = vrot.slane %v1676, 4
    %v1859 = vadd.f32 %v1676, %v1858
    %v1860 = vrot.slane %v1859, 2
    %v1861 = vadd.f32 %v1859, %v1860
    %v1862 = vrot.slane %v1861, 1
    %v1863 = vadd.f32 %v1861, %v1862
    %v1864 = vrot.slane %v1678, 4
    %v1865 = vadd.f32 %v1678, %v1864
    %v1866 = vrot.slane %v1865, 2
    %v1867 = vadd.f32 %v1865, %v1866
    %v1868 = vrot.slane %v1867, 1
    %v1869 = vadd.f32 %v1867, %v1868
    %v1870 = vrot.slane %v1758, 4
    %v1871 = vadd.f32 %v1758, %v1870
    %v1872 = vrot.slane %v1871, 2
    %v1873 = vadd.f32 %v1871, %v1872
    %v1874 = vrot.slane %v1873, 1
    %v1875 = vadd.f32 %v1873, %v1874
    %v1876 = vrot.slane %v1760, 4
    %v1877 = vadd.f32 %v1760, %v1876
    %v1878 = vrot.slane %v1877, 2
    %v1879 = vadd.f32 %v1877, %v1878
    %v1880 = vrot.slane %v1879, 1
    %v1881 = vadd.f32 %v1879, %v1880
    %v1882 = vrot.slane %v1840, 4
    %v1883 = vadd.f32 %v1840, %v1882
    %v1884 = vrot.slane %v1883, 2
    %v1885 = vadd.f32 %v1883, %v1884
    %v1886 = vrot.slane %v1885, 1
    %v1887 = vadd.f32 %v1885, %v1886
    %v1888 = vrot.slane %v1842, 4
    %v1889 = vadd.f32 %v1842, %v1888
    %v1890 = vrot.slane %v1889, 2
    %v1891 = vadd.f32 %v1889, %v1890
    %v1892 = vrot.slane %v1891, 1
    %v1893 = vadd.f32 %v1891, %v1892
    %v1894 = vmul.f32 %v1851, %v481
    %v1895 = vmul.f32 %v1857, %v481
    %v1896 = vmul.f32 %v1863, %v481
    %v1897 = vmul.f32 %v1869, %v481
    %v1898 = vmul.f32 %v1875, %v481
    %v1899 = vmul.f32 %v1881, %v481
    %v1900 = vmul.f32 %v1887, %v481
    %v1901 = vmul.f32 %v1893, %v481
    %v1902 = vmul.f32 %v1594, %v1594
    %v1903 = vmul.f32 %v1596, %v1596
    %v1904 = vmul.f32 %v1676, %v1676
    %v1905 = vmul.f32 %v1678, %v1678
    %v1906 = vmul.f32 %v1758, %v1758
    %v1907 = vmul.f32 %v1760, %v1760
    %v1908 = vmul.f32 %v1840, %v1840
    %v1909 = vmul.f32 %v1842, %v1842
    %v1910 = vrot.slane %v1902, 4
    %v1911 = vadd.f32 %v1902, %v1910
    %v1912 = vrot.slane %v1911, 2
    %v1913 = vadd.f32 %v1911, %v1912
    %v1914 = vrot.slane %v1913, 1
    %v1915 = vadd.f32 %v1913, %v1914
    %v1916 = vrot.slane %v1903, 4
    %v1917 = vadd.f32 %v1903, %v1916
    %v1918 = vrot.slane %v1917, 2
    %v1919 = vadd.f32 %v1917, %v1918
    %v1920 = vrot.slane %v1919, 1
    %v1921 = vadd.f32 %v1919, %v1920
    %v1922 = vrot.slane %v1904, 4
    %v1923 = vadd.f32 %v1904, %v1922
    %v1924 = vrot.slane %v1923, 2
    %v1925 = vadd.f32 %v1923, %v1924
    %v1926 = vrot.slane %v1925, 1
    %v1927 = vadd.f32 %v1925, %v1926
    %v1928 = vrot.slane %v1905, 4
    %v1929 = vadd.f32 %v1905, %v1928
    %v1930 = vrot.slane %v1929, 2
    %v1931 = vadd.f32 %v1929, %v1930
    %v1932 = vrot.slane %v1931, 1
    %v1933 = vadd.f32 %v1931, %v1932
    %v1934 = vrot.slane %v1906, 4
    %v1935 = vadd.f32 %v1906, %v1934
    %v1936 = vrot.slane %v1935, 2
    %v1937 = vadd.f32 %v1935, %v1936
    %v1938 = vrot.slane %v1937, 1
    %v1939 = vadd.f32 %v1937, %v1938
    %v1940 = vrot.slane %v1907, 4
    %v1941 = vadd.f32 %v1907, %v1940
    %v1942 = vrot.slane %v1941, 2
    %v1943 = vadd.f32 %v1941, %v1942
    %v1944 = vrot.slane %v1943, 1
    %v1945 = vadd.f32 %v1943, %v1944
    %v1946 = vrot.slane %v1908, 4
    %v1947 = vadd.f32 %v1908, %v1946
    %v1948 = vrot.slane %v1947, 2
    %v1949 = vadd.f32 %v1947, %v1948
    %v1950 = vrot.slane %v1949, 1
    %v1951 = vadd.f32 %v1949, %v1950
    %v1952 = vrot.slane %v1909, 4
    %v1953 = vadd.f32 %v1909, %v1952
    %v1954 = vrot.slane %v1953, 2
    %v1955 = vadd.f32 %v1953, %v1954
    %v1956 = vrot.slane %v1955, 1
    %v1957 = vadd.f32 %v1955, %v1956
    %v1958 = vmul.f32 %v1915, %v481
    %v1959 = vmul.f32 %v1921, %v481
    %v1960 = vmul.f32 %v1927, %v481
    %v1961 = vmul.f32 %v1933, %v481
    %v1962 = vmul.f32 %v1939, %v481
    %v1963 = vmul.f32 %v1945, %v481
    %v1964 = vmul.f32 %v1951, %v481
    %v1965 = vmul.f32 %v1957, %v481
    %v1966 = vmul.f32 %v1894, %v1894
    %v1967 = vmul.f32 %v1895, %v1895
    %v1968 = vmul.f32 %v1896, %v1896
    %v1969 = vmul.f32 %v1897, %v1897
    %v1970 = vmul.f32 %v1898, %v1898
    %v1971 = vmul.f32 %v1899, %v1899
    %v1972 = vmul.f32 %v1900, %v1900
    %v1973 = vmul.f32 %v1901, %v1901
    %v1974 = vsub.f32 %v1958, %v1966
    %v1975 = vsub.f32 %v1959, %v1967
    %v1976 = vsub.f32 %v1960, %v1968
    %v1977 = vsub.f32 %v1961, %v1969
    %v1978 = vsub.f32 %v1962, %v1970
    %v1979 = vsub.f32 %v1963, %v1971
    %v1980 = vsub.f32 %v1964, %v1972
    %v1981 = vsub.f32 %v1965, %v1973
    %v1982 = vmax.f32 %v1974, 0.0
    %v1983 = vmax.f32 %v1975, 0.0
    %v1984 = vmax.f32 %v1976, 0.0
    %v1985 = vmax.f32 %v1977, 0.0
    %v1986 = vmax.f32 %v1978, 0.0
    %v1987 = vmax.f32 %v1979, 0.0
    %v1988 = vmax.f32 %v1980, 0.0
    %v1989 = vmax.f32 %v1981, 0.0
    %v1990 = vld [vmem:[#allocation20] sm:$0xff]
    %v1991 = vadd.f32 %v1982, 0.8
    %v1992 = vadd.f32 %v1983, 0.8
    %v1993 = vadd.f32 %v1984, 0.8
    %v1994 = vadd.f32 %v1985, 0.8
    %v1995 = vadd.f32 %v1986, 0.8
    %v1996 = vadd.f32 %v1987, 0.8
    %v1997 = vadd.f32 %v1988, 0.8
    %v1998 = vadd.f32 %v1989, 0.8
    %v1999 = vrsqrt.pop %v1991
    %v2000 = vrsqrt.pop %v1992
    %v2001 = vrsqrt.pop %v1993
    %v2002 = vrsqrt.pop %v1994
    %v2003 = vrsqrt.pop %v1995
    %v2004 = vrsqrt.pop %v1996
    %v2005 = vrsqrt.pop %v1997
    %v2006 = vrsqrt.pop %v1998
    %v2015 = vcombine.low %v1999, %v2000
    %v2016 = vcombine.low %v2001, %v2002
    %v2017 = vcombine.low %v2003, %v2004
    %v2018 = vcombine.low %v2005, %v2006
    %v2020 = vunpack.c.l.s4 1966171168
    %v2021 = vunpack.c.0.s8 %v2020
    %v2022 = vlaneseq
    %v2023 = vshrl.u32 %v2022, 7
    %v2024 = vsub.s32 %v2021, %v2023
    %v2025 = vrot.slane %v2015, %v2024
    %v2027 = vunpack.c.l.s4 1966171168
    %v2028 = vunpack.c.0.s8 %v2027
    %v2029 = vlaneseq
    %v2030 = vshrl.u32 %v2029, 7
    %v2031 = vsub.s32 %v2028, %v2030
    %v2032 = vrot.slane %v2016, %v2031
    %v2034 = vunpack.c.l.s4 1966171168
    %v2035 = vunpack.c.0.s8 %v2034
    %v2036 = vlaneseq
    %v2037 = vshrl.u32 %v2036, 7
    %v2038 = vsub.s32 %v2035, %v2037
    %v2039 = vrot.slane %v2017, %v2038
    %v2041 = vunpack.c.l.s4 1966171168
    %v2042 = vunpack.c.0.s8 %v2041
    %v2043 = vlaneseq
    %v2044 = vshrl.u32 %v2043, 7
    %v2045 = vsub.s32 %v2042, %v2044
    %v2046 = vrot.slane %v2018, %v2045
    %v2047 = vcombine.low %v2025, %v2032
    %v2048 = vcombine.low %v2039, %v2046
    %v2050 = vunpack.c.l.s4 1966171168
    %v2051 = vunpack.c.0.s8 %v2050
    %v2052 = vlaneseq
    %v2053 = vshrl.u32 %v2052, 7
    %v2054 = vsub.s32 %v2051, %v2053
    %v2055 = vrot.slane %v2047, %v2054
    %v2057 = vunpack.c.l.s4 1966171168
    %v2058 = vunpack.c.0.s8 %v2057
    %v2059 = vlaneseq
    %v2060 = vshrl.u32 %v2059, 7
    %v2061 = vsub.s32 %v2058, %v2060
    %v2062 = vrot.slane %v2048, %v2061
    %v2063 = vcombine.low %v2055, %v2062
    %v2065 = vmul.f32 %v1990, %v2063
    %v2066 = vld [vmem:[#allocation22] sm:$0xff]
    %v2068 = vlaneseq
    %v2069 = vshrl.u32 %v2068, 7
    %v2070 = vsub.s32 0, %v2069
    %v2071 = vrot.slane %v2065, %v2070
    %v2072 = vlaneseq
    %v2073 = vshrl.u32 %v2072, 7
    %v2074 = vsub.s32 1, %v2073
    %v2075 = vrot.slane %v2065, %v2074
    %v2076 = vlaneseq
    %v2077 = vshrl.u32 %v2076, 7
    %v2078 = vsub.s32 2, %v2077
    %v2079 = vrot.slane %v2065, %v2078
    %v2080 = vlaneseq
    %v2081 = vshrl.u32 %v2080, 7
    %v2082 = vsub.s32 3, %v2081
    %v2083 = vrot.slane %v2065, %v2082
    %v2084 = vlaneseq
    %v2085 = vshrl.u32 %v2084, 7
    %v2086 = vsub.s32 4, %v2085
    %v2087 = vrot.slane %v2065, %v2086
    %v2088 = vlaneseq
    %v2089 = vshrl.u32 %v2088, 7
    %v2090 = vsub.s32 5, %v2089
    %v2091 = vrot.slane %v2065, %v2090
    %v2092 = vlaneseq
    %v2093 = vshrl.u32 %v2092, 7
    %v2094 = vsub.s32 6, %v2093
    %v2095 = vrot.slane %v2065, %v2094
    %v2096 = vlaneseq
    %v2097 = vshrl.u32 %v2096, 7
    %v2098 = vsub.s32 7, %v2097
    %v2099 = vrot.slane %v2065, %v2098
    %v2108 = vmul.f32 %v1894, %v2071
    %v2109 = vmul.f32 %v1895, %v2075
    %v2110 = vmul.f32 %v1896, %v2079
    %v2111 = vmul.f32 %v1897, %v2083
    %v2112 = vmul.f32 %v1898, %v2087
    %v2113 = vmul.f32 %v1899, %v2091
    %v2114 = vmul.f32 %v1900, %v2095
    %v2115 = vmul.f32 %v1901, %v2099
    %v2124 = vcombine.low %v2108, %v2109
    %v2125 = vcombine.low %v2110, %v2111
    %v2126 = vcombine.low %v2112, %v2113
    %v2127 = vcombine.low %v2114, %v2115
    %v2129 = vunpack.c.l.s4 1966171168
    %v2130 = vunpack.c.0.s8 %v2129
    %v2131 = vlaneseq
    %v2132 = vshrl.u32 %v2131, 7
    %v2133 = vsub.s32 %v2130, %v2132
    %v2134 = vrot.slane %v2124, %v2133
    %v2136 = vunpack.c.l.s4 1966171168
    %v2137 = vunpack.c.0.s8 %v2136
    %v2138 = vlaneseq
    %v2139 = vshrl.u32 %v2138, 7
    %v2140 = vsub.s32 %v2137, %v2139
    %v2141 = vrot.slane %v2125, %v2140
    %v2143 = vunpack.c.l.s4 1966171168
    %v2144 = vunpack.c.0.s8 %v2143
    %v2145 = vlaneseq
    %v2146 = vshrl.u32 %v2145, 7
    %v2147 = vsub.s32 %v2144, %v2146
    %v2148 = vrot.slane %v2126, %v2147
    %v2150 = vunpack.c.l.s4 1966171168
    %v2151 = vunpack.c.0.s8 %v2150
    %v2152 = vlaneseq
    %v2153 = vshrl.u32 %v2152, 7
    %v2154 = vsub.s32 %v2151, %v2153
    %v2155 = vrot.slane %v2127, %v2154
    %v2156 = vcombine.low %v2134, %v2141
    %v2157 = vcombine.low %v2148, %v2155
    %v2159 = vunpack.c.l.s4 1966171168
    %v2160 = vunpack.c.0.s8 %v2159
    %v2161 = vlaneseq
    %v2162 = vshrl.u32 %v2161, 7
    %v2163 = vsub.s32 %v2160, %v2162
    %v2164 = vrot.slane %v2156, %v2163
    %v2166 = vunpack.c.l.s4 1966171168
    %v2167 = vunpack.c.0.s8 %v2166
    %v2168 = vlaneseq
    %v2169 = vshrl.u32 %v2168, 7
    %v2170 = vsub.s32 %v2167, %v2169
    %v2171 = vrot.slane %v2157, %v2170
    %v2172 = vcombine.low %v2164, %v2171
    %v2174 = vsub.f32 %v2066, %v2172
    %v2175 = vmul.f32 %v1594, %v2071
    %v2176 = vmul.f32 %v1596, %v2075
    %v2177 = vmul.f32 %v1676, %v2079
    %v2178 = vmul.f32 %v1678, %v2083
    %v2179 = vmul.f32 %v1758, %v2087
    %v2180 = vmul.f32 %v1760, %v2091
    %v2181 = vmul.f32 %v1840, %v2095
    %v2182 = vmul.f32 %v1842, %v2099
    %v2184 = vlaneseq
    %v2185 = vshrl.u32 %v2184, 7
    %v2186 = vsub.s32 0, %v2185
    %v2187 = vrot.slane %v2174, %v2186
    %v2188 = vlaneseq
    %v2189 = vshrl.u32 %v2188, 7
    %v2190 = vsub.s32 1, %v2189
    %v2191 = vrot.slane %v2174, %v2190
    %v2192 = vlaneseq
    %v2193 = vshrl.u32 %v2192, 7
    %v2194 = vsub.s32 2, %v2193
    %v2195 = vrot.slane %v2174, %v2194
    %v2196 = vlaneseq
    %v2197 = vshrl.u32 %v2196, 7
    %v2198 = vsub.s32 3, %v2197
    %v2199 = vrot.slane %v2174, %v2198
    %v2200 = vlaneseq
    %v2201 = vshrl.u32 %v2200, 7
    %v2202 = vsub.s32 4, %v2201
    %v2203 = vrot.slane %v2174, %v2202
    %v2204 = vlaneseq
    %v2205 = vshrl.u32 %v2204, 7
    %v2206 = vsub.s32 5, %v2205
    %v2207 = vrot.slane %v2174, %v2206
    %v2208 = vlaneseq
    %v2209 = vshrl.u32 %v2208, 7
    %v2210 = vsub.s32 6, %v2209
    %v2211 = vrot.slane %v2174, %v2210
    %v2212 = vlaneseq
    %v2213 = vshrl.u32 %v2212, 7
    %v2214 = vsub.s32 7, %v2213
    %v2215 = vrot.slane %v2174, %v2214
    %v2224 = vadd.f32 %v2175, %v2187
    %v2225 = vadd.f32 %v2176, %v2191
    %v2226 = vadd.f32 %v2177, %v2195
    %v2227 = vadd.f32 %v2178, %v2199
    %v2228 = vadd.f32 %v2179, %v2203
    %v2229 = vadd.f32 %v2180, %v2207
    %v2230 = vadd.f32 %v2181, %v2211
    %v2231 = vadd.f32 %v2182, %v2215
    %v2232 = vmul.f32 %v2224, 0.2
    %v2233 = vmul.f32 %v2225, 0.2
    %v2234 = vmul.f32 %v2226, 0.2
    %v2235 = vmul.f32 %v2227, 0.2
    %v2236 = vmul.f32 %v2228, 0.2
    %v2237 = vmul.f32 %v2229, 0.2
    %v2238 = vmul.f32 %v2230, 0.2
    %v2239 = vmul.f32 %v2231, 0.2
    %v2240 = vmax.f32 %v2224, %v2232
    %v2241 = vmax.f32 %v2225, %v2233
    %v2242 = vmax.f32 %v2226, %v2234
    %v2243 = vmax.f32 %v2227, %v2235
    %v2244 = vmax.f32 %v2228, %v2236
    %v2245 = vmax.f32 %v2229, %v2237
    %v2246 = vmax.f32 %v2230, %v2238
    %v2247 = vmax.f32 %v2231, %v2239
    %v2248 = vpack.c.bf16 %v2240, %v2240
    %v2249 = vpack.c.bf16 %v2241, %v2241
    %v2250 = vpack.c.bf16 %v2242, %v2242
    %v2251 = vpack.c.bf16 %v2243, %v2243
    %v2252 = vpack.c.bf16 %v2244, %v2244
    %v2253 = vpack.c.bf16 %v2245, %v2245
    %v2254 = vpack.c.bf16 %v2246, %v2246
    %v2255 = vpack.c.bf16 %v2247, %v2247
    %s2256 = smul.u32 4, 128
    %s2257 = smul.u32 %s2256, 8
    %s2258 = sshll.u32 %s2257, 4
    %2259 = dma.done %s225, %s2258
    %v2260 = vld [vmem:[#allocation3] sm:$0xff]
    %v2261 = vld [vmem:[#allocation3 + $0x8] sm:$0xff]
    %v2262 = vld [vmem:[#allocation3 + $0x10] sm:$0xff]
    %v2263 = vld [vmem:[#allocation3 + $0x18] sm:$0xff]
    %v2264 = vld [vmem:[#allocation3 + $0x20] sm:$0xff]
    %v2265 = vld [vmem:[#allocation3 + $0x28] sm:$0xff]
    %v2266 = vld [vmem:[#allocation3 + $0x30] sm:$0xff]
    %v2267 = vld [vmem:[#allocation3 + $0x38] sm:$0xff]
    %v2268 = vld [vmem:[#allocation3 + $0x40] sm:$0xff]
    %v2269 = vld [vmem:[#allocation3 + $0x48] sm:$0xff]
    %v2270 = vld [vmem:[#allocation3 + $0x50] sm:$0xff]
    %v2271 = vld [vmem:[#allocation3 + $0x58] sm:$0xff]
    %v2272 = vld [vmem:[#allocation3 + $0x60] sm:$0xff]
    %v2273 = vld [vmem:[#allocation3 + $0x68] sm:$0xff]
    %v2274 = vld [vmem:[#allocation3 + $0x70] sm:$0xff]
    %v2275 = vld [vmem:[#allocation3 + $0x78] sm:$0xff]
    %v2276 = vld [vmem:[#allocation3 + $0x80] sm:$0xff]
    %v2277 = vld [vmem:[#allocation3 + $0x88] sm:$0xff]
    %v2278 = vld [vmem:[#allocation3 + $0x90] sm:$0xff]
    %v2279 = vld [vmem:[#allocation3 + $0x98] sm:$0xff]
    %v2280 = vld [vmem:[#allocation3 + $0xa0] sm:$0xff]
    %v2281 = vld [vmem:[#allocation3 + $0xa8] sm:$0xff]
    %v2282 = vld [vmem:[#allocation3 + $0xb0] sm:$0xff]
    %v2283 = vld [vmem:[#allocation3 + $0xb8] sm:$0xff]
    %v2284 = vld [vmem:[#allocation3 + $0xc0] sm:$0xff]
    %v2285 = vld [vmem:[#allocation3 + $0xc8] sm:$0xff]
    %v2286 = vld [vmem:[#allocation3 + $0xd0] sm:$0xff]
    %v2287 = vld [vmem:[#allocation3 + $0xd8] sm:$0xff]
    %v2288 = vld [vmem:[#allocation3 + $0xe0] sm:$0xff]
    %v2289 = vld [vmem:[#allocation3 + $0xe8] sm:$0xff]
    %v2290 = vld [vmem:[#allocation3 + $0xf0] sm:$0xff]
    %v2291 = vld [vmem:[#allocation3 + $0xf8] sm:$0xff]
    %v2292 = vld [vmem:[#allocation3 + $0x100] sm:$0xff]
    %v2293 = vld [vmem:[#allocation3 + $0x108] sm:$0xff]
    %v2294 = vld [vmem:[#allocation3 + $0x110] sm:$0xff]
    %v2295 = vld [vmem:[#allocation3 + $0x118] sm:$0xff]
    %v2296 = vld [vmem:[#allocation3 + $0x120] sm:$0xff]
    %v2297 = vld [vmem:[#allocation3 + $0x128] sm:$0xff]
    %v2298 = vld [vmem:[#allocation3 + $0x130] sm:$0xff]
    %v2299 = vld [vmem:[#allocation3 + $0x138] sm:$0xff]
    %v2300 = vld [vmem:[#allocation3 + $0x140] sm:$0xff]
    %v2301 = vld [vmem:[#allocation3 + $0x148] sm:$0xff]
    %v2302 = vld [vmem:[#allocation3 + $0x150] sm:$0xff]
    %v2303 = vld [vmem:[#allocation3 + $0x158] sm:$0xff]
    %v2304 = vld [vmem:[#allocation3 + $0x160] sm:$0xff]
    %v2305 = vld [vmem:[#allocation3 + $0x168] sm:$0xff]
    %v2306 = vld [vmem:[#allocation3 + $0x170] sm:$0xff]
    %v2307 = vld [vmem:[#allocation3 + $0x178] sm:$0xff]
    %v2308 = vld [vmem:[#allocation3 + $0x180] sm:$0xff]
    %v2309 = vld [vmem:[#allocation3 + $0x188] sm:$0xff]
    %v2310 = vld [vmem:[#allocation3 + $0x190] sm:$0xff]
    %v2311 = vld [vmem:[#allocation3 + $0x198] sm:$0xff]
    %v2312 = vld [vmem:[#allocation3 + $0x1a0] sm:$0xff]
    %v2313 = vld [vmem:[#allocation3 + $0x1a8] sm:$0xff]
    %v2314 = vld [vmem:[#allocation3 + $0x1b0] sm:$0xff]
    %v2315 = vld [vmem:[#allocation3 + $0x1b8] sm:$0xff]
    %v2316 = vld [vmem:[#allocation3 + $0x1c0] sm:$0xff]
    %v2317 = vld [vmem:[#allocation3 + $0x1c8] sm:$0xff]
    %v2318 = vld [vmem:[#allocation3 + $0x1d0] sm:$0xff]
    %v2319 = vld [vmem:[#allocation3 + $0x1d8] sm:$0xff]
    %v2320 = vld [vmem:[#allocation3 + $0x1e0] sm:$0xff]
    %v2321 = vld [vmem:[#allocation3 + $0x1e8] sm:$0xff]
    %v2322 = vld [vmem:[#allocation3 + $0x1f0] sm:$0xff]
    %v2323 = vld [vmem:[#allocation3 + $0x1f8] sm:$0xff]
    %v2324 = vld [vmem:[#allocation3 + $0x200] sm:$0xff]
    %v2325 = vld [vmem:[#allocation3 + $0x208] sm:$0xff]
    %v2326 = vld [vmem:[#allocation3 + $0x210] sm:$0xff]
    %v2327 = vld [vmem:[#allocation3 + $0x218] sm:$0xff]
    %v2328 = vld [vmem:[#allocation3 + $0x220] sm:$0xff]
    %v2329 = vld [vmem:[#allocation3 + $0x228] sm:$0xff]
    %v2330 = vld [vmem:[#allocation3 + $0x230] sm:$0xff]
    %v2331 = vld [vmem:[#allocation3 + $0x238] sm:$0xff]
    %v2332 = vld [vmem:[#allocation3 + $0x240] sm:$0xff]
    %v2333 = vld [vmem:[#allocation3 + $0x248] sm:$0xff]
    %v2334 = vld [vmem:[#allocation3 + $0x250] sm:$0xff]
    %v2335 = vld [vmem:[#allocation3 + $0x258] sm:$0xff]
    %v2336 = vld [vmem:[#allocation3 + $0x260] sm:$0xff]
    %v2337 = vld [vmem:[#allocation3 + $0x268] sm:$0xff]
    %v2338 = vld [vmem:[#allocation3 + $0x270] sm:$0xff]
    %v2339 = vld [vmem:[#allocation3 + $0x278] sm:$0xff]
    %v2340 = vld [vmem:[#allocation3 + $0x280] sm:$0xff]
    %v2341 = vld [vmem:[#allocation3 + $0x288] sm:$0xff]
    %v2342 = vld [vmem:[#allocation3 + $0x290] sm:$0xff]
    %v2343 = vld [vmem:[#allocation3 + $0x298] sm:$0xff]
    %v2344 = vld [vmem:[#allocation3 + $0x2a0] sm:$0xff]
    %v2345 = vld [vmem:[#allocation3 + $0x2a8] sm:$0xff]
    %v2346 = vld [vmem:[#allocation3 + $0x2b0] sm:$0xff]
    %v2347 = vld [vmem:[#allocation3 + $0x2b8] sm:$0xff]
    %v2348 = vld [vmem:[#allocation3 + $0x2c0] sm:$0xff]
    %v2349 = vld [vmem:[#allocation3 + $0x2c8] sm:$0xff]
    %v2350 = vld [vmem:[#allocation3 + $0x2d0] sm:$0xff]
    %v2351 = vld [vmem:[#allocation3 + $0x2d8] sm:$0xff]
    %v2352 = vld [vmem:[#allocation3 + $0x2e0] sm:$0xff]
    %v2353 = vld [vmem:[#allocation3 + $0x2e8] sm:$0xff]
    %v2354 = vld [vmem:[#allocation3 + $0x2f0] sm:$0xff]
    %v2355 = vld [vmem:[#allocation3 + $0x2f8] sm:$0xff]
    %v2356 = vld [vmem:[#allocation3 + $0x300] sm:$0xff]
    %v2357 = vld [vmem:[#allocation3 + $0x308] sm:$0xff]
    %v2358 = vld [vmem:[#allocation3 + $0x310] sm:$0xff]
    %v2359 = vld [vmem:[#allocation3 + $0x318] sm:$0xff]
    %v2360 = vld [vmem:[#allocation3 + $0x320] sm:$0xff]
    %v2361 = vld [vmem:[#allocation3 + $0x328] sm:$0xff]
    %v2362 = vld [vmem:[#allocation3 + $0x330] sm:$0xff]
    %v2363 = vld [vmem:[#allocation3 + $0x338] sm:$0xff]
    %v2364 = vld [vmem:[#allocation3 + $0x340] sm:$0xff]
    %v2365 = vld [vmem:[#allocation3 + $0x348] sm:$0xff]
    %v2366 = vld [vmem:[#allocation3 + $0x350] sm:$0xff]
    %v2367 = vld [vmem:[#allocation3 + $0x358] sm:$0xff]
    %v2368 = vld [vmem:[#allocation3 + $0x360] sm:$0xff]
    %v2369 = vld [vmem:[#allocation3 + $0x368] sm:$0xff]
    %v2370 = vld [vmem:[#allocation3 + $0x370] sm:$0xff]
    %v2371 = vld [vmem:[#allocation3 + $0x378] sm:$0xff]
    %v2372 = vld [vmem:[#allocation3 + $0x380] sm:$0xff]
    %v2373 = vld [vmem:[#allocation3 + $0x388] sm:$0xff]
    %v2374 = vld [vmem:[#allocation3 + $0x390] sm:$0xff]
    %v2375 = vld [vmem:[#allocation3 + $0x398] sm:$0xff]
    %v2376 = vld [vmem:[#allocation3 + $0x3a0] sm:$0xff]
    %v2377 = vld [vmem:[#allocation3 + $0x3a8] sm:$0xff]
    %v2378 = vld [vmem:[#allocation3 + $0x3b0] sm:$0xff]
    %v2379 = vld [vmem:[#allocation3 + $0x3b8] sm:$0xff]
    %v2380 = vld [vmem:[#allocation3 + $0x3c0] sm:$0xff]
    %v2381 = vld [vmem:[#allocation3 + $0x3c8] sm:$0xff]
    %v2382 = vld [vmem:[#allocation3 + $0x3d0] sm:$0xff]
    %v2383 = vld [vmem:[#allocation3 + $0x3d8] sm:$0xff]
    %v2384 = vld [vmem:[#allocation3 + $0x3e0] sm:$0xff]
    %v2385 = vld [vmem:[#allocation3 + $0x3e8] sm:$0xff]
    %v2386 = vld [vmem:[#allocation3 + $0x3f0] sm:$0xff]
    %v2387 = vld [vmem:[#allocation3 + $0x3f8] sm:$0xff]
    %v2388 = vld [vmem:[#allocation3 + $0x400] sm:$0xff]
    %v2389 = vld [vmem:[#allocation3 + $0x408] sm:$0xff]
    %v2390 = vld [vmem:[#allocation3 + $0x410] sm:$0xff]
    %v2391 = vld [vmem:[#allocation3 + $0x418] sm:$0xff]
    %v2392 = vld [vmem:[#allocation3 + $0x420] sm:$0xff]
    %v2393 = vld [vmem:[#allocation3 + $0x428] sm:$0xff]
    %v2394 = vld [vmem:[#allocation3 + $0x430] sm:$0xff]
    %v2395 = vld [vmem:[#allocation3 + $0x438] sm:$0xff]
    %v2396 = vld [vmem:[#allocation3 + $0x440] sm:$0xff]
    %v2397 = vld [vmem:[#allocation3 + $0x448] sm:$0xff]
    %v2398 = vld [vmem:[#allocation3 + $0x450] sm:$0xff]
    %v2399 = vld [vmem:[#allocation3 + $0x458] sm:$0xff]
    %v2400 = vld [vmem:[#allocation3 + $0x460] sm:$0xff]
    %v2401 = vld [vmem:[#allocation3 + $0x468] sm:$0xff]
    %v2402 = vld [vmem:[#allocation3 + $0x470] sm:$0xff]
    %v2403 = vld [vmem:[#allocation3 + $0x478] sm:$0xff]
    %v2404 = vld [vmem:[#allocation3 + $0x480] sm:$0xff]
    %v2405 = vld [vmem:[#allocation3 + $0x488] sm:$0xff]
    %v2406 = vld [vmem:[#allocation3 + $0x490] sm:$0xff]
    %v2407 = vld [vmem:[#allocation3 + $0x498] sm:$0xff]
    %v2408 = vld [vmem:[#allocation3 + $0x4a0] sm:$0xff]
    %v2409 = vld [vmem:[#allocation3 + $0x4a8] sm:$0xff]
    %v2410 = vld [vmem:[#allocation3 + $0x4b0] sm:$0xff]
    %v2411 = vld [vmem:[#allocation3 + $0x4b8] sm:$0xff]
    %v2412 = vld [vmem:[#allocation3 + $0x4c0] sm:$0xff]
    %v2413 = vld [vmem:[#allocation3 + $0x4c8] sm:$0xff]
    %v2414 = vld [vmem:[#allocation3 + $0x4d0] sm:$0xff]
    %v2415 = vld [vmem:[#allocation3 + $0x4d8] sm:$0xff]
    %v2416 = vld [vmem:[#allocation3 + $0x4e0] sm:$0xff]
    %v2417 = vld [vmem:[#allocation3 + $0x4e8] sm:$0xff]
    %v2418 = vld [vmem:[#allocation3 + $0x4f0] sm:$0xff]
    %v2419 = vld [vmem:[#allocation3 + $0x4f8] sm:$0xff]
    %v2420 = vld [vmem:[#allocation3 + $0x500] sm:$0xff]
    %v2421 = vld [vmem:[#allocation3 + $0x508] sm:$0xff]
    %v2422 = vld [vmem:[#allocation3 + $0x510] sm:$0xff]
    %v2423 = vld [vmem:[#allocation3 + $0x518] sm:$0xff]
    %v2424 = vld [vmem:[#allocation3 + $0x520] sm:$0xff]
    %v2425 = vld [vmem:[#allocation3 + $0x528] sm:$0xff]
    %v2426 = vld [vmem:[#allocation3 + $0x530] sm:$0xff]
    %v2427 = vld [vmem:[#allocation3 + $0x538] sm:$0xff]
    %v2428 = vld [vmem:[#allocation3 + $0x540] sm:$0xff]
    %v2429 = vld [vmem:[#allocation3 + $0x548] sm:$0xff]
    %v2430 = vld [vmem:[#allocation3 + $0x550] sm:$0xff]
    %v2431 = vld [vmem:[#allocation3 + $0x558] sm:$0xff]
    %v2432 = vld [vmem:[#allocation3 + $0x560] sm:$0xff]
    %v2433 = vld [vmem:[#allocation3 + $0x568] sm:$0xff]
    %v2434 = vld [vmem:[#allocation3 + $0x570] sm:$0xff]
    %v2435 = vld [vmem:[#allocation3 + $0x578] sm:$0xff]
    %v2436 = vld [vmem:[#allocation3 + $0x580] sm:$0xff]
    %v2437 = vld [vmem:[#allocation3 + $0x588] sm:$0xff]
    %v2438 = vld [vmem:[#allocation3 + $0x590] sm:$0xff]
    %v2439 = vld [vmem:[#allocation3 + $0x598] sm:$0xff]
    %v2440 = vld [vmem:[#allocation3 + $0x5a0] sm:$0xff]
    %v2441 = vld [vmem:[#allocation3 + $0x5a8] sm:$0xff]
    %v2442 = vld [vmem:[#allocation3 + $0x5b0] sm:$0xff]
    %v2443 = vld [vmem:[#allocation3 + $0x5b8] sm:$0xff]
    %v2444 = vld [vmem:[#allocation3 + $0x5c0] sm:$0xff]
    %v2445 = vld [vmem:[#allocation3 + $0x5c8] sm:$0xff]
    %v2446 = vld [vmem:[#allocation3 + $0x5d0] sm:$0xff]
    %v2447 = vld [vmem:[#allocation3 + $0x5d8] sm:$0xff]
    %v2448 = vld [vmem:[#allocation3 + $0x5e0] sm:$0xff]
    %v2449 = vld [vmem:[#allocation3 + $0x5e8] sm:$0xff]
    %v2450 = vld [vmem:[#allocation3 + $0x5f0] sm:$0xff]
    %v2451 = vld [vmem:[#allocation3 + $0x5f8] sm:$0xff]
    %v2452 = vld [vmem:[#allocation3 + $0x600] sm:$0xff]
    %v2453 = vld [vmem:[#allocation3 + $0x608] sm:$0xff]
    %v2454 = vld [vmem:[#allocation3 + $0x610] sm:$0xff]
    %v2455 = vld [vmem:[#allocation3 + $0x618] sm:$0xff]
    %v2456 = vld [vmem:[#allocation3 + $0x620] sm:$0xff]
    %v2457 = vld [vmem:[#allocation3 + $0x628] sm:$0xff]
    %v2458 = vld [vmem:[#allocation3 + $0x630] sm:$0xff]
    %v2459 = vld [vmem:[#allocation3 + $0x638] sm:$0xff]
    %v2460 = vld [vmem:[#allocation3 + $0x640] sm:$0xff]
    %v2461 = vld [vmem:[#allocation3 + $0x648] sm:$0xff]
    %v2462 = vld [vmem:[#allocation3 + $0x650] sm:$0xff]
    %v2463 = vld [vmem:[#allocation3 + $0x658] sm:$0xff]
    %v2464 = vld [vmem:[#allocation3 + $0x660] sm:$0xff]
    %v2465 = vld [vmem:[#allocation3 + $0x668] sm:$0xff]
    %v2466 = vld [vmem:[#allocation3 + $0x670] sm:$0xff]
    %v2467 = vld [vmem:[#allocation3 + $0x678] sm:$0xff]
    %v2468 = vld [vmem:[#allocation3 + $0x680] sm:$0xff]
    %v2469 = vld [vmem:[#allocation3 + $0x688] sm:$0xff]
    %v2470 = vld [vmem:[#allocation3 + $0x690] sm:$0xff]
    %v2471 = vld [vmem:[#allocation3 + $0x698] sm:$0xff]
    %v2472 = vld [vmem:[#allocation3 + $0x6a0] sm:$0xff]
    %v2473 = vld [vmem:[#allocation3 + $0x6a8] sm:$0xff]
    %v2474 = vld [vmem:[#allocation3 + $0x6b0] sm:$0xff]
    %v2475 = vld [vmem:[#allocation3 + $0x6b8] sm:$0xff]
    %v2476 = vld [vmem:[#allocation3 + $0x6c0] sm:$0xff]
    %v2477 = vld [vmem:[#allocation3 + $0x6c8] sm:$0xff]
    %v2478 = vld [vmem:[#allocation3 + $0x6d0] sm:$0xff]
    %v2479 = vld [vmem:[#allocation3 + $0x6d8] sm:$0xff]
    %v2480 = vld [vmem:[#allocation3 + $0x6e0] sm:$0xff]
    %v2481 = vld [vmem:[#allocation3 + $0x6e8] sm:$0xff]
    %v2482 = vld [vmem:[#allocation3 + $0x6f0] sm:$0xff]
    %v2483 = vld [vmem:[#allocation3 + $0x6f8] sm:$0xff]
    %v2484 = vld [vmem:[#allocation3 + $0x700] sm:$0xff]
    %v2485 = vld [vmem:[#allocation3 + $0x708] sm:$0xff]
    %v2486 = vld [vmem:[#allocation3 + $0x710] sm:$0xff]
    %v2487 = vld [vmem:[#allocation3 + $0x718] sm:$0xff]
    %v2488 = vld [vmem:[#allocation3 + $0x720] sm:$0xff]
    %v2489 = vld [vmem:[#allocation3 + $0x728] sm:$0xff]
    %v2490 = vld [vmem:[#allocation3 + $0x730] sm:$0xff]
    %v2491 = vld [vmem:[#allocation3 + $0x738] sm:$0xff]
    %v2492 = vld [vmem:[#allocation3 + $0x740] sm:$0xff]
    %v2493 = vld [vmem:[#allocation3 + $0x748] sm:$0xff]
    %v2494 = vld [vmem:[#allocation3 + $0x750] sm:$0xff]
    %v2495 = vld [vmem:[#allocation3 + $0x758] sm:$0xff]
    %v2496 = vld [vmem:[#allocation3 + $0x760] sm:$0xff]
    %v2497 = vld [vmem:[#allocation3 + $0x768] sm:$0xff]
    %v2498 = vld [vmem:[#allocation3 + $0x770] sm:$0xff]
    %v2499 = vld [vmem:[#allocation3 + $0x778] sm:$0xff]
    %v2500 = vld [vmem:[#allocation3 + $0x780] sm:$0xff]
    %v2501 = vld [vmem:[#allocation3 + $0x788] sm:$0xff]
    %v2502 = vld [vmem:[#allocation3 + $0x790] sm:$0xff]
    %v2503 = vld [vmem:[#allocation3 + $0x798] sm:$0xff]
    %v2504 = vld [vmem:[#allocation3 + $0x7a0] sm:$0xff]
    %v2505 = vld [vmem:[#allocation3 + $0x7a8] sm:$0xff]
    %v2506 = vld [vmem:[#allocation3 + $0x7b0] sm:$0xff]
    %v2507 = vld [vmem:[#allocation3 + $0x7b8] sm:$0xff]
    %v2508 = vld [vmem:[#allocation3 + $0x7c0] sm:$0xff]
    %v2509 = vld [vmem:[#allocation3 + $0x7c8] sm:$0xff]
    %v2510 = vld [vmem:[#allocation3 + $0x7d0] sm:$0xff]
    %v2511 = vld [vmem:[#allocation3 + $0x7d8] sm:$0xff]
    %v2512 = vld [vmem:[#allocation3 + $0x7e0] sm:$0xff]
    %v2513 = vld [vmem:[#allocation3 + $0x7e8] sm:$0xff]
    %v2514 = vld [vmem:[#allocation3 + $0x7f0] sm:$0xff]
    %v2515 = vld [vmem:[#allocation3 + $0x7f8] sm:$0xff]
    %v2516 = vld [vmem:[#allocation3 + $0x800] sm:$0xff]
    %v2517 = vld [vmem:[#allocation3 + $0x808] sm:$0xff]
    %v2518 = vld [vmem:[#allocation3 + $0x810] sm:$0xff]
    %v2519 = vld [vmem:[#allocation3 + $0x818] sm:$0xff]
    %v2520 = vld [vmem:[#allocation3 + $0x820] sm:$0xff]
    %v2521 = vld [vmem:[#allocation3 + $0x828] sm:$0xff]
    %v2522 = vld [vmem:[#allocation3 + $0x830] sm:$0xff]
    %v2523 = vld [vmem:[#allocation3 + $0x838] sm:$0xff]
    %v2524 = vld [vmem:[#allocation3 + $0x840] sm:$0xff]
    %v2525 = vld [vmem:[#allocation3 + $0x848] sm:$0xff]
    %v2526 = vld [vmem:[#allocation3 + $0x850] sm:$0xff]
    %v2527 = vld [vmem:[#allocation3 + $0x858] sm:$0xff]
    %v2528 = vld [vmem:[#allocation3 + $0x860] sm:$0xff]
    %v2529 = vld [vmem:[#allocation3 + $0x868] sm:$0xff]
    %v2530 = vld [vmem:[#allocation3 + $0x870] sm:$0xff]
    %v2531 = vld [vmem:[#allocation3 + $0x878] sm:$0xff]
    %v2532 = vld [vmem:[#allocation3 + $0x880] sm:$0xff]
    %v2533 = vld [vmem:[#allocation3 + $0x888] sm:$0xff]
    %v2534 = vld [vmem:[#allocation3 + $0x890] sm:$0xff]
    %v2535 = vld [vmem:[#allocation3 + $0x898] sm:$0xff]
    %v2536 = vld [vmem:[#allocation3 + $0x8a0] sm:$0xff]
    %v2537 = vld [vmem:[#allocation3 + $0x8a8] sm:$0xff]
    %v2538 = vld [vmem:[#allocation3 + $0x8b0] sm:$0xff]
    %v2539 = vld [vmem:[#allocation3 + $0x8b8] sm:$0xff]
    %v2540 = vld [vmem:[#allocation3 + $0x8c0] sm:$0xff]
    %v2541 = vld [vmem:[#allocation3 + $0x8c8] sm:$0xff]
    %v2542 = vld [vmem:[#allocation3 + $0x8d0] sm:$0xff]
    %v2543 = vld [vmem:[#allocation3 + $0x8d8] sm:$0xff]
    %v2544 = vld [vmem:[#allocation3 + $0x8e0] sm:$0xff]
    %v2545 = vld [vmem:[#allocation3 + $0x8e8] sm:$0xff]
    %v2546 = vld [vmem:[#allocation3 + $0x8f0] sm:$0xff]
    %v2547 = vld [vmem:[#allocation3 + $0x8f8] sm:$0xff]
    %v2548 = vld [vmem:[#allocation3 + $0x900] sm:$0xff]
    %v2549 = vld [vmem:[#allocation3 + $0x908] sm:$0xff]
    %v2550 = vld [vmem:[#allocation3 + $0x910] sm:$0xff]
    %v2551 = vld [vmem:[#allocation3 + $0x918] sm:$0xff]
    %v2552 = vld [vmem:[#allocation3 + $0x920] sm:$0xff]
    %v2553 = vld [vmem:[#allocation3 + $0x928] sm:$0xff]
    %v2554 = vld [vmem:[#allocation3 + $0x930] sm:$0xff]
    %v2555 = vld [vmem:[#allocation3 + $0x938] sm:$0xff]
    %v2556 = vld [vmem:[#allocation3 + $0x940] sm:$0xff]
    %v2557 = vld [vmem:[#allocation3 + $0x948] sm:$0xff]
    %v2558 = vld [vmem:[#allocation3 + $0x950] sm:$0xff]
    %v2559 = vld [vmem:[#allocation3 + $0x958] sm:$0xff]
    %v2560 = vld [vmem:[#allocation3 + $0x960] sm:$0xff]
    %v2561 = vld [vmem:[#allocation3 + $0x968] sm:$0xff]
    %v2562 = vld [vmem:[#allocation3 + $0x970] sm:$0xff]
    %v2563 = vld [vmem:[#allocation3 + $0x978] sm:$0xff]
    %v2564 = vld [vmem:[#allocation3 + $0x980] sm:$0xff]
    %v2565 = vld [vmem:[#allocation3 + $0x988] sm:$0xff]
    %v2566 = vld [vmem:[#allocation3 + $0x990] sm:$0xff]
    %v2567 = vld [vmem:[#allocation3 + $0x998] sm:$0xff]
    %v2568 = vld [vmem:[#allocation3 + $0x9a0] sm:$0xff]
    %v2569 = vld [vmem:[#allocation3 + $0x9a8] sm:$0xff]
    %v2570 = vld [vmem:[#allocation3 + $0x9b0] sm:$0xff]
    %v2571 = vld [vmem:[#allocation3 + $0x9b8] sm:$0xff]
    %v2572 = vld [vmem:[#allocation3 + $0x9c0] sm:$0xff]
    %v2573 = vld [vmem:[#allocation3 + $0x9c8] sm:$0xff]
    %v2574 = vld [vmem:[#allocation3 + $0x9d0] sm:$0xff]
    %v2575 = vld [vmem:[#allocation3 + $0x9d8] sm:$0xff]
    %v2576 = vld [vmem:[#allocation3 + $0x9e0] sm:$0xff]
    %v2577 = vld [vmem:[#allocation3 + $0x9e8] sm:$0xff]
    %v2578 = vld [vmem:[#allocation3 + $0x9f0] sm:$0xff]
    %v2579 = vld [vmem:[#allocation3 + $0x9f8] sm:$0xff]
    %v2580 = vld [vmem:[#allocation3 + $0xa00] sm:$0xff]
    %v2581 = vld [vmem:[#allocation3 + $0xa08] sm:$0xff]
    %v2582 = vld [vmem:[#allocation3 + $0xa10] sm:$0xff]
    %v2583 = vld [vmem:[#allocation3 + $0xa18] sm:$0xff]
    %v2584 = vld [vmem:[#allocation3 + $0xa20] sm:$0xff]
    %v2585 = vld [vmem:[#allocation3 + $0xa28] sm:$0xff]
    %v2586 = vld [vmem:[#allocation3 + $0xa30] sm:$0xff]
    %v2587 = vld [vmem:[#allocation3 + $0xa38] sm:$0xff]
    %v2588 = vld [vmem:[#allocation3 + $0xa40] sm:$0xff]
    %v2589 = vld [vmem:[#allocation3 + $0xa48] sm:$0xff]
    %v2590 = vld [vmem:[#allocation3 + $0xa50] sm:$0xff]
    %v2591 = vld [vmem:[#allocation3 + $0xa58] sm:$0xff]
    %v2592 = vld [vmem:[#allocation3 + $0xa60] sm:$0xff]
    %v2593 = vld [vmem:[#allocation3 + $0xa68] sm:$0xff]
    %v2594 = vld [vmem:[#allocation3 + $0xa70] sm:$0xff]
    %v2595 = vld [vmem:[#allocation3 + $0xa78] sm:$0xff]
    %v2596 = vld [vmem:[#allocation3 + $0xa80] sm:$0xff]
    %v2597 = vld [vmem:[#allocation3 + $0xa88] sm:$0xff]
    %v2598 = vld [vmem:[#allocation3 + $0xa90] sm:$0xff]
    %v2599 = vld [vmem:[#allocation3 + $0xa98] sm:$0xff]
    %v2600 = vld [vmem:[#allocation3 + $0xaa0] sm:$0xff]
    %v2601 = vld [vmem:[#allocation3 + $0xaa8] sm:$0xff]
    %v2602 = vld [vmem:[#allocation3 + $0xab0] sm:$0xff]
    %v2603 = vld [vmem:[#allocation3 + $0xab8] sm:$0xff]
    %v2604 = vld [vmem:[#allocation3 + $0xac0] sm:$0xff]
    %v2605 = vld [vmem:[#allocation3 + $0xac8] sm:$0xff]
    %v2606 = vld [vmem:[#allocation3 + $0xad0] sm:$0xff]
    %v2607 = vld [vmem:[#allocation3 + $0xad8] sm:$0xff]
    %v2608 = vld [vmem:[#allocation3 + $0xae0] sm:$0xff]
    %v2609 = vld [vmem:[#allocation3 + $0xae8] sm:$0xff]
    %v2610 = vld [vmem:[#allocation3 + $0xaf0] sm:$0xff]
    %v2611 = vld [vmem:[#allocation3 + $0xaf8] sm:$0xff]
    %v2612 = vld [vmem:[#allocation3 + $0xb00] sm:$0xff]
    %v2613 = vld [vmem:[#allocation3 + $0xb08] sm:$0xff]
    %v2614 = vld [vmem:[#allocation3 + $0xb10] sm:$0xff]
    %v2615 = vld [vmem:[#allocation3 + $0xb18] sm:$0xff]
    %v2616 = vld [vmem:[#allocation3 + $0xb20] sm:$0xff]
    %v2617 = vld [vmem:[#allocation3 + $0xb28] sm:$0xff]
    %v2618 = vld [vmem:[#allocation3 + $0xb30] sm:$0xff]
    %v2619 = vld [vmem:[#allocation3 + $0xb38] sm:$0xff]
    %v2620 = vld [vmem:[#allocation3 + $0xb40] sm:$0xff]
    %v2621 = vld [vmem:[#allocation3 + $0xb48] sm:$0xff]
    %v2622 = vld [vmem:[#allocation3 + $0xb50] sm:$0xff]
    %v2623 = vld [vmem:[#allocation3 + $0xb58] sm:$0xff]
    %v2624 = vld [vmem:[#allocation3 + $0xb60] sm:$0xff]
    %v2625 = vld [vmem:[#allocation3 + $0xb68] sm:$0xff]
    %v2626 = vld [vmem:[#allocation3 + $0xb70] sm:$0xff]
    %v2627 = vld [vmem:[#allocation3 + $0xb78] sm:$0xff]
    %v2628 = vld [vmem:[#allocation3 + $0xb80] sm:$0xff]
    %v2629 = vld [vmem:[#allocation3 + $0xb88] sm:$0xff]
    %v2630 = vld [vmem:[#allocation3 + $0xb90] sm:$0xff]
    %v2631 = vld [vmem:[#allocation3 + $0xb98] sm:$0xff]
    %v2632 = vld [vmem:[#allocation3 + $0xba0] sm:$0xff]
    %v2633 = vld [vmem:[#allocation3 + $0xba8] sm:$0xff]
    %v2634 = vld [vmem:[#allocation3 + $0xbb0] sm:$0xff]
    %v2635 = vld [vmem:[#allocation3 + $0xbb8] sm:$0xff]
    %v2636 = vld [vmem:[#allocation3 + $0xbc0] sm:$0xff]
    %v2637 = vld [vmem:[#allocation3 + $0xbc8] sm:$0xff]
    %v2638 = vld [vmem:[#allocation3 + $0xbd0] sm:$0xff]
    %v2639 = vld [vmem:[#allocation3 + $0xbd8] sm:$0xff]
    %v2640 = vld [vmem:[#allocation3 + $0xbe0] sm:$0xff]
    %v2641 = vld [vmem:[#allocation3 + $0xbe8] sm:$0xff]
    %v2642 = vld [vmem:[#allocation3 + $0xbf0] sm:$0xff]
    %v2643 = vld [vmem:[#allocation3 + $0xbf8] sm:$0xff]
    %v2644 = vld [vmem:[#allocation3 + $0xc00] sm:$0xff]
    %v2645 = vld [vmem:[#allocation3 + $0xc08] sm:$0xff]
    %v2646 = vld [vmem:[#allocation3 + $0xc10] sm:$0xff]
    %v2647 = vld [vmem:[#allocation3 + $0xc18] sm:$0xff]
    %v2648 = vld [vmem:[#allocation3 + $0xc20] sm:$0xff]
    %v2649 = vld [vmem:[#allocation3 + $0xc28] sm:$0xff]
    %v2650 = vld [vmem:[#allocation3 + $0xc30] sm:$0xff]
    %v2651 = vld [vmem:[#allocation3 + $0xc38] sm:$0xff]
    %v2652 = vld [vmem:[#allocation3 + $0xc40] sm:$0xff]
    %v2653 = vld [vmem:[#allocation3 + $0xc48] sm:$0xff]
    %v2654 = vld [vmem:[#allocation3 + $0xc50] sm:$0xff]
    %v2655 = vld [vmem:[#allocation3 + $0xc58] sm:$0xff]
    %v2656 = vld [vmem:[#allocation3 + $0xc60] sm:$0xff]
    %v2657 = vld [vmem:[#allocation3 + $0xc68] sm:$0xff]
    %v2658 = vld [vmem:[#allocation3 + $0xc70] sm:$0xff]
    %v2659 = vld [vmem:[#allocation3 + $0xc78] sm:$0xff]
    %v2660 = vld [vmem:[#allocation3 + $0xc80] sm:$0xff]
    %v2661 = vld [vmem:[#allocation3 + $0xc88] sm:$0xff]
    %v2662 = vld [vmem:[#allocation3 + $0xc90] sm:$0xff]
    %v2663 = vld [vmem:[#allocation3 + $0xc98] sm:$0xff]
    %v2664 = vld [vmem:[#allocation3 + $0xca0] sm:$0xff]
    %v2665 = vld [vmem:[#allocation3 + $0xca8] sm:$0xff]
    %v2666 = vld [vmem:[#allocation3 + $0xcb0] sm:$0xff]
    %v2667 = vld [vmem:[#allocation3 + $0xcb8] sm:$0xff]
    %v2668 = vld [vmem:[#allocation3 + $0xcc0] sm:$0xff]
    %v2669 = vld [vmem:[#allocation3 + $0xcc8] sm:$0xff]
    %v2670 = vld [vmem:[#allocation3 + $0xcd0] sm:$0xff]
    %v2671 = vld [vmem:[#allocation3 + $0xcd8] sm:$0xff]
    %v2672 = vld [vmem:[#allocation3 + $0xce0] sm:$0xff]
    %v2673 = vld [vmem:[#allocation3 + $0xce8] sm:$0xff]
    %v2674 = vld [vmem:[#allocation3 + $0xcf0] sm:$0xff]
    %v2675 = vld [vmem:[#allocation3 + $0xcf8] sm:$0xff]
    %v2676 = vld [vmem:[#allocation3 + $0xd00] sm:$0xff]
    %v2677 = vld [vmem:[#allocation3 + $0xd08] sm:$0xff]
    %v2678 = vld [vmem:[#allocation3 + $0xd10] sm:$0xff]
    %v2679 = vld [vmem:[#allocation3 + $0xd18] sm:$0xff]
    %v2680 = vld [vmem:[#allocation3 + $0xd20] sm:$0xff]
    %v2681 = vld [vmem:[#allocation3 + $0xd28] sm:$0xff]
    %v2682 = vld [vmem:[#allocation3 + $0xd30] sm:$0xff]
    %v2683 = vld [vmem:[#allocation3 + $0xd38] sm:$0xff]
    %v2684 = vld [vmem:[#allocation3 + $0xd40] sm:$0xff]
    %v2685 = vld [vmem:[#allocation3 + $0xd48] sm:$0xff]
    %v2686 = vld [vmem:[#allocation3 + $0xd50] sm:$0xff]
    %v2687 = vld [vmem:[#allocation3 + $0xd58] sm:$0xff]
    %v2688 = vld [vmem:[#allocation3 + $0xd60] sm:$0xff]
    %v2689 = vld [vmem:[#allocation3 + $0xd68] sm:$0xff]
    %v2690 = vld [vmem:[#allocation3 + $0xd70] sm:$0xff]
    %v2691 = vld [vmem:[#allocation3 + $0xd78] sm:$0xff]
    %v2692 = vld [vmem:[#allocation3 + $0xd80] sm:$0xff]
    %v2693 = vld [vmem:[#allocation3 + $0xd88] sm:$0xff]
    %v2694 = vld [vmem:[#allocation3 + $0xd90] sm:$0xff]
    %v2695 = vld [vmem:[#allocation3 + $0xd98] sm:$0xff]
    %v2696 = vld [vmem:[#allocation3 + $0xda0] sm:$0xff]
    %v2697 = vld [vmem:[#allocation3 + $0xda8] sm:$0xff]
    %v2698 = vld [vmem:[#allocation3 + $0xdb0] sm:$0xff]
    %v2699 = vld [vmem:[#allocation3 + $0xdb8] sm:$0xff]
    %v2700 = vld [vmem:[#allocation3 + $0xdc0] sm:$0xff]
    %v2701 = vld [vmem:[#allocation3 + $0xdc8] sm:$0xff]
    %v2702 = vld [vmem:[#allocation3 + $0xdd0] sm:$0xff]
    %v2703 = vld [vmem:[#allocation3 + $0xdd8] sm:$0xff]
    %v2704 = vld [vmem:[#allocation3 + $0xde0] sm:$0xff]
    %v2705 = vld [vmem:[#allocation3 + $0xde8] sm:$0xff]
    %v2706 = vld [vmem:[#allocation3 + $0xdf0] sm:$0xff]
    %v2707 = vld [vmem:[#allocation3 + $0xdf8] sm:$0xff]
    %v2708 = vld [vmem:[#allocation3 + $0xe00] sm:$0xff]
    %v2709 = vld [vmem:[#allocation3 + $0xe08] sm:$0xff]
    %v2710 = vld [vmem:[#allocation3 + $0xe10] sm:$0xff]
    %v2711 = vld [vmem:[#allocation3 + $0xe18] sm:$0xff]
    %v2712 = vld [vmem:[#allocation3 + $0xe20] sm:$0xff]
    %v2713 = vld [vmem:[#allocation3 + $0xe28] sm:$0xff]
    %v2714 = vld [vmem:[#allocation3 + $0xe30] sm:$0xff]
    %v2715 = vld [vmem:[#allocation3 + $0xe38] sm:$0xff]
    %v2716 = vld [vmem:[#allocation3 + $0xe40] sm:$0xff]
    %v2717 = vld [vmem:[#allocation3 + $0xe48] sm:$0xff]
    %v2718 = vld [vmem:[#allocation3 + $0xe50] sm:$0xff]
    %v2719 = vld [vmem:[#allocation3 + $0xe58] sm:$0xff]
    %v2720 = vld [vmem:[#allocation3 + $0xe60] sm:$0xff]
    %v2721 = vld [vmem:[#allocation3 + $0xe68] sm:$0xff]
    %v2722 = vld [vmem:[#allocation3 + $0xe70] sm:$0xff]
    %v2723 = vld [vmem:[#allocation3 + $0xe78] sm:$0xff]
    %v2724 = vld [vmem:[#allocation3 + $0xe80] sm:$0xff]
    %v2725 = vld [vmem:[#allocation3 + $0xe88] sm:$0xff]
    %v2726 = vld [vmem:[#allocation3 + $0xe90] sm:$0xff]
    %v2727 = vld [vmem:[#allocation3 + $0xe98] sm:$0xff]
    %v2728 = vld [vmem:[#allocation3 + $0xea0] sm:$0xff]
    %v2729 = vld [vmem:[#allocation3 + $0xea8] sm:$0xff]
    %v2730 = vld [vmem:[#allocation3 + $0xeb0] sm:$0xff]
    %v2731 = vld [vmem:[#allocation3 + $0xeb8] sm:$0xff]
    %v2732 = vld [vmem:[#allocation3 + $0xec0] sm:$0xff]
    %v2733 = vld [vmem:[#allocation3 + $0xec8] sm:$0xff]
    %v2734 = vld [vmem:[#allocation3 + $0xed0] sm:$0xff]
    %v2735 = vld [vmem:[#allocation3 + $0xed8] sm:$0xff]
    %v2736 = vld [vmem:[#allocation3 + $0xee0] sm:$0xff]
    %v2737 = vld [vmem:[#allocation3 + $0xee8] sm:$0xff]
    %v2738 = vld [vmem:[#allocation3 + $0xef0] sm:$0xff]
    %v2739 = vld [vmem:[#allocation3 + $0xef8] sm:$0xff]
    %v2740 = vld [vmem:[#allocation3 + $0xf00] sm:$0xff]
    %v2741 = vld [vmem:[#allocation3 + $0xf08] sm:$0xff]
    %v2742 = vld [vmem:[#allocation3 + $0xf10] sm:$0xff]
    %v2743 = vld [vmem:[#allocation3 + $0xf18] sm:$0xff]
    %v2744 = vld [vmem:[#allocation3 + $0xf20] sm:$0xff]
    %v2745 = vld [vmem:[#allocation3 + $0xf28] sm:$0xff]
    %v2746 = vld [vmem:[#allocation3 + $0xf30] sm:$0xff]
    %v2747 = vld [vmem:[#allocation3 + $0xf38] sm:$0xff]
    %v2748 = vld [vmem:[#allocation3 + $0xf40] sm:$0xff]
    %v2749 = vld [vmem:[#allocation3 + $0xf48] sm:$0xff]
    %v2750 = vld [vmem:[#allocation3 + $0xf50] sm:$0xff]
    %v2751 = vld [vmem:[#allocation3 + $0xf58] sm:$0xff]
    %v2752 = vld [vmem:[#allocation3 + $0xf60] sm:$0xff]
    %v2753 = vld [vmem:[#allocation3 + $0xf68] sm:$0xff]
    %v2754 = vld [vmem:[#allocation3 + $0xf70] sm:$0xff]
    %v2755 = vld [vmem:[#allocation3 + $0xf78] sm:$0xff]
    %v2756 = vld [vmem:[#allocation3 + $0xf80] sm:$0xff]
    %v2757 = vld [vmem:[#allocation3 + $0xf88] sm:$0xff]
    %v2758 = vld [vmem:[#allocation3 + $0xf90] sm:$0xff]
    %v2759 = vld [vmem:[#allocation3 + $0xf98] sm:$0xff]
    %v2760 = vld [vmem:[#allocation3 + $0xfa0] sm:$0xff]
    %v2761 = vld [vmem:[#allocation3 + $0xfa8] sm:$0xff]
    %v2762 = vld [vmem:[#allocation3 + $0xfb0] sm:$0xff]
    %v2763 = vld [vmem:[#allocation3 + $0xfb8] sm:$0xff]
    %v2764 = vld [vmem:[#allocation3 + $0xfc0] sm:$0xff]
    %v2765 = vld [vmem:[#allocation3 + $0xfc8] sm:$0xff]
    %v2766 = vld [vmem:[#allocation3 + $0xfd0] sm:$0xff]
    %v2767 = vld [vmem:[#allocation3 + $0xfd8] sm:$0xff]
    %v2768 = vld [vmem:[#allocation3 + $0xfe0] sm:$0xff]
    %v2769 = vld [vmem:[#allocation3 + $0xfe8] sm:$0xff]
    %v2770 = vld [vmem:[#allocation3 + $0xff0] sm:$0xff]
    %v2771 = vld [vmem:[#allocation3 + $0xff8] sm:$0xff]
    %v2772 = vld [vmem:[#allocation23] sm:$0xff]
    %v2774 = vlaneseq
    %v2775 = vshrl.u32 %v2774, 7
    %v2776 = vsub.s32 0, %v2775
    %v2777 = vrot.slane %v2772, %v2776
    %v2778 = vlaneseq
    %v2779 = vshrl.u32 %v2778, 7
    %v2780 = vsub.s32 1, %v2779
    %v2781 = vrot.slane %v2772, %v2780
    %v2782 = vlaneseq
    %v2783 = vshrl.u32 %v2782, 7
    %v2784 = vsub.s32 2, %v2783
    %v2785 = vrot.slane %v2772, %v2784
    %v2786 = vlaneseq
    %v2787 = vshrl.u32 %v2786, 7
    %v2788 = vsub.s32 3, %v2787
    %v2789 = vrot.slane %v2772, %v2788
    %v2790 = vlaneseq
    %v2791 = vshrl.u32 %v2790, 7
    %v2792 = vsub.s32 4, %v2791
    %v2793 = vrot.slane %v2772, %v2792
    %v2794 = vlaneseq
    %v2795 = vshrl.u32 %v2794, 7
    %v2796 = vsub.s32 5, %v2795
    %v2797 = vrot.slane %v2772, %v2796
    %v2798 = vlaneseq
    %v2799 = vshrl.u32 %v2798, 7
    %v2800 = vsub.s32 6, %v2799
    %v2801 = vrot.slane %v2772, %v2800
    %v2802 = vlaneseq
    %v2803 = vshrl.u32 %v2802, 7
    %v2804 = vsub.s32 7, %v2803
    %v2805 = vrot.slane %v2772, %v2804
    %2814 = vmatprep.subr.bf16.mxu0 %v2261
    %2815 = vmatpush1.bf16.msra.mxu0 %v2260
    %2816 = vmatprep.subr.bf16.mxu0 %v2269
    %2817 = vmatpush1.bf16.msra.mxu0 %v2268
    %2818 = vmatprep.subr.bf16.mxu0 %v2277
    %2819 = vmatpush1.bf16.msra.mxu0 %v2276
    %2820 = vmatprep.subr.bf16.mxu0 %v2285
    %2821 = vmatpush1.bf16.msra.mxu0 %v2284
    %2822 = vmatprep.subr.bf16.mxu0 %v2293
    %2823 = vmatpush1.bf16.msra.mxu0 %v2292
    %2824 = vmatprep.subr.bf16.mxu0 %v2301
    %2825 = vmatpush1.bf16.msra.mxu0 %v2300
    %2826 = vmatprep.subr.bf16.mxu0 %v2309
    %2827 = vmatpush1.bf16.msra.mxu0 %v2308
    %2828 = vmatprep.subr.bf16.mxu0 %v2317
    %2829 = vmatpush1.bf16.msra.mxu0 %v2316
    %2830 = vmatprep.subr.bf16.mxu0 %v2325
    %2831 = vmatpush1.bf16.msra.mxu0 %v2324
    %2832 = vmatprep.subr.bf16.mxu0 %v2333
    %2833 = vmatpush1.bf16.msra.mxu0 %v2332
    %2834 = vmatprep.subr.bf16.mxu0 %v2341
    %2835 = vmatpush1.bf16.msra.mxu0 %v2340
    %2836 = vmatprep.subr.bf16.mxu0 %v2349
    %2837 = vmatpush1.bf16.msra.mxu0 %v2348
    %2838 = vmatprep.subr.bf16.mxu0 %v2357
    %2839 = vmatpush1.bf16.msra.mxu0 %v2356
    %2840 = vmatprep.subr.bf16.mxu0 %v2365
    %2841 = vmatpush1.bf16.msra.mxu0 %v2364
    %2842 = vmatprep.subr.bf16.mxu0 %v2373
    %2843 = vmatpush1.bf16.msra.mxu0 %v2372
    %2844 = vmatprep.subr.bf16.mxu0 %v2381
    %2845 = vmatpush1.bf16.msra.mxu0 %v2380
    %2846 = vmatprep.mubr.bf16.mxu0 %v2249
    %2847 = vmatmul.mubr.bf16.gmra.mrb[0].mxu0 %v2248
    %v2848 = vpop.f32.mrb[0].mxu0
    %v2849 = vadd.f32 %v2777, %v2848
    %v2850 = vpop.f32.mrb[0].mxu0
    %v2851 = vadd.f32 %v2781, %v2850
    %v2852 = vpop.f32.mrb[0].mxu0
    %v2853 = vpop.f32.mrb[0].mxu0
    %2854 = vdwg.mxu0
    %2855 = vmatprep.subr.bf16.mxu0 %v2389
    %2856 = vmatpush1.bf16.msra.mxu0 %v2388
    %2857 = vmatprep.subr.bf16.mxu0 %v2397
    %2858 = vmatpush1.bf16.msra.mxu0 %v2396
    %2859 = vmatprep.subr.bf16.mxu0 %v2405
    %2860 = vmatpush1.bf16.msra.mxu0 %v2404
    %2861 = vmatprep.subr.bf16.mxu0 %v2413
    %2862 = vmatpush1.bf16.msra.mxu0 %v2412
    %2863 = vmatprep.subr.bf16.mxu0 %v2421
    %2864 = vmatpush1.bf16.msra.mxu0 %v2420
    %2865 = vmatprep.subr.bf16.mxu0 %v2429
    %2866 = vmatpush1.bf16.msra.mxu0 %v2428
    %2867 = vmatprep.subr.bf16.mxu0 %v2437
    %2868 = vmatpush1.bf16.msra.mxu0 %v2436
    %2869 = vmatprep.subr.bf16.mxu0 %v2445
    %2870 = vmatpush1.bf16.msra.mxu0 %v2444
    %2871 = vmatprep.subr.bf16.mxu0 %v2453
    %2872 = vmatpush1.bf16.msra.mxu0 %v2452
    %2873 = vmatprep.subr.bf16.mxu0 %v2461
    %2874 = vmatpush1.bf16.msra.mxu0 %v2460
    %2875 = vmatprep.subr.bf16.mxu0 %v2469
    %2876 = vmatpush1.bf16.msra.mxu0 %v2468
    %2877 = vmatprep.subr.bf16.mxu0 %v2477
    %2878 = vmatpush1.bf16.msra.mxu0 %v2476
    %2879 = vmatprep.subr.bf16.mxu0 %v2485
    %2880 = vmatpush1.bf16.msra.mxu0 %v2484
    %2881 = vmatprep.subr.bf16.mxu0 %v2493
    %2882 = vmatpush1.bf16.msra.mxu0 %v2492
    %2883 = vmatprep.subr.bf16.mxu0 %v2501
    %2884 = vmatpush1.bf16.msra.mxu0 %v2500
    %2885 = vmatprep.subr.bf16.mxu0 %v2509
    %2886 = vmatpush1.bf16.msra.mxu0 %v2508
    %2887 = vmatprep.mubr.bf16.mxu0 %v2251
    %2888 = vmatmul.mubr.bf16.gmra.mrb[0].mxu0 %v2250
    %v2889 = vpop.f32.mrb[0].mxu0
    %v2890 = vadd.f32 %v2849, %v2889
    %v2891 = vpop.f32.mrb[0].mxu0
    %v2892 = vadd.f32 %v2851, %v2891
    %v2893 = vpop.f32.mrb[0].mxu0
    %v2894 = vpop.f32.mrb[0].mxu0
    %2895 = vdwg.mxu0
    %2896 = vmatprep.subr.bf16.mxu0 %v2517
    %2897 = vmatpush1.bf16.msra.mxu0 %v2516
    %2898 = vmatprep.subr.bf16.mxu0 %v2525
    %2899 = vmatpush1.bf16.msra.mxu0 %v2524
    %2900 = vmatprep.subr.bf16.mxu0 %v2533
    %2901 = vmatpush1.bf16.msra.mxu0 %v2532
    %2902 = vmatprep.subr.bf16.mxu0 %v2541
    %2903 = vmatpush1.bf16.msra.mxu0 %v2540
    %2904 = vmatprep.subr.bf16.mxu0 %v2549
    %2905 = vmatpush1.bf16.msra.mxu0 %v2548
    %2906 = vmatprep.subr.bf16.mxu0 %v2557
    %2907 = vmatpush1.bf16.msra.mxu0 %v2556
    %2908 = vmatprep.subr.bf16.mxu0 %v2565
    %2909 = vmatpush1.bf16.msra.mxu0 %v2564
    %2910 = vmatprep.subr.bf16.mxu0 %v2573
    %2911 = vmatpush1.bf16.msra.mxu0 %v2572
    %2912 = vmatprep.subr.bf16.mxu0 %v2581
    %2913 = vmatpush1.bf16.msra.mxu0 %v2580
    %2914 = vmatprep.subr.bf16.mxu0 %v2589
    %2915 = vmatpush1.bf16.msra.mxu0 %v2588
    %2916 = vmatprep.subr.bf16.mxu0 %v2597
    %2917 = vmatpush1.bf16.msra.mxu0 %v2596
    %2918 = vmatprep.subr.bf16.mxu0 %v2605
    %2919 = vmatpush1.bf16.msra.mxu0 %v2604
    %2920 = vmatprep.subr.bf16.mxu0 %v2613
    %2921 = vmatpush1.bf16.msra.mxu0 %v2612
    %2922 = vmatprep.subr.bf16.mxu0 %v2621
    %2923 = vmatpush1.bf16.msra.mxu0 %v2620
    %2924 = vmatprep.subr.bf16.mxu0 %v2629
    %2925 = vmatpush1.bf16.msra.mxu0 %v2628
    %2926 = vmatprep.subr.bf16.mxu0 %v2637
    %2927 = vmatpush1.bf16.msra.mxu0 %v2636
    %2928 = vmatprep.mubr.bf16.mxu0 %v2253
    %2929 = vmatmul.mubr.bf16.gmra.mrb[0].mxu0 %v2252
    %v2930 = vpop.f32.mrb[0].mxu0
    %v2931 = vadd.f32 %v2890, %v2930
    %v2932 = vpop.f32.mrb[0].mxu0
    %v2933 = vadd.f32 %v2892, %v2932
    %v2934 = vpop.f32.mrb[0].mxu0
    %v2935 = vpop.f32.mrb[0].mxu0
    %2936 = vdwg.mxu0
    %2937 = vmatprep.subr.bf16.mxu0 %v2645
    %2938 = vmatpush1.bf16.msra.mxu0 %v2644
    %2939 = vmatprep.subr.bf16.mxu0 %v2653
    %2940 = vmatpush1.bf16.msra.mxu0 %v2652
    %2941 = vmatprep.subr.bf16.mxu0 %v2661
    %2942 = vmatpush1.bf16.msra.mxu0 %v2660
    %2943 = vmatprep.subr.bf16.mxu0 %v2669
    %2944 = vmatpush1.bf16.msra.mxu0 %v2668
    %2945 = vmatprep.subr.bf16.mxu0 %v2677
    %2946 = vmatpush1.bf16.msra.mxu0 %v2676
    %2947 = vmatprep.subr.bf16.mxu0 %v2685
    %2948 = vmatpush1.bf16.msra.mxu0 %v2684
    %2949 = vmatprep.subr.bf16.mxu0 %v2693
    %2950 = vmatpush1.bf16.msra.mxu0 %v2692
    %2951 = vmatprep.subr.bf16.mxu0 %v2701
    %2952 = vmatpush1.bf16.msra.mxu0 %v2700
    %2953 = vmatprep.subr.bf16.mxu0 %v2709
    %2954 = vmatpush1.bf16.msra.mxu0 %v2708
    %2955 = vmatprep.subr.bf16.mxu0 %v2717
    %2956 = vmatpush1.bf16.msra.mxu0 %v2716
    %2957 = vmatprep.subr.bf16.mxu0 %v2725
    %2958 = vmatpush1.bf16.msra.mxu0 %v2724
    %2959 = vmatprep.subr.bf16.mxu0 %v2733
    %2960 = vmatpush1.bf16.msra.mxu0 %v2732
    %2961 = vmatprep.subr.bf16.mxu0 %v2741
    %2962 = vmatpush1.bf16.msra.mxu0 %v2740
    %2963 = vmatprep.subr.bf16.mxu0 %v2749
    %2964 = vmatpush1.bf16.msra.mxu0 %v2748
    %2965 = vmatprep.subr.bf16.mxu0 %v2757
    %2966 = vmatpush1.bf16.msra.mxu0 %v2756
    %2967 = vmatprep.subr.bf16.mxu0 %v2765
    %2968 = vmatpush1.bf16.msra.mxu0 %v2764
    %2969 = vmatprep.mubr.bf16.mxu0 %v2255
    %2970 = vmatmul.mubr.bf16.gmra.mrb[0].mxu0 %v2254
    %v2971 = vpop.f32.mrb[0].mxu0
    %v2972 = vadd.f32 %v2931, %v2971
    %v2973 = vpop.f32.mrb[0].mxu0
    %v2974 = vadd.f32 %v2933, %v2973
    %v2975 = vpop.f32.mrb[0].mxu0
    %v2976 = vpop.f32.mrb[0].mxu0
    %2977 = vdwg.mxu0
    %2978 = vmatprep.subr.bf16.mxu0 %v2263
    %2979 = vmatpush1.bf16.msra.mxu0 %v2262
    %2980 = vmatprep.subr.bf16.mxu0 %v2271
    %2981 = vmatpush1.bf16.msra.mxu0 %v2270
    %2982 = vmatprep.subr.bf16.mxu0 %v2279
    %2983 = vmatpush1.bf16.msra.mxu0 %v2278
    %2984 = vmatprep.subr.bf16.mxu0 %v2287
    %2985 = vmatpush1.bf16.msra.mxu0 %v2286
    %2986 = vmatprep.subr.bf16.mxu0 %v2295
    %2987 = vmatpush1.bf16.msra.mxu0 %v2294
    %2988 = vmatprep.subr.bf16.mxu0 %v2303
    %2989 = vmatpush1.bf16.msra.mxu0 %v2302
    %2990 = vmatprep.subr.bf16.mxu0 %v2311
    %2991 = vmatpush1.bf16.msra.mxu0 %v2310
    %2992 = vmatprep.subr.bf16.mxu0 %v2319
    %2993 = vmatpush1.bf16.msra.mxu0 %v2318
    %2994 = vmatprep.subr.bf16.mxu0 %v2327
    %2995 = vmatpush1.bf16.msra.mxu0 %v2326
    %2996 = vmatprep.subr.bf16.mxu0 %v2335
    %2997 = vmatpush1.bf16.msra.mxu0 %v2334
    %2998 = vmatprep.subr.bf16.mxu0 %v2343
    %2999 = vmatpush1.bf16.msra.mxu0 %v2342
    %3000 = vmatprep.subr.bf16.mxu0 %v2351
    %3001 = vmatpush1.bf16.msra.mxu0 %v2350
    %3002 = vmatprep.subr.bf16.mxu0 %v2359
    %3003 = vmatpush1.bf16.msra.mxu0 %v2358
    %3004 = vmatprep.subr.bf16.mxu0 %v2367
    %3005 = vmatpush1.bf16.msra.mxu0 %v2366
    %3006 = vmatprep.subr.bf16.mxu0 %v2375
    %3007 = vmatpush1.bf16.msra.mxu0 %v2374
    %3008 = vmatprep.subr.bf16.mxu0 %v2383
    %3009 = vmatpush1.bf16.msra.mxu0 %v2382
    %3010 = vmatprep.mubr.bf16.mxu0 %v2249
    %3011 = vmatmul.mubr.bf16.gmra.mrb[0].mxu0 %v2248
    %v3012 = vpop.f32.mrb[0].mxu0
    %v3013 = vadd.f32 %v2785, %v3012
    %v3014 = vpop.f32.mrb[0].mxu0
    %v3015 = vadd.f32 %v2789, %v3014
    %v3016 = vpop.f32.mrb[0].mxu0
    %v3017 = vpop.f32.mrb[0].mxu0
    %3018 = vdwg.mxu0
    %3019 = vmatprep.subr.bf16.mxu0 %v2391
    %3020 = vmatpush1.bf16.msra.mxu0 %v2390
    %3021 = vmatprep.subr.bf16.mxu0 %v2399
    %3022 = vmatpush1.bf16.msra.mxu0 %v2398
    %3023 = vmatprep.subr.bf16.mxu0 %v2407
    %3024 = vmatpush1.bf16.msra.mxu0 %v2406
    %3025 = vmatprep.subr.bf16.mxu0 %v2415
    %3026 = vmatpush1.bf16.msra.mxu0 %v2414
    %3027 = vmatprep.subr.bf16.mxu0 %v2423
    %3028 = vmatpush1.bf16.msra.mxu0 %v2422
    %3029 = vmatprep.subr.bf16.mxu0 %v2431
    %3030 = vmatpush1.bf16.msra.mxu0 %v2430
    %3031 = vmatprep.subr.bf16.mxu0 %v2439
    %3032 = vmatpush1.bf16.msra.mxu0 %v2438
    %3033 = vmatprep.subr.bf16.mxu0 %v2447
    %3034 = vmatpush1.bf16.msra.mxu0 %v2446
    %3035 = vmatprep.subr.bf16.mxu0 %v2455
    %3036 = vmatpush1.bf16.msra.mxu0 %v2454
    %3037 = vmatprep.subr.bf16.mxu0 %v2463
    %3038 = vmatpush1.bf16.msra.mxu0 %v2462
    %3039 = vmatprep.subr.bf16.mxu0 %v2471
    %3040 = vmatpush1.bf16.msra.mxu0 %v2470
    %3041 = vmatprep.subr.bf16.mxu0 %v2479
    %3042 = vmatpush1.bf16.msra.mxu0 %v2478
    %3043 = vmatprep.subr.bf16.mxu0 %v2487
    %3044 = vmatpush1.bf16.msra.mxu0 %v2486
    %3045 = vmatprep.subr.bf16.mxu0 %v2495
    %3046 = vmatpush1.bf16.msra.mxu0 %v2494
    %3047 = vmatprep.subr.bf16.mxu0 %v2503
    %3048 = vmatpush1.bf16.msra.mxu0 %v2502
    %3049 = vmatprep.subr.bf16.mxu0 %v2511
    %3050 = vmatpush1.bf16.msra.mxu0 %v2510
    %3051 = vmatprep.mubr.bf16.mxu0 %v2251
    %3052 = vmatmul.mubr.bf16.gmra.mrb[0].mxu0 %v2250
    %v3053 = vpop.f32.mrb[0].mxu0
    %v3054 = vadd.f32 %v3013, %v3053
    %v3055 = vpop.f32.mrb[0].mxu0
    %v3056 = vadd.f32 %v3015, %v3055
    %v3057 = vpop.f32.mrb[0].mxu0
    %v3058 = vpop.f32.mrb[0].mxu0
    %3059 = vdwg.mxu0
    %3060 = vmatprep.subr.bf16.mxu0 %v2519
    %3061 = vmatpush1.bf16.msra.mxu0 %v2518
    %3062 = vmatprep.subr.bf16.mxu0 %v2527
    %3063 = vmatpush1.bf16.msra.mxu0 %v2526
    %3064 = vmatprep.subr.bf16.mxu0 %v2535
    %3065 = vmatpush1.bf16.msra.mxu0 %v2534
    %3066 = vmatprep.subr.bf16.mxu0 %v2543
    %3067 = vmatpush1.bf16.msra.mxu0 %v2542
    %3068 = vmatprep.subr.bf16.mxu0 %v2551
    %3069 = vmatpush1.bf16.msra.mxu0 %v2550
    %3070 = vmatprep.subr.bf16.mxu0 %v2559
    %3071 = vmatpush1.bf16.msra.mxu0 %v2558
    %3072 = vmatprep.subr.bf16.mxu0 %v2567
    %3073 = vmatpush1.bf16.msra.mxu0 %v2566
    %3074 = vmatprep.subr.bf16.mxu0 %v2575
    %3075 = vmatpush1.bf16.msra.mxu0 %v2574
    %3076 = vmatprep.subr.bf16.mxu0 %v2583
    %3077 = vmatpush1.bf16.msra.mxu0 %v2582
    %3078 = vmatprep.subr.bf16.mxu0 %v2591
    %3079 = vmatpush1.bf16.msra.mxu0 %v2590
    %3080 = vmatprep.subr.bf16.mxu0 %v2599
    %3081 = vmatpush1.bf16.msra.mxu0 %v2598
    %3082 = vmatprep.subr.bf16.mxu0 %v2607
    %3083 = vmatpush1.bf16.msra.mxu0 %v2606
    %3084 = vmatprep.subr.bf16.mxu0 %v2615
    %3085 = vmatpush1.bf16.msra.mxu0 %v2614
    %3086 = vmatprep.subr.bf16.mxu0 %v2623
    %3087 = vmatpush1.bf16.msra.mxu0 %v2622
    %3088 = vmatprep.subr.bf16.mxu0 %v2631
    %3089 = vmatpush1.bf16.msra.mxu0 %v2630
    %3090 = vmatprep.subr.bf16.mxu0 %v2639
    %3091 = vmatpush1.bf16.msra.mxu0 %v2638
    %3092 = vmatprep.mubr.bf16.mxu0 %v2253
    %3093 = vmatmul.mubr.bf16.gmra.mrb[0].mxu0 %v2252
    %v3094 = vpop.f32.mrb[0].mxu0
    %v3095 = vadd.f32 %v3054, %v3094
    %v3096 = vpop.f32.mrb[0].mxu0
    %v3097 = vadd.f32 %v3056, %v3096
    %v3098 = vpop.f32.mrb[0].mxu0
    %v3099 = vpop.f32.mrb[0].mxu0
    %3100 = vdwg.mxu0
    %3101 = vmatprep.subr.bf16.mxu0 %v2647
    %3102 = vmatpush1.bf16.msra.mxu0 %v2646
    %3103 = vmatprep.subr.bf16.mxu0 %v2655
    %3104 = vmatpush1.bf16.msra.mxu0 %v2654
    %3105 = vmatprep.subr.bf16.mxu0 %v2663
    %3106 = vmatpush1.bf16.msra.mxu0 %v2662
    %3107 = vmatprep.subr.bf16.mxu0 %v2671
    %3108 = vmatpush1.bf16.msra.mxu0 %v2670
    %3109 = vmatprep.subr.bf16.mxu0 %v2679
    %3110 = vmatpush1.bf16.msra.mxu0 %v2678
    %3111 = vmatprep.subr.bf16.mxu0 %v2687
    %3112 = vmatpush1.bf16.msra.mxu0 %v2686
    %3113 = vmatprep.subr.bf16.mxu0 %v2695
    %3114 = vmatpush1.bf16.msra.mxu0 %v2694
    %3115 = vmatprep.subr.bf16.mxu0 %v2703
    %3116 = vmatpush1.bf16.msra.mxu0 %v2702
    %3117 = vmatprep.subr.bf16.mxu0 %v2711
    %3118 = vmatpush1.bf16.msra.mxu0 %v2710
    %3119 = vmatprep.subr.bf16.mxu0 %v2719
    %3120 = vmatpush1.bf16.msra.mxu0 %v2718
    %3121 = vmatprep.subr.bf16.mxu0 %v2727
    %3122 = vmatpush1.bf16.msra.mxu0 %v2726
    %3123 = vmatprep.subr.bf16.mxu0 %v2735
    %3124 = vmatpush1.bf16.msra.mxu0 %v2734
    %3125 = vmatprep.subr.bf16.mxu0 %v2743
    %3126 = vmatpush1.bf16.msra.mxu0 %v2742
    %3127 = vmatprep.subr.bf16.mxu0 %v2751
    %3128 = vmatpush1.bf16.msra.mxu0 %v2750
    %3129 = vmatprep.subr.bf16.mxu0 %v2759
    %3130 = vmatpush1.bf16.msra.mxu0 %v2758
    %3131 = vmatprep.subr.bf16.mxu0 %v2767
    %3132 = vmatpush1.bf16.msra.mxu0 %v2766
    %3133 = vmatprep.mubr.bf16.mxu0 %v2255
    %3134 = vmatmul.mubr.bf16.gmra.mrb[0].mxu0 %v2254
    %v3135 = vpop.f32.mrb[0].mxu0
    %v3136 = vadd.f32 %v3095, %v3135
    %v3137 = vpop.f32.mrb[0].mxu0
    %v3138 = vadd.f32 %v3097, %v3137
    %v3139 = vpop.f32.mrb[0].mxu0
    %v3140 = vpop.f32.mrb[0].mxu0
    %3141 = vdwg.mxu0
    %3142 = vmatprep.subr.bf16.mxu0 %v2265
    %3143 = vmatpush1.bf16.msra.mxu0 %v2264
    %3144 = vmatprep.subr.bf16.mxu0 %v2273
    %3145 = vmatpush1.bf16.msra.mxu0 %v2272
    %3146 = vmatprep.subr.bf16.mxu0 %v2281
    %3147 = vmatpush1.bf16.msra.mxu0 %v2280
    %3148 = vmatprep.subr.bf16.mxu0 %v2289
    %3149 = vmatpush1.bf16.msra.mxu0 %v2288
    %3150 = vmatprep.subr.bf16.mxu0 %v2297
    %3151 = vmatpush1.bf16.msra.mxu0 %v2296
    %3152 = vmatprep.subr.bf16.mxu0 %v2305
    %3153 = vmatpush1.bf16.msra.mxu0 %v2304
    %3154 = vmatprep.subr.bf16.mxu0 %v2313
    %3155 = vmatpush1.bf16.msra.mxu0 %v2312
    %3156 = vmatprep.subr.bf16.mxu0 %v2321
    %3157 = vmatpush1.bf16.msra.mxu0 %v2320
    %3158 = vmatprep.subr.bf16.mxu0 %v2329
    %3159 = vmatpush1.bf16.msra.mxu0 %v2328
    %3160 = vmatprep.subr.bf16.mxu0 %v2337
    %3161 = vmatpush1.bf16.msra.mxu0 %v2336
    %3162 = vmatprep.subr.bf16.mxu0 %v2345
    %3163 = vmatpush1.bf16.msra.mxu0 %v2344
    %3164 = vmatprep.subr.bf16.mxu0 %v2353
    %3165 = vmatpush1.bf16.msra.mxu0 %v2352
    %3166 = vmatprep.subr.bf16.mxu0 %v2361
    %3167 = vmatpush1.bf16.msra.mxu0 %v2360
    %3168 = vmatprep.subr.bf16.mxu0 %v2369
    %3169 = vmatpush1.bf16.msra.mxu0 %v2368
    %3170 = vmatprep.subr.bf16.mxu0 %v2377
    %3171 = vmatpush1.bf16.msra.mxu0 %v2376
    %3172 = vmatprep.subr.bf16.mxu0 %v2385
    %3173 = vmatpush1.bf16.msra.mxu0 %v2384
    %3174 = vmatprep.mubr.bf16.mxu0 %v2249
    %3175 = vmatmul.mubr.bf16.gmra.mrb[0].mxu0 %v2248
    %v3176 = vpop.f32.mrb[0].mxu0
    %v3177 = vadd.f32 %v2793, %v3176
    %v3178 = vpop.f32.mrb[0].mxu0
    %v3179 = vadd.f32 %v2797, %v3178
    %v3180 = vpop.f32.mrb[0].mxu0
    %v3181 = vpop.f32.mrb[0].mxu0
    %3182 = vdwg.mxu0
    %3183 = vmatprep.subr.bf16.mxu0 %v2393
    %3184 = vmatpush1.bf16.msra.mxu0 %v2392
    %3185 = vmatprep.subr.bf16.mxu0 %v2401
    %3186 = vmatpush1.bf16.msra.mxu0 %v2400
    %3187 = vmatprep.subr.bf16.mxu0 %v2409
    %3188 = vmatpush1.bf16.msra.mxu0 %v2408
    %3189 = vmatprep.subr.bf16.mxu0 %v2417
    %3190 = vmatpush1.bf16.msra.mxu0 %v2416
    %3191 = vmatprep.subr.bf16.mxu0 %v2425
    %3192 = vmatpush1.bf16.msra.mxu0 %v2424
    %3193 = vmatprep.subr.bf16.mxu0 %v2433
    %3194 = vmatpush1.bf16.msra.mxu0 %v2432
    %3195 = vmatprep.subr.bf16.mxu0 %v2441
    %3196 = vmatpush1.bf16.msra.mxu0 %v2440
    %3197 = vmatprep.subr.bf16.mxu0 %v2449
    %3198 = vmatpush1.bf16.msra.mxu0 %v2448
    %3199 = vmatprep.subr.bf16.mxu0 %v2457
    %3200 = vmatpush1.bf16.msra.mxu0 %v2456
    %3201 = vmatprep.subr.bf16.mxu0 %v2465
    %3202 = vmatpush1.bf16.msra.mxu0 %v2464
    %3203 = vmatprep.subr.bf16.mxu0 %v2473
    %3204 = vmatpush1.bf16.msra.mxu0 %v2472
    %3205 = vmatprep.subr.bf16.mxu0 %v2481
    %3206 = vmatpush1.bf16.msra.mxu0 %v2480
    %3207 = vmatprep.subr.bf16.mxu0 %v2489
    %3208 = vmatpush1.bf16.msra.mxu0 %v2488
    %3209 = vmatprep.subr.bf16.mxu0 %v2497
    %3210 = vmatpush1.bf16.msra.mxu0 %v2496
    %3211 = vmatprep.subr.bf16.mxu0 %v2505
    %3212 = vmatpush1.bf16.msra.mxu0 %v2504
    %3213 = vmatprep.subr.bf16.mxu0 %v2513
    %3214 = vmatpush1.bf16.msra.mxu0 %v2512
    %3215 = vmatprep.mubr.bf16.mxu0 %v2251
    %3216 = vmatmul.mubr.bf16.gmra.mrb[0].mxu0 %v2250
    %v3217 = vpop.f32.mrb[0].mxu0
    %v3218 = vadd.f32 %v3177, %v3217
    %v3219 = vpop.f32.mrb[0].mxu0
    %v3220 = vadd.f32 %v3179, %v3219
    %v3221 = vpop.f32.mrb[0].mxu0
    %v3222 = vpop.f32.mrb[0].mxu0
    %3223 = vdwg.mxu0
    %3224 = vmatprep.subr.bf16.mxu0 %v2521
    %3225 = vmatpush1.bf16.msra.mxu0 %v2520
    %3226 = vmatprep.subr.bf16.mxu0 %v2529
    %3227 = vmatpush1.bf16.msra.mxu0 %v2528
    %3228 = vmatprep.subr.bf16.mxu0 %v2537
    %3229 = vmatpush1.bf16.msra.mxu0 %v2536
    %3230 = vmatprep.subr.bf16.mxu0 %v2545
    %3231 = vmatpush1.bf16.msra.mxu0 %v2544
    %3232 = vmatprep.subr.bf16.mxu0 %v2553
    %3233 = vmatpush1.bf16.msra.mxu0 %v2552
    %3234 = vmatprep.subr.bf16.mxu0 %v2561
    %3235 = vmatpush1.bf16.msra.mxu0 %v2560
    %3236 = vmatprep.subr.bf16.mxu0 %v2569
    %3237 = vmatpush1.bf16.msra.mxu0 %v2568
    %3238 = vmatprep.subr.bf16.mxu0 %v2577
    %3239 = vmatpush1.bf16.msra.mxu0 %v2576
    %3240 = vmatprep.subr.bf16.mxu0 %v2585
    %3241 = vmatpush1.bf16.msra.mxu0 %v2584
    %3242 = vmatprep.subr.bf16.mxu0 %v2593
    %3243 = vmatpush1.bf16.msra.mxu0 %v2592
    %3244 = vmatprep.subr.bf16.mxu0 %v2601
    %3245 = vmatpush1.bf16.msra.mxu0 %v2600
    %3246 = vmatprep.subr.bf16.mxu0 %v2609
    %3247 = vmatpush1.bf16.msra.mxu0 %v2608
    %3248 = vmatprep.subr.bf16.mxu0 %v2617
    %3249 = vmatpush1.bf16.msra.mxu0 %v2616
    %3250 = vmatprep.subr.bf16.mxu0 %v2625
    %3251 = vmatpush1.bf16.msra.mxu0 %v2624
    %3252 = vmatprep.subr.bf16.mxu0 %v2633
    %3253 = vmatpush1.bf16.msra.mxu0 %v2632
    %3254 = vmatprep.subr.bf16.mxu0 %v2641
    %3255 = vmatpush1.bf16.msra.mxu0 %v2640
    %3256 = vmatprep.mubr.bf16.mxu0 %v2253
    %3257 = vmatmul.mubr.bf16.gmra.mrb[0].mxu0 %v2252
    %v3258 = vpop.f32.mrb[0].mxu0
    %v3259 = vadd.f32 %v3218, %v3258
    %v3260 = vpop.f32.mrb[0].mxu0
    %v3261 = vadd.f32 %v3220, %v3260
    %v3262 = vpop.f32.mrb[0].mxu0
    %v3263 = vpop.f32.mrb[0].mxu0
    %3264 = vdwg.mxu0
    %3265 = vmatprep.subr.bf16.mxu0 %v2649
    %3266 = vmatpush1.bf16.msra.mxu0 %v2648
    %3267 = vmatprep.subr.bf16.mxu0 %v2657
    %3268 = vmatpush1.bf16.msra.mxu0 %v2656
    %3269 = vmatprep.subr.bf16.mxu0 %v2665
    %3270 = vmatpush1.bf16.msra.mxu0 %v2664
    %3271 = vmatprep.subr.bf16.mxu0 %v2673
    %3272 = vmatpush1.bf16.msra.mxu0 %v2672
    %3273 = vmatprep.subr.bf16.mxu0 %v2681
    %3274 = vmatpush1.bf16.msra.mxu0 %v2680
    %3275 = vmatprep.subr.bf16.mxu0 %v2689
    %3276 = vmatpush1.bf16.msra.mxu0 %v2688
    %3277 = vmatprep.subr.bf16.mxu0 %v2697
    %3278 = vmatpush1.bf16.msra.mxu0 %v2696
    %3279 = vmatprep.subr.bf16.mxu0 %v2705
    %3280 = vmatpush1.bf16.msra.mxu0 %v2704
    %3281 = vmatprep.subr.bf16.mxu0 %v2713
    %3282 = vmatpush1.bf16.msra.mxu0 %v2712
    %3283 = vmatprep.subr.bf16.mxu0 %v2721
    %3284 = vmatpush1.bf16.msra.mxu0 %v2720
    %3285 = vmatprep.subr.bf16.mxu0 %v2729
    %3286 = vmatpush1.bf16.msra.mxu0 %v2728
    %3287 = vmatprep.subr.bf16.mxu0 %v2737
    %3288 = vmatpush1.bf16.msra.mxu0 %v2736
    %3289 = vmatprep.subr.bf16.mxu0 %v2745
    %3290 = vmatpush1.bf16.msra.mxu0 %v2744
    %3291 = vmatprep.subr.bf16.mxu0 %v2753
    %3292 = vmatpush1.bf16.msra.mxu0 %v2752
    %3293 = vmatprep.subr.bf16.mxu0 %v2761
    %3294 = vmatpush1.bf16.msra.mxu0 %v2760
    %3295 = vmatprep.subr.bf16.mxu0 %v2769
    %3296 = vmatpush1.bf16.msra.mxu0 %v2768
    %3297 = vmatprep.mubr.bf16.mxu0 %v2255
    %3298 = vmatmul.mubr.bf16.gmra.mrb[0].mxu0 %v2254
    %v3299 = vpop.f32.mrb[0].mxu0
    %v3300 = vadd.f32 %v3259, %v3299
    %v3301 = vpop.f32.mrb[0].mxu0
    %v3302 = vadd.f32 %v3261, %v3301
    %v3303 = vpop.f32.mrb[0].mxu0
    %v3304 = vpop.f32.mrb[0].mxu0
    %3305 = vdwg.mxu0
    %3306 = vmatprep.subr.bf16.mxu0 %v2267
    %3307 = vmatpush1.bf16.msra.mxu0 %v2266
    %3308 = vmatprep.subr.bf16.mxu0 %v2275
    %3309 = vmatpush1.bf16.msra.mxu0 %v2274
    %3310 = vmatprep.subr.bf16.mxu0 %v2283
    %3311 = vmatpush1.bf16.msra.mxu0 %v2282
    %3312 = vmatprep.subr.bf16.mxu0 %v2291
    %3313 = vmatpush1.bf16.msra.mxu0 %v2290
    %3314 = vmatprep.subr.bf16.mxu0 %v2299
    %3315 = vmatpush1.bf16.msra.mxu0 %v2298
    %3316 = vmatprep.subr.bf16.mxu0 %v2307
    %3317 = vmatpush1.bf16.msra.mxu0 %v2306
    %3318 = vmatprep.subr.bf16.mxu0 %v2315
    %3319 = vmatpush1.bf16.msra.mxu0 %v2314
    %3320 = vmatprep.subr.bf16.mxu0 %v2323
    %3321 = vmatpush1.bf16.msra.mxu0 %v2322
    %3322 = vmatprep.subr.bf16.mxu0 %v2331
    %3323 = vmatpush1.bf16.msra.mxu0 %v2330
    %3324 = vmatprep.subr.bf16.mxu0 %v2339
    %3325 = vmatpush1.bf16.msra.mxu0 %v2338
    %3326 = vmatprep.subr.bf16.mxu0 %v2347
    %3327 = vmatpush1.bf16.msra.mxu0 %v2346
    %3328 = vmatprep.subr.bf16.mxu0 %v2355
    %3329 = vmatpush1.bf16.msra.mxu0 %v2354
    %3330 = vmatprep.subr.bf16.mxu0 %v2363
    %3331 = vmatpush1.bf16.msra.mxu0 %v2362
    %3332 = vmatprep.subr.bf16.mxu0 %v2371
    %3333 = vmatpush1.bf16.msra.mxu0 %v2370
    %3334 = vmatprep.subr.bf16.mxu0 %v2379
    %3335 = vmatpush1.bf16.msra.mxu0 %v2378
    %3336 = vmatprep.subr.bf16.mxu0 %v2387
    %3337 = vmatpush1.bf16.msra.mxu0 %v2386
    %3338 = vmatprep.mubr.bf16.mxu0 %v2249
    %3339 = vmatmul.mubr.bf16.gmra.mrb[0].mxu0 %v2248
    %v3340 = vpop.f32.mrb[0].mxu0
    %v3341 = vadd.f32 %v2801, %v3340
    %v3342 = vpop.f32.mrb[0].mxu0
    %v3343 = vadd.f32 %v2805, %v3342
    %v3344 = vpop.f32.mrb[0].mxu0
    %v3345 = vpop.f32.mrb[0].mxu0
    %3346 = vdwg.mxu0
    %3347 = vmatprep.subr.bf16.mxu0 %v2395
    %3348 = vmatpush1.bf16.msra.mxu0 %v2394
    %3349 = vmatprep.subr.bf16.mxu0 %v2403
    %3350 = vmatpush1.bf16.msra.mxu0 %v2402
    %3351 = vmatprep.subr.bf16.mxu0 %v2411
    %3352 = vmatpush1.bf16.msra.mxu0 %v2410
    %3353 = vmatprep.subr.bf16.mxu0 %v2419
    %3354 = vmatpush1.bf16.msra.mxu0 %v2418
    %3355 = vmatprep.subr.bf16.mxu0 %v2427
    %3356 = vmatpush1.bf16.msra.mxu0 %v2426
    %3357 = vmatprep.subr.bf16.mxu0 %v2435
    %3358 = vmatpush1.bf16.msra.mxu0 %v2434
    %3359 = vmatprep.subr.bf16.mxu0 %v2443
    %3360 = vmatpush1.bf16.msra.mxu0 %v2442
    %3361 = vmatprep.subr.bf16.mxu0 %v2451
    %3362 = vmatpush1.bf16.msra.mxu0 %v2450
    %3363 = vmatprep.subr.bf16.mxu0 %v2459
    %3364 = vmatpush1.bf16.msra.mxu0 %v2458
    %3365 = vmatprep.subr.bf16.mxu0 %v2467
    %3366 = vmatpush1.bf16.msra.mxu0 %v2466
    %3367 = vmatprep.subr.bf16.mxu0 %v2475
    %3368 = vmatpush1.bf16.msra.mxu0 %v2474
    %3369 = vmatprep.subr.bf16.mxu0 %v2483
    %3370 = vmatpush1.bf16.msra.mxu0 %v2482
    %3371 = vmatprep.subr.bf16.mxu0 %v2491
    %3372 = vmatpush1.bf16.msra.mxu0 %v2490
    %3373 = vmatprep.subr.bf16.mxu0 %v2499
    %3374 = vmatpush1.bf16.msra.mxu0 %v2498
    %3375 = vmatprep.subr.bf16.mxu0 %v2507
    %3376 = vmatpush1.bf16.msra.mxu0 %v2506
    %3377 = vmatprep.subr.bf16.mxu0 %v2515
    %3378 = vmatpush1.bf16.msra.mxu0 %v2514
    %3379 = vmatprep.mubr.bf16.mxu0 %v2251
    %3380 = vmatmul.mubr.bf16.gmra.mrb[0].mxu0 %v2250
    %v3381 = vpop.f32.mrb[0].mxu0
    %v3382 = vadd.f32 %v3341, %v3381
    %v3383 = vpop.f32.mrb[0].mxu0
    %v3384 = vadd.f32 %v3343, %v3383
    %v3385 = vpop.f32.mrb[0].mxu0
    %v3386 = vpop.f32.mrb[0].mxu0
    %3387 = vdwg.mxu0
    %3388 = vmatprep.subr.bf16.mxu0 %v2523
    %3389 = vmatpush1.bf16.msra.mxu0 %v2522
    %3390 = vmatprep.subr.bf16.mxu0 %v2531
    %3391 = vmatpush1.bf16.msra.mxu0 %v2530
    %3392 = vmatprep.subr.bf16.mxu0 %v2539
    %3393 = vmatpush1.bf16.msra.mxu0 %v2538
    %3394 = vmatprep.subr.bf16.mxu0 %v2547
    %3395 = vmatpush1.bf16.msra.mxu0 %v2546
    %3396 = vmatprep.subr.bf16.mxu0 %v2555
    %3397 = vmatpush1.bf16.msra.mxu0 %v2554
    %3398 = vmatprep.subr.bf16.mxu0 %v2563
    %3399 = vmatpush1.bf16.msra.mxu0 %v2562
    %3400 = vmatprep.subr.bf16.mxu0 %v2571
    %3401 = vmatpush1.bf16.msra.mxu0 %v2570
    %3402 = vmatprep.subr.bf16.mxu0 %v2579
    %3403 = vmatpush1.bf16.msra.mxu0 %v2578
    %3404 = vmatprep.subr.bf16.mxu0 %v2587
    %3405 = vmatpush1.bf16.msra.mxu0 %v2586
    %3406 = vmatprep.subr.bf16.mxu0 %v2595
    %3407 = vmatpush1.bf16.msra.mxu0 %v2594
    %3408 = vmatprep.subr.bf16.mxu0 %v2603
    %3409 = vmatpush1.bf16.msra.mxu0 %v2602
    %3410 = vmatprep.subr.bf16.mxu0 %v2611
    %3411 = vmatpush1.bf16.msra.mxu0 %v2610
    %3412 = vmatprep.subr.bf16.mxu0 %v2619
    %3413 = vmatpush1.bf16.msra.mxu0 %v2618
    %3414 = vmatprep.subr.bf16.mxu0 %v2627
    %3415 = vmatpush1.bf16.msra.mxu0 %v2626
    %3416 = vmatprep.subr.bf16.mxu0 %v2635
    %3417 = vmatpush1.bf16.msra.mxu0 %v2634
    %3418 = vmatprep.subr.bf16.mxu0 %v2643
    %3419 = vmatpush1.bf16.msra.mxu0 %v2642
    %3420 = vmatprep.mubr.bf16.mxu0 %v2253
    %3421 = vmatmul.mubr.bf16.gmra.mrb[0].mxu0 %v2252
    %v3422 = vpop.f32.mrb[0].mxu0
    %v3423 = vadd.f32 %v3382, %v3422
    %v3424 = vpop.f32.mrb[0].mxu0
    %v3425 = vadd.f32 %v3384, %v3424
    %v3426 = vpop.f32.mrb[0].mxu0
    %v3427 = vpop.f32.mrb[0].mxu0
    %3428 = vdwg.mxu0
    %3429 = vmatprep.subr.bf16.mxu0 %v2651
    %3430 = vmatpush1.bf16.msra.mxu0 %v2650
    %3431 = vmatprep.subr.bf16.mxu0 %v2659
    %3432 = vmatpush1.bf16.msra.mxu0 %v2658
    %3433 = vmatprep.subr.bf16.mxu0 %v2667
    %3434 = vmatpush1.bf16.msra.mxu0 %v2666
    %3435 = vmatprep.subr.bf16.mxu0 %v2675
    %3436 = vmatpush1.bf16.msra.mxu0 %v2674
    %3437 = vmatprep.subr.bf16.mxu0 %v2683
    %3438 = vmatpush1.bf16.msra.mxu0 %v2682
    %3439 = vmatprep.subr.bf16.mxu0 %v2691
    %3440 = vmatpush1.bf16.msra.mxu0 %v2690
    %3441 = vmatprep.subr.bf16.mxu0 %v2699
    %3442 = vmatpush1.bf16.msra.mxu0 %v2698
    %3443 = vmatprep.subr.bf16.mxu0 %v2707
    %3444 = vmatpush1.bf16.msra.mxu0 %v2706
    %3445 = vmatprep.subr.bf16.mxu0 %v2715
    %3446 = vmatpush1.bf16.msra.mxu0 %v2714
    %3447 = vmatprep.subr.bf16.mxu0 %v2723
    %3448 = vmatpush1.bf16.msra.mxu0 %v2722
    %3449 = vmatprep.subr.bf16.mxu0 %v2731
    %3450 = vmatpush1.bf16.msra.mxu0 %v2730
    %3451 = vmatprep.subr.bf16.mxu0 %v2739
    %3452 = vmatpush1.bf16.msra.mxu0 %v2738
    %3453 = vmatprep.subr.bf16.mxu0 %v2747
    %3454 = vmatpush1.bf16.msra.mxu0 %v2746
    %3455 = vmatprep.subr.bf16.mxu0 %v2755
    %3456 = vmatpush1.bf16.msra.mxu0 %v2754
    %3457 = vmatprep.subr.bf16.mxu0 %v2763
    %3458 = vmatpush1.bf16.msra.mxu0 %v2762
    %3459 = vmatprep.subr.bf16.mxu0 %v2771
    %3460 = vmatpush1.bf16.msra.mxu0 %v2770
    %3461 = vmatprep.mubr.bf16.mxu0 %v2255
    %3462 = vmatmul.mubr.bf16.gmra.mrb[0].mxu0 %v2254
    %v3463 = vpop.f32.mrb[0].mxu0
    %v3464 = vadd.f32 %v3423, %v3463
    %v3465 = vpop.f32.mrb[0].mxu0
    %v3466 = vadd.f32 %v3425, %v3465
    %v3467 = vpop.f32.mrb[0].mxu0
    %v3468 = vpop.f32.mrb[0].mxu0
    %3469 = vdwg.mxu0
    %v3470 = vtanh.pop %v2972
    %v3471 = vtanh.pop %v2974
    %v3472 = vtanh.pop %v3136
    %v3473 = vtanh.pop %v3138
    %v3474 = vtanh.pop %v3300
    %v3475 = vtanh.pop %v3302
    %v3476 = vtanh.pop %v3464
    %v3477 = vtanh.pop %v3466
    %v3478 = vpack.c.bf16 %v3470, %v3470
    %v3479 = vpack.c.bf16 %v3471, %v3471
    %v3480 = vpack.c.bf16 %v3472, %v3472
    %v3481 = vpack.c.bf16 %v3473, %v3473
    %v3482 = vpack.c.bf16 %v3474, %v3474
    %v3483 = vpack.c.bf16 %v3475, %v3475
    %v3484 = vpack.c.bf16 %v3476, %v3476
    %v3485 = vpack.c.bf16 %v3477, %v3477
    %v3494 = vunpack.c.l.b16 %v3478
    %v3495 = vunpack.c.l.b16 %v3479
    %v3496 = vunpack.c.l.b16 %v3480
    %v3497 = vunpack.c.l.b16 %v3481
    %v3498 = vunpack.c.l.b16 %v3482
    %v3499 = vunpack.c.l.b16 %v3483
    %v3500 = vunpack.c.l.b16 %v3484
    %v3501 = vunpack.c.l.b16 %v3485
    %v3502 = vpack.c.b16 %v3495, %v3494
    %v3503 = vpack.c.b16 %v3497, %v3496
    %v3504 = vpack.c.b16 %v3499, %v3498
    %v3505 = vpack.c.b16 %v3501, %v3500
    %3510 = vst [vmem:[#allocation25] sm:$0xff] %v3502
    %3511 = vst [vmem:[#allocation25 + $0x8] sm:$0xff] %v3503
    %3512 = vst [vmem:[#allocation25 + $0x10] sm:$0xff] %v3504
    %3513 = vst [vmem:[#allocation25 + $0x18] sm:$0xff] %v3505
    // Predicated region
    $region98: #{tpu_custom_call.1} parent=1 // pred_check
      _
    $region99: #{tpu_custom_call.1} parent=1 // pred_check_branch
      %3515 = sbr.rel (0) target = $region101
    $region100: #{tpu_custom_call.1} parent=1 // pred_region
      %s3517 = ssub.s32 512, 512
      %3518 = vsyncadd [#allocation7], %s3517
      %s3520 = sshll.u32 [#allocation25], 4
      %s3521 = int_to_ptr.vmem [resolvable:$true] %s3520
      %3523 = dma.vmem_to_hbm [thread:$0]  %s3521, 512, %s14, [#allocation7]
    $region101: #{tpu_custom_call.1} parent=1 // pred_fallthru
      _
    // Predicated region
    $region102: #{tpu_custom_call.1} parent=1 // pred_check
      _
    $region103: #{tpu_custom_call.1} parent=1 // pred_check_branch
      %3525 = sbr.rel (0) target = $region105
    $region104: #{tpu_custom_call.1} parent=1 // pred_region
      %3526 = dma.done [#allocation7], 512
    $region105: #{tpu_custom_call.1} parent=1 // pred_fallthru
      _
    %3527 = vsyncpa [#allocation6], 1
    %3528 = vsyncpa [#allocation9], 1
    %3529 = vsyncpa [#allocation12], 1
    %3530 = vsyncpa [#allocation15], 1
    %3531 = vsyncpa [#allocation18], 1
    %3532 = vsyncpa [#allocation21], 1
    %3533 = vsyncpa [#allocation24], 1
    %3534 = vsyncpa [#allocation7], 1
  %3535 = vsyncmov [#allocation4]
  %s3536 = vpop.sfrf %3535
  %p3537 = scmp.eq.s32.totalorder %s3536, 0
  %p3538 = pneg %p3537
  %3540 = shalt.err (%p3538)
  %s3541 = scalar_lea.sflag [#allocation4], 1
  %3542 = vsyncmov %s3541
  %s3543 = vpop.sfrf %3542
  %p3544 = scmp.eq.s32.totalorder %s3543, 0
  %p3545 = pneg %p3544
  %3547 = shalt.err (%p3545)

</llo_original>
